<compile_context>
chip_gen: v7x
topology: tpu7x:2x2x1
jax: 0.10.0
libtpu: 0.0.40
codegen_flags: <defaults>
</compile_context>

<pallas_src>
import functools

import jax
import jax.numpy as jnp
from jax.experimental import pallas as pl
from jax.experimental.pallas import tpu as pltpu


# ----------------------------------------------------------------------------
# Fused Pallas kernel: all rounds x all edge tiles
# ----------------------------------------------------------------------------
def _cond_prop_kernel(h_ref, eaug_ref, gsrc_ref, gdst_ref,
                      w1_ref, b1_ref, w2_ref, b2_ref,
                      wrz_ref, brz_ref, win_ref, binn_ref, whn_ref, bhn_ref,
                      out_ref, a_acc):
    f32 = jnp.float32
    r = pl.program_id(0)          # propagation round
    et = pl.program_id(1)         # edge tile
    n_et = pl.num_programs(1)

    # Initialise the resident node state (output block, constant index) once.
    @pl.when(jnp.logical_and(r == 0, et == 0))
    def _():
        out_ref[...] = h_ref[...]

    # Zero the per-round activation accumulator at the start of every round.
    @pl.when(et == 0)
    def _():
        a_acc[...] = jnp.zeros_like(a_acc)

    h = out_ref[...]                                   # [N, D] resident state
    gsrc = gsrc_ref[...].astype(f32)                   # [TE, N] (bf16 -> f32, exact 0/1)
    gdst = gdst_ref[...].astype(f32)                   # [TE, N]

    # --- gather destination / source node features (one-hot matmul, MXU) ----
    h_dst = jnp.dot(gdst, h, preferred_element_type=f32)     # [TE, D]
    h_src = jnp.dot(gsrc, h, preferred_element_type=f32)     # [TE, D]

    # --- per-edge message MLP (single fused first-layer matmul) --------------
    msg = jnp.concatenate([h_dst, h_src, eaug_ref[...]], axis=1)   # [TE, 2D+De+A]
    h1 = jnp.maximum(
        jnp.dot(msg, w1_ref[...], preferred_element_type=f32) + b1_ref[...], 0.0)
    m2 = jnp.dot(h1, w2_ref[...], preferred_element_type=f32) + b2_ref[...]   # [TE, A]

    # --- scatter-add into destination nodes: contract over the edge axis ----
    a_acc[...] += jax.lax.dot_general(
        gdst, m2,
        dimension_numbers=(((0,), (0,)), ((), ())),
        preferred_element_type=f32)                     # [N, A]

    # --- GRU node update once per round (last edge tile) --------------------
    @pl.when(et == n_et - 1)
    def _():
        a = a_acc[...]                                  # [N, A]
        d = h.shape[1]
        ah = jnp.concatenate([a, h], axis=1)            # [N, A+D]
        rz = jax.nn.sigmoid(
            jnp.dot(ah, wrz_ref[...], preferred_element_type=f32) + brz_ref[...])
        rg = rz[:, :d]
        zg = rz[:, d:]
        gin = jnp.dot(a, win_ref[...], preferred_element_type=f32) + binn_ref[...]
        ghn = jnp.dot(h, whn_ref[...], preferred_element_type=f32) + bhn_ref[...]
        n = jnp.tanh(gin + rg * ghn)
        out_ref[...] = (1.0 - zg) * n + zg * h


_PARAM_ORDER = ("w1", "b1", "w2", "b2", "wrz", "brz", "win", "bin", "whn", "bhn")


# ----------------------------------------------------------------------------
# ConditionalProp forward (single fused pallas_call)
# ----------------------------------------------------------------------------
def conditional_prop_forward(node_feat, edge_feat, src, dst,
                             auxiliary, batch_index, stacked_params, *,
                             edge_tile=128):
    f32 = jnp.float32
    N, D = node_feat.shape
    E = edge_feat.shape[0]
    A = D                                             # activation_dim = node_emb_dim
    num_rounds = int(stacked_params["w1"].shape[0])
    d_in = int(stacked_params["w1"].shape[1])
    hidden = int(stacked_params["w1"].shape[2])

    # --- glue (matches ConditionalProp.forward): concat auxiliary onto edges
    aux_expand = auxiliary[batch_index]                           # [E, num_aux]
    eaug = jnp.concatenate([edge_feat, aux_expand], axis=1).astype(f32)
    d_e = eaug.shape[1]

    # one-hot gather/scatter structure in bf16 (exact 0/1, half the bytes)
    gsrc = jax.nn.one_hot(src, N, dtype=jnp.bfloat16)             # [E, N]
    gdst = jax.nn.one_hot(dst, N, dtype=jnp.bfloat16)             # [E, N]

    # --- edge tiling (sublane-aligned); padded edges have all-zero one-hot
    #     rows so they contribute nothing to the scatter-add.
    te = max(8, (int(edge_tile) // 8) * 8)
    e_pad = ((E + te - 1) // te) * te
    if e_pad != E:
        pad = e_pad - E
        eaug = jnp.pad(eaug, ((0, pad), (0, 0)))
        gsrc = jnp.pad(gsrc, ((0, pad), (0, 0)))
        gdst = jnp.pad(gdst, ((0, pad), (0, 0)))
    n_et = e_pad // te

    # --- BlockSpecs
    const2 = lambda r, e: (0, 0)          # resident across the whole grid
    edge2 = lambda r, e: (e, 0)           # sliced by edge tile
    par3 = lambda r, e: (r, 0, 0)         # per-round stacked parameter

    in_specs = [
        pl.BlockSpec((N, D), const2),                 # h_in  (DMA'd once)
        pl.BlockSpec((te, d_e), edge2),               # eaug
        pl.BlockSpec((te, N), edge2),                 # gsrc (bf16)
        pl.BlockSpec((te, N), edge2),                 # gdst (bf16)
    ]
    param_inputs = []
    for k in _PARAM_ORDER:
        arr = stacked_params[k]
        in_specs.append(pl.BlockSpec((None,) + tuple(arr.shape[1:]), par3))
        param_inputs.append(arr)

    # --- advisory cost estimate
    flops_round = (2 * 2 * e_pad * N * D          # gathers
                   + 2 * e_pad * d_in * hidden    # MLP layer 1
                   + 2 * e_pad * hidden * A       # MLP layer 2
                   + 2 * e_pad * N * A            # scatter-add
                   + 2 * N * (A + D) * 2 * D      # fused r/z
                   + 2 * N * A * D + 2 * N * D * D)
    bytes_accessed = (2 * N * D * 4
                      + eaug.size * 4 + gsrc.size * 2 + gdst.size * 2
                      + sum(int(p.size) for p in param_inputs) * 4)
    cost = pl.CostEstimate(flops=int(num_rounds * flops_round),
                           transcendentals=int(num_rounds * N * 3 * D),
                           bytes_accessed=int(bytes_accessed))

    h_out = pl.pallas_call(
        _cond_prop_kernel,
        out_shape=jax.ShapeDtypeStruct((N, D), f32),
        grid=(num_rounds, n_et),
        in_specs=in_specs,
        out_specs=pl.BlockSpec((N, D), const2),       # resident node state
        scratch_shapes=[pltpu.VMEM((N, A), f32)],     # per-round activation acc
        compiler_params=pltpu.CompilerParams(
            dimension_semantics=("arbitrary", "arbitrary"),
            vmem_limit_bytes=32 * 1024 * 1024),
        cost_estimate=cost,
    )(node_feat.astype(f32), eaug, gsrc, gdst, *param_inputs)

    # Original edge features are restored at the end of ConditionalProp.forward.
    return h_out, edge_feat


# ----------------------------------------------------------------------------
# Deterministic parameter init (shapes follow SingleProp.__init__)
# ----------------------------------------------------------------------------
def init_single_prop_params(key, num_aux, node_dim, edge_dim):
    d_in = 2 * node_dim + edge_dim + num_aux
    hidden = 2 * d_in
    act = node_dim                                  # activation_dim = node_emb_dim
    ks = jax.random.split(key, 8)

    def unif(k, shape, fan_in):
        b = 1.0 / jnp.sqrt(jnp.float32(fan_in))
        return jax.random.uniform(k, shape, jnp.float32, -b, b)

    W1 = unif(ks[0], (hidden, d_in), d_in)          # torch Linear weight [out, in]
    b1 = unif(ks[1], (hidden,), d_in)
    W2 = unif(ks[2], (act, hidden), hidden)
    b2 = unif(ks[3], (act,), hidden)
    W_ih = unif(ks[4], (3 * node_dim, act), node_dim)       # GRUCell weight_ih (r|z|n)
    W_hh = unif(ks[5], (3 * node_dim, node_dim), node_dim)  # GRUCell weight_hh
    b_ih = unif(ks[6], (3 * node_dim,), node_dim)
    b_hh = unif(ks[7], (3 * node_dim,), node_dim)

    D = node_dim
    packed = dict(
        w1=W1.T,                                    # [d_in, H]; rows ordered [dst|src|edge+aux]
        b1=b1[None, :],
        w2=W2.T, b2=b2[None, :],
        # fused r/z: [a | h] @ wrz, bias = b_ih_rz + b_hh_rz
        wrz=jnp.concatenate([W_ih[:2 * D].T, W_hh[:2 * D].T], axis=0),
        brz=(b_ih[:2 * D] + b_hh[:2 * D])[None, :],
        win=W_ih[2 * D:].T, bin=b_ih[2 * D:][None, :],
        whn=W_hh[2 * D:].T, bhn=b_hh[2 * D:][None, :],
    )
    raw = dict(W1=W1, b1=b1, W2=W2, b2=b2,
               W_ih=W_ih, W_hh=W_hh, b_ih=b_ih, b_hh=b_hh)
    return packed, raw


# ----------------------------------------------------------------------------
# Pure-JAX reference (mirrors the PyTorch semantics, uses raw/unfused weights)
# ----------------------------------------------------------------------------
def reference_forward(node_feat, edge_feat, src, dst,
                      auxiliary, batch_index, raw_params_list, node_dim):
    aux_expand = auxiliary[batch_index]
    eaug = jnp.concatenate([edge_feat, aux_expand], axis=1)
    h = node_feat.astype(jnp.float32)
    N = node_feat.shape[0]
    D = node_dim
    for p in raw_params_list:
        msg = jnp.concatenate([h[dst], h[src], eaug], axis=1)
        h1 = jax.nn.relu(msg @ p["W1"].T + p["b1"])
        m2 = h1 @ p["W2"].T + p["b2"]
        a = jax.ops.segment_sum(m2, dst, num_segments=N)
        gi = a @ p["W_ih"].T + p["b_ih"]
        gh = h @ p["W_hh"].T + p["b_hh"]
        r = jax.nn.sigmoid(gi[:, :D] + gh[:, :D])
        z = jax.nn.sigmoid(gi[:, D:2 * D] + gh[:, D:2 * D])
        n = jnp.tanh(gi[:, 2 * D:] + r * gh[:, 2 * D:])
        h = (1.0 - z) * n + z * h
    return h


# ----------------------------------------------------------------------------
if __name__ == "__main__":
    # Small synthetic graph; feature dims follow the module defaults (128).
    num_prop_rounds = 2
    num_auxiliary = 8
    node_emb_dim = 128
    edge_emb_dim = 128
    batch = 2
    num_nodes = 64
    num_edges = 250          # not a multiple of the edge tile -> exercises padding

    key = jax.random.PRNGKey(0)
    k_node, k_edge, k_aux, k_src, k_dst, k_bidx, k_par = jax.random.split(key, 7)

    node_feat = jax.random.normal(k_node, (num_nodes, node_emb_dim), jnp.float32)
    edge_feat = jax.random.normal(k_edge, (num_edges, edge_emb_dim), jnp.float32)
    auxiliary = jax.random.normal(k_aux, (batch, num_auxiliary), jnp.float32)
    src = jax.random.randint(k_src, (num_edges,), 0, num_nodes)
    dst = jax.random.randint(k_dst, (num_edges,), 0, num_nodes)
    batch_index = jax.random.randint(k_bidx, (num_edges,), 0, batch)

    round_keys = jax.random.split(k_par, num_prop_rounds)
    packed_list, raw_list = [], []
    for rk in round_keys:
        packed, raw = init_single_prop_params(rk, num_auxiliary,
                                              node_emb_dim, edge_emb_dim)
        packed_list.append(packed)
        raw_list.append(raw)
    stacked_params = {k: jnp.stack([p[k] for p in packed_list], axis=0)
                      for k in packed_list[0]}

    fwd = jax.jit(functools.partial(conditional_prop_forward, edge_tile=128))
    h_out, edge_out = fwd(node_feat, edge_feat, src, dst,
                          auxiliary, batch_index, stacked_params)
    h_out = jax.block_until_ready(h_out)
    edge_out = jax.block_until_ready(edge_out)

    h_ref = reference_forward(node_feat, edge_feat, src, dst,
                              auxiliary, batch_index, raw_list, node_emb_dim)
    assert jnp.allclose(h_out, h_ref, rtol=1e-2, atol=1e-2), \
        float(jnp.max(jnp.abs(h_out - h_ref)))
    assert jnp.array_equal(edge_out, edge_feat)   # edge features restored

    print("KERNEL_OK")
</pallas_src>

<mosaic_0001>
module attributes {stable_mosaic.version = 11 : i64} {
  func.func @_cond_prop_kernel(%arg0: i32, %arg1: i32, %arg2: memref<64x128xf32, #tpu.memory_space<vmem>>, %arg3: memref<128x136xf32, #tpu.memory_space<vmem>>, %arg4: memref<128x64xbf16, #tpu.memory_space<vmem>>, %arg5: memref<128x64xbf16, #tpu.memory_space<vmem>>, %arg6: memref<1x392x784xf32, #tpu.memory_space<vmem>>, %arg7: memref<1x1x784xf32, #tpu.memory_space<vmem>>, %arg8: memref<1x784x128xf32, #tpu.memory_space<vmem>>, %arg9: memref<1x1x128xf32, #tpu.memory_space<vmem>>, %arg10: memref<1x256x256xf32, #tpu.memory_space<vmem>>, %arg11: memref<1x1x256xf32, #tpu.memory_space<vmem>>, %arg12: memref<1x128x128xf32, #tpu.memory_space<vmem>>, %arg13: memref<1x1x128xf32, #tpu.memory_space<vmem>>, %arg14: memref<1x128x128xf32, #tpu.memory_space<vmem>>, %arg15: memref<1x1x128xf32, #tpu.memory_space<vmem>>, %arg16: memref<64x128xf32, #tpu.memory_space<vmem>>, %arg17: memref<64x128xf32, #tpu.memory_space<vmem>>) attributes {dimension_semantics = [#tpu.dimension_semantics<arbitrary>, #tpu.dimension_semantics<arbitrary>], iteration_bounds = array<i64: 2, 2>, scalar_prefetch = 0 : i64, scratch_operands = 1 : i64, tpu.core_type = #tpu.core_type<tc>, window_params = [{pipeline_mode = #tpu.pipeline_mode<synchronous>, transform_indices = @transform_0, window_bounds = array<i64: 64, 128>}, {transform_indices = @transform_1, window_bounds = array<i64: 128, 136>}, {transform_indices = @transform_2, window_bounds = array<i64: 128, 64>}, {transform_indices = @transform_3, window_bounds = array<i64: 128, 64>}, {transform_indices = @transform_4, window_bounds = array<i64: 1, 392, 784>}, {transform_indices = @transform_5, window_bounds = array<i64: 1, 1, 784>}, {transform_indices = @transform_6, window_bounds = array<i64: 1, 784, 128>}, {transform_indices = @transform_7, window_bounds = array<i64: 1, 1, 128>}, {transform_indices = @transform_8, window_bounds = array<i64: 1, 256, 256>}, {transform_indices = @transform_9, window_bounds = array<i64: 1, 1, 256>}, {transform_indices = @transform_10, window_bounds = array<i64: 1, 128, 128>}, {transform_indices = @transform_11, window_bounds = array<i64: 1, 1, 128>}, {transform_indices = @transform_12, window_bounds = array<i64: 1, 128, 128>}, {transform_indices = @transform_13, window_bounds = array<i64: 1, 1, 128>}, {pipeline_mode = #tpu.pipeline_mode<synchronous>, transform_indices = @transform_14, window_bounds = array<i64: 64, 128>}]} {
    %c0_i32 = arith.constant 0 : i32
    %0 = arith.cmpi eq, %arg0, %c0_i32 : i32
    %c0_i32_0 = arith.constant 0 : i32
    %1 = arith.cmpi eq, %arg1, %c0_i32_0 : i32
    %2 = arith.andi %0, %1 : i1
    %3 = arith.extui %2 : i1 to i32
    %c0_i32_1 = arith.constant 0 : i32
    %4 = arith.cmpi ne, %3, %c0_i32_1 : i32
    scf.if %4 {
      %c0_33 = arith.constant 0 : index
      %c0_34 = arith.constant 0 : index
      %40 = vector.load %arg2[%c0_33, %c0_34] : memref<64x128xf32, #tpu.memory_space<vmem>>, vector<64x128xf32>
      %c0_35 = arith.constant 0 : index
      %c0_36 = arith.constant 0 : index
      %41 = vector.load %arg16[%c0_35, %c0_36] : memref<64x128xf32, #tpu.memory_space<vmem>>, vector<64x128xf32>
      tpu.vector_store %arg16[%c0_35, %c0_36], %40 {strides = array<i32>} : memref<64x128xf32, #tpu.memory_space<vmem>>, vector<64x128xf32>,
    } else {
    }
    %c0_i32_2 = arith.constant 0 : i32
    %5 = arith.cmpi eq, %arg1, %c0_i32_2 : i32
    %6 = arith.extui %5 : i1 to i32
    %c0_i32_3 = arith.constant 0 : i32
    %7 = arith.cmpi ne, %6, %c0_i32_3 : i32
    scf.if %7 {
      %cst_33 = arith.constant 0.000000e+00 : f32
      %40 = vector.broadcast %cst_33 : f32 to vector<64x128xf32>
      %c0_34 = arith.constant 0 : index
      %c0_35 = arith.constant 0 : index
      %41 = vector.load %arg17[%c0_34, %c0_35] : memref<64x128xf32, #tpu.memory_space<vmem>>, vector<64x128xf32>
      tpu.vector_store %arg17[%c0_34, %c0_35], %40 {strides = array<i32>} : memref<64x128xf32, #tpu.memory_space<vmem>>, vector<64x128xf32>,
    } else {
    }
    %c0 = arith.constant 0 : index
    %c0_4 = arith.constant 0 : index
    %8 = vector.load %arg16[%c0, %c0_4] : memref<64x128xf32, #tpu.memory_space<vmem>>, vector<64x128xf32>
    %c0_5 = arith.constant 0 : index
    %c0_6 = arith.constant 0 : index
    %9 = vector.load %arg4[%c0_5, %c0_6] : memref<128x64xbf16, #tpu.memory_space<vmem>>, vector<128x64xbf16>
    %10 = arith.extf %9 : vector<128x64xbf16> to vector<128x64xf32>
    %c0_7 = arith.constant 0 : index
    %c0_8 = arith.constant 0 : index
    %11 = vector.load %arg5[%c0_7, %c0_8] : memref<128x64xbf16, #tpu.memory_space<vmem>>, vector<128x64xbf16>
    %12 = arith.extf %11 : vector<128x64xbf16> to vector<128x64xf32>
    %cst = arith.constant dense<0.000000e+00> : vector<128x128xf32>
    %13 = tpu.matmul %12, %8, %cst {dimension_numbers = #tpu.dot_dimension_numbers<[1], [0], [0], [1], [0, 0, 1, 1], [], []>} : vector<128x64xf32>, vector<64x128xf32>, vector<128x128xf32> -> vector<128x128xf32>
    %cst_9 = arith.constant dense<0.000000e+00> : vector<128x128xf32>
    %14 = tpu.matmul %10, %8, %cst_9 {dimension_numbers = #tpu.dot_dimension_numbers<[1], [0], [0], [1], [0, 0, 1, 1], [], []>} : vector<128x64xf32>, vector<64x128xf32>, vector<128x128xf32> -> vector<128x128xf32>
    %c0_10 = arith.constant 0 : index
    %c0_11 = arith.constant 0 : index
    %15 = vector.load %arg3[%c0_10, %c0_11] : memref<128x136xf32, #tpu.memory_space<vmem>>, vector<128x136xf32>
    %16 = tpu.concatenate %13, %14, %15 in 1 : vector<128x128xf32>, vector<128x128xf32>, vector<128x136xf32> -> vector<128x392xf32>
    %c0_12 = arith.constant 0 : index
    %c0_13 = arith.constant 0 : index
    %c0_14 = arith.constant 0 : index
    %17 = vector.load %arg6[%c0_12, %c0_13, %c0_14] : memref<1x392x784xf32, #tpu.memory_space<vmem>>, vector<1x392x784xf32>
    %18 = vector.shape_cast %17 : vector<1x392x784xf32> to vector<392x784xf32>
    %cst_15 = arith.constant dense<0.000000e+00> : vector<128x784xf32>
    %19 = tpu.matmul %16, %18, %cst_15 {dimension_numbers = #tpu.dot_dimension_numbers<[1], [0], [0], [1], [0, 0, 1, 1], [], []>} : vector<128x392xf32>, vector<392x784xf32>, vector<128x784xf32> -> vector<128x784xf32>
    %c0_16 = arith.constant 0 : index
    %c0_17 = arith.constant 0 : index
    %c0_18 = arith.constant 0 : index
    %20 = vector.load %arg7[%c0_16, %c0_17, %c0_18] : memref<1x1x784xf32, #tpu.memory_space<vmem>>, vector<1x1x784xf32>
    %21 = vector.shape_cast %20 : vector<1x1x784xf32> to vector<1x784xf32>
    %22 = vector.broadcast %21 : vector<1x784xf32> to vector<128x784xf32>
    %23 = arith.addf %19, %22 : vector<128x784xf32>
    %cst_19 = arith.constant 0.000000e+00 : f32
    %24 = vector.broadcast %cst_19 : f32 to vector<128x784xf32>
    %25 = arith.maximumf %23, %24 : vector<128x784xf32>
    %c0_20 = arith.constant 0 : index
    %c0_21 = arith.constant 0 : index
    %c0_22 = arith.constant 0 : index
    %26 = vector.load %arg8[%c0_20, %c0_21, %c0_22] : memref<1x784x128xf32, #tpu.memory_space<vmem>>, vector<1x784x128xf32>
    %27 = vector.shape_cast %26 : vector<1x784x128xf32> to vector<784x128xf32>
    %cst_23 = arith.constant dense<0.000000e+00> : vector<128x128xf32>
    %28 = tpu.matmul %25, %27, %cst_23 {dimension_numbers = #tpu.dot_dimension_numbers<[1], [0], [0], [1], [0, 0, 1, 1], [], []>} : vector<128x784xf32>, vector<784x128xf32>, vector<128x128xf32> -> vector<128x128xf32>
    %c0_24 = arith.constant 0 : index
    %c0_25 = arith.constant 0 : index
    %c0_26 = arith.constant 0 : index
    %29 = vector.load %arg9[%c0_24, %c0_25, %c0_26] : memref<1x1x128xf32, #tpu.memory_space<vmem>>, vector<1x1x128xf32>
    %30 = vector.shape_cast %29 : vector<1x1x128xf32> to vector<1x128xf32>
    %31 = vector.broadcast %30 : vector<1x128xf32> to vector<128x128xf32>
    %32 = arith.addf %28, %31 : vector<128x128xf32>
    %c0_27 = arith.constant 0 : index
    %c0_28 = arith.constant 0 : index
    %33 = vector.load %arg17[%c0_27, %c0_28] : memref<64x128xf32, #tpu.memory_space<vmem>>, vector<64x128xf32>
    %cst_29 = arith.constant dense<0.000000e+00> : vector<64x128xf32>
    %34 = tpu.matmul %12, %32, %cst_29 {dimension_numbers = #tpu.dot_dimension_numbers<[0], [0], [1], [1], [0, 1, 1, 1], [], []>} : vector<128x64xf32>, vector<128x128xf32>, vector<64x128xf32> -> vector<64x128xf32>
    %35 = arith.addf %33, %34 : vector<64x128xf32>
    %c0_30 = arith.constant 0 : index
    %c0_31 = arith.constant 0 : index
    %36 = vector.load %arg17[%c0_30, %c0_31] : memref<64x128xf32, #tpu.memory_space<vmem>>, vector<64x128xf32>
    tpu.vector_store %arg17[%c0_30, %c0_31], %35 {strides = array<i32>} : memref<64x128xf32, #tpu.memory_space<vmem>>, vector<64x128xf32>,
    %c1_i32 = arith.constant 1 : i32
    %37 = arith.cmpi eq, %arg1, %c1_i32 : i32
    %38 = arith.extui %37 : i1 to i32
    %c0_i32_32 = arith.constant 0 : i32
    %39 = arith.cmpi ne, %38, %c0_i32_32 : i32
    scf.if %39 {
      %c0_33 = arith.constant 0 : index
      %c0_34 = arith.constant 0 : index
      %40 = vector.load %arg17[%c0_33, %c0_34] : memref<64x128xf32, #tpu.memory_space<vmem>>, vector<64x128xf32>
      %41 = tpu.concatenate %40, %8 in 1 : vector<64x128xf32>, vector<64x128xf32> -> vector<64x256xf32>
      %c0_35 = arith.constant 0 : index
      %c0_36 = arith.constant 0 : index
      %c0_37 = arith.constant 0 : index
      %42 = vector.load %arg10[%c0_35, %c0_36, %c0_37] : memref<1x256x256xf32, #tpu.memory_space<vmem>>, vector<1x256x256xf32>
      %43 = vector.shape_cast %42 : vector<1x256x256xf32> to vector<256x256xf32>
      %cst_38 = arith.constant dense<0.000000e+00> : vector<64x256xf32>
      %44 = tpu.matmul %41, %43, %cst_38 {dimension_numbers = #tpu.dot_dimension_numbers<[1], [0], [0], [1], [0, 0, 1, 1], [], []>} : vector<64x256xf32>, vector<256x256xf32>, vector<64x256xf32> -> vector<64x256xf32>
      %c0_39 = arith.constant 0 : index
      %c0_40 = arith.constant 0 : index
      %c0_41 = arith.constant 0 : index
      %45 = vector.load %arg11[%c0_39, %c0_40, %c0_41] : memref<1x1x256xf32, #tpu.memory_space<vmem>>, vector<1x1x256xf32>
      %46 = vector.shape_cast %45 : vector<1x1x256xf32> to vector<1x256xf32>
      %47 = vector.broadcast %46 : vector<1x256xf32> to vector<64x256xf32>
      %48 = arith.addf %44, %47 : vector<64x256xf32>
      %49 = arith.negf %48 : vector<64x256xf32>
      %50 = math.exp %49 : vector<64x256xf32>
      %cst_42 = arith.constant 1.000000e+00 : f32
      %51 = vector.broadcast %cst_42 : f32 to vector<64x256xf32>
      %52 = arith.addf %51, %50 : vector<64x256xf32>
      %53 = arith.divf %51, %52 : vector<64x256xf32>
      %54 = vector.extract_strided_slice %53 {offsets = [0, 0], sizes = [64, 128], strides = [1, 1]} : vector<64x256xf32> to vector<64x128xf32>
      %55 = vector.extract_strided_slice %53 {offsets = [0, 128], sizes = [64, 128], strides = [1, 1]} : vector<64x256xf32> to vector<64x128xf32>
      %c0_43 = arith.constant 0 : index
      %c0_44 = arith.constant 0 : index
      %c0_45 = arith.constant 0 : index
      %56 = vector.load %arg12[%c0_43, %c0_44, %c0_45] : memref<1x128x128xf32, #tpu.memory_space<vmem>>, vector<1x128x128xf32>
      %57 = vector.shape_cast %56 : vector<1x128x128xf32> to vector<128x128xf32>
      %cst_46 = arith.constant dense<0.000000e+00> : vector<64x128xf32>
      %58 = tpu.matmul %40, %57, %cst_46 {dimension_numbers = #tpu.dot_dimension_numbers<[1], [0], [0], [1], [0, 0, 1, 1], [], []>} : vector<64x128xf32>, vector<128x128xf32>, vector<64x128xf32> -> vector<64x128xf32>
      %c0_47 = arith.constant 0 : index
      %c0_48 = arith.constant 0 : index
      %c0_49 = arith.constant 0 : index
      %59 = vector.load %arg13[%c0_47, %c0_48, %c0_49] : memref<1x1x128xf32, #tpu.memory_space<vmem>>, vector<1x1x128xf32>
      %60 = vector.shape_cast %59 : vector<1x1x128xf32> to vector<1x128xf32>
      %61 = vector.broadcast %60 : vector<1x128xf32> to vector<64x128xf32>
      %62 = arith.addf %58, %61 : vector<64x128xf32>
      %c0_50 = arith.constant 0 : index
      %c0_51 = arith.constant 0 : index
      %c0_52 = arith.constant 0 : index
      %63 = vector.load %arg14[%c0_50, %c0_51, %c0_52] : memref<1x128x128xf32, #tpu.memory_space<vmem>>, vector<1x128x128xf32>
      %64 = vector.shape_cast %63 : vector<1x128x128xf32> to vector<128x128xf32>
      %cst_53 = arith.constant dense<0.000000e+00> : vector<64x128xf32>
      %65 = tpu.matmul %8, %64, %cst_53 {dimension_numbers = #tpu.dot_dimension_numbers<[1], [0], [0], [1], [0, 0, 1, 1], [], []>} : vector<64x128xf32>, vector<128x128xf32>, vector<64x128xf32> -> vector<64x128xf32>
      %c0_54 = arith.constant 0 : index
      %c0_55 = arith.constant 0 : index
      %c0_56 = arith.constant 0 : index
      %66 = vector.load %arg15[%c0_54, %c0_55, %c0_56] : memref<1x1x128xf32, #tpu.memory_space<vmem>>, vector<1x1x128xf32>
      %67 = vector.shape_cast %66 : vector<1x1x128xf32> to vector<1x128xf32>
      %68 = vector.broadcast %67 : vector<1x128xf32> to vector<64x128xf32>
      %69 = arith.addf %65, %68 : vector<64x128xf32>
      %70 = arith.mulf %54, %69 : vector<64x128xf32>
      %71 = arith.addf %62, %70 : vector<64x128xf32>
      %72 = math.tanh %71 : vector<64x128xf32>
      %cst_57 = arith.constant 1.000000e+00 : f32
      %73 = vector.broadcast %cst_57 : f32 to vector<64x128xf32>
      %74 = arith.subf %73, %55 : vector<64x128xf32>
      %75 = arith.mulf %74, %72 : vector<64x128xf32>
      %76 = arith.mulf %55, %8 : vector<64x128xf32>
      %77 = arith.addf %75, %76 : vector<64x128xf32>
      %c0_58 = arith.constant 0 : index
      %c0_59 = arith.constant 0 : index
      %78 = vector.load %arg16[%c0_58, %c0_59] : memref<64x128xf32, #tpu.memory_space<vmem>>, vector<64x128xf32>
      tpu.vector_store %arg16[%c0_58, %c0_59], %77 {strides = array<i32>} : memref<64x128xf32, #tpu.memory_space<vmem>>, vector<64x128xf32>,
    } else {
    }
    return
  }
  func.func @transform_0(%arg0: i32, %arg1: i32) -> (i32, i32) {
    %c0_i32 = arith.constant 0 : i32
    %c0_i32_0 = arith.constant 0 : i32
    %c0_i32_1 = arith.constant 0 : i32
    return %c0_i32, %c0_i32_0 : i32, i32
  }
  func.func @transform_1(%arg0: i32, %arg1: i32) -> (i32, i32) {
    %c0_i32 = arith.constant 0 : i32
    %c0_i32_0 = arith.constant 0 : i32
    return %arg1, %c0_i32 : i32, i32
  }
  func.func @transform_2(%arg0: i32, %arg1: i32) -> (i32, i32) {
    %c0_i32 = arith.constant 0 : i32
    %c0_i32_0 = arith.constant 0 : i32
    return %arg1, %c0_i32 : i32, i32
  }
  func.func @transform_3(%arg0: i32, %arg1: i32) -> (i32, i32) {
    %c0_i32 = arith.constant 0 : i32
    %c0_i32_0 = arith.constant 0 : i32
    return %arg1, %c0_i32 : i32, i32
  }
  func.func @transform_4(%arg0: i32, %arg1: i32) -> (i32, i32, i32) {
    %c0_i32 = arith.constant 0 : i32
    %c0_i32_0 = arith.constant 0 : i32
    %c0_i32_1 = arith.constant 0 : i32
    return %arg0, %c0_i32, %c0_i32_0 : i32, i32, i32
  }
  func.func @transform_5(%arg0: i32, %arg1: i32) -> (i32, i32, i32) {
    %c0_i32 = arith.constant 0 : i32
    %c0_i32_0 = arith.constant 0 : i32
    %c0_i32_1 = arith.constant 0 : i32
    return %arg0, %c0_i32, %c0_i32_0 : i32, i32, i32
  }
  func.func @transform_6(%arg0: i32, %arg1: i32) -> (i32, i32, i32) {
    %c0_i32 = arith.constant 0 : i32
    %c0_i32_0 = arith.constant 0 : i32
    %c0_i32_1 = arith.constant 0 : i32
    return %arg0, %c0_i32, %c0_i32_0 : i32, i32, i32
  }
  func.func @transform_7(%arg0: i32, %arg1: i32) -> (i32, i32, i32) {
    %c0_i32 = arith.constant 0 : i32
    %c0_i32_0 = arith.constant 0 : i32
    %c0_i32_1 = arith.constant 0 : i32
    return %arg0, %c0_i32, %c0_i32_0 : i32, i32, i32
  }
  func.func @transform_8(%arg0: i32, %arg1: i32) -> (i32, i32, i32) {
    %c0_i32 = arith.constant 0 : i32
    %c0_i32_0 = arith.constant 0 : i32
    %c0_i32_1 = arith.constant 0 : i32
    return %arg0, %c0_i32, %c0_i32_0 : i32, i32, i32
  }
  func.func @transform_9(%arg0: i32, %arg1: i32) -> (i32, i32, i32) {
    %c0_i32 = arith.constant 0 : i32
    %c0_i32_0 = arith.constant 0 : i32
    %c0_i32_1 = arith.constant 0 : i32
    return %arg0, %c0_i32, %c0_i32_0 : i32, i32, i32
  }
  func.func @transform_10(%arg0: i32, %arg1: i32) -> (i32, i32, i32) {
    %c0_i32 = arith.constant 0 : i32
    %c0_i32_0 = arith.constant 0 : i32
    %c0_i32_1 = arith.constant 0 : i32
    return %arg0, %c0_i32, %c0_i32_0 : i32, i32, i32
  }
  func.func @transform_11(%arg0: i32, %arg1: i32) -> (i32, i32, i32) {
    %c0_i32 = arith.constant 0 : i32
    %c0_i32_0 = arith.constant 0 : i32
    %c0_i32_1 = arith.constant 0 : i32
    return %arg0, %c0_i32, %c0_i32_0 : i32, i32, i32
  }
  func.func @transform_12(%arg0: i32, %arg1: i32) -> (i32, i32, i32) {
    %c0_i32 = arith.constant 0 : i32
    %c0_i32_0 = arith.constant 0 : i32
    %c0_i32_1 = arith.constant 0 : i32
    return %arg0, %c0_i32, %c0_i32_0 : i32, i32, i32
  }
  func.func @transform_13(%arg0: i32, %arg1: i32) -> (i32, i32, i32) {
    %c0_i32 = arith.constant 0 : i32
    %c0_i32_0 = arith.constant 0 : i32
    %c0_i32_1 = arith.constant 0 : i32
    return %arg0, %c0_i32, %c0_i32_0 : i32, i32, i32
  }
  func.func @transform_14(%arg0: i32, %arg1: i32) -> (i32, i32) {
    %c0_i32 = arith.constant 0 : i32
    %c0_i32_0 = arith.constant 0 : i32
    %c0_i32_1 = arith.constant 0 : i32
    return %c0_i32, %c0_i32_0 : i32, i32
  }
}

</mosaic_0001>

<llo_original>
// kernel: conditional_prop_forward.1
$region0: #{conditional_prop_forward.1}
  #allocation0 [shape = 'u32[]', space=smem, size = 0x4, offset = 0x4, fixed_abs, tag = 'smem constant byte address 0x4 - core index']
  #allocation1 [shape = 'u32[144,128]{1,0:T(1,128)}', space=vmem, size = 0x12000, scoped, tag = 'internal scratch']
  #allocation2 [shape = 'f32[64,128]{1,0:T(8,128)}', space=vmem, size = 0x8000, scoped, tag = 'scratch operand']
  %s0 = inlined_call_operand.hbm [shape: f32[64,128], index: 0, kind: input, shape index: {}]
  %s1 = inlined_call_operand.vmem [shape: f32[256,136], index: 1, kind: input, shape index: {}]
  %s2 = inlined_call_operand.vmem [shape: bf16[256,64], index: 2, kind: input, shape index: {}]
  %s3 = inlined_call_operand.vmem [shape: bf16[256,64], index: 3, kind: input, shape index: {}]
  %s4 = inlined_call_operand.hbm [shape: f32[2,392,784], index: 4, kind: input, shape index: {}]
  %s5 = inlined_call_operand.hbm [shape: f32[2,1,784], index: 5, kind: input, shape index: {}]
  %s6 = inlined_call_operand.hbm [shape: f32[2,784,128], index: 6, kind: input, shape index: {}]
  %s7 = inlined_call_operand.hbm [shape: f32[2,1,128], index: 7, kind: input, shape index: {}]
  %s8 = inlined_call_operand.hbm [shape: f32[2,256,256], index: 8, kind: input, shape index: {}]
  %s9 = inlined_call_operand.hbm [shape: f32[2,1,256], index: 9, kind: input, shape index: {}]
  %s10 = inlined_call_operand.hbm [shape: f32[2,128,128], index: 10, kind: input, shape index: {}]
  %s11 = inlined_call_operand.hbm [shape: f32[2,1,128], index: 11, kind: input, shape index: {}]
  %s12 = inlined_call_operand.hbm [shape: f32[2,128,128], index: 12, kind: input, shape index: {}]
  %s13 = inlined_call_operand.hbm [shape: f32[2,1,128], index: 13, kind: input, shape index: {}]
  %s14 = inlined_call_operand.hbm [shape: f32[64,128], index: 14, kind: output, shape index: {}]
  %s15 = sld [smem:[#allocation0]]
  $region145: #{conditional_prop_forward.1} parent=0
    _
  %s17 = ssub.s32 1, %s15
  %s18 = scalar_select 0, %s17, %s15
  $region1: #{conditional_prop_forward.1} parent=0
    #allocation3 [shape = 'u8[32768]{0}', space=vmem, size = 0x8000, scoped, tag = 'input window, operand 0, single buffered']
    #allocation4 [shape = 's32[2]{0}', space=sflag, size = 0x8, scoped, tag = 'scoped memory for conditional_prop_forward.1']
    #allocation5 [shape = 's32[2]{0}', space=sflag, size = 0x8, scoped, tag = 'scoped memory for conditional_prop_forward.1']
    #allocation6 [shape = 'u8[2809856]{0}', space=vmem, size = 0x2ae000, scoped, tag = 'input window, operand 4']
    #allocation7 [shape = 's32[2]{0}', space=sflag, size = 0x8, scoped, tag = 'scoped memory for conditional_prop_forward.1']
    #allocation8 [shape = 'u8[7168]{0}', space=vmem, size = 0x1c00, scoped, tag = 'input window, operand 5']
    #allocation9 [shape = 'u8[802816]{0}', space=vmem, size = 0xc4000, scoped, tag = 'input window, operand 6']
    #allocation10 [shape = 's32[2]{0}', space=sflag, size = 0x8, scoped, tag = 'scoped memory for conditional_prop_forward.1']
    #allocation11 [shape = 'u8[1024]{0}', space=vmem, size = 0x400, scoped, tag = 'input window, operand 7']
    #allocation12 [shape = 'u8[524288]{0}', space=vmem, size = 0x80000, scoped, tag = 'input window, operand 8']
    #allocation13 [shape = 's32[2]{0}', space=sflag, size = 0x8, scoped, tag = 'scoped memory for conditional_prop_forward.1']
    #allocation14 [shape = 'u8[2048]{0}', space=vmem, size = 0x800, scoped, tag = 'input window, operand 9']
    #allocation15 [shape = 'u8[131072]{0}', space=vmem, size = 0x20000, scoped, tag = 'input window, operand 10']
    #allocation16 [shape = 's32[2]{0}', space=sflag, size = 0x8, scoped, tag = 'scoped memory for conditional_prop_forward.1']
    #allocation17 [shape = 'u8[1024]{0}', space=vmem, size = 0x400, scoped, tag = 'input window, operand 11']
    #allocation18 [shape = 'u8[131072]{0}', space=vmem, size = 0x20000, scoped, tag = 'input window, operand 12']
    #allocation19 [shape = 's32[2]{0}', space=sflag, size = 0x8, scoped, tag = 'scoped memory for conditional_prop_forward.1']
    #allocation20 [shape = 'u8[1024]{0}', space=vmem, size = 0x400, scoped, tag = 'input window, operand 13']
    #allocation21 [shape = 'u8[32768]{0}', space=vmem, size = 0x8000, scoped, tag = 'output window, operand 0, single buffered']
    %19 = vsyncpa [#allocation4], 0
    %20 = vsyncpa [#allocation7], 0
    %s21 = scalar_lea.sflag [#allocation7], 1
    %22 = vsyncpa %s21, 0
    %23 = vsyncpa [#allocation10], 0
    %s24 = scalar_lea.sflag [#allocation10], 1
    %25 = vsyncpa %s24, 0
    %26 = vsyncpa [#allocation13], 0
    %s27 = scalar_lea.sflag [#allocation13], 1
    %28 = vsyncpa %s27, 0
    %29 = vsyncpa [#allocation16], 0
    %s30 = scalar_lea.sflag [#allocation16], 1
    %31 = vsyncpa %s30, 0
    %32 = vsyncpa [#allocation19], 0
    %s33 = scalar_lea.sflag [#allocation19], 1
    %34 = vsyncpa %s33, 0
    %35 = vsyncpa [#allocation5], 0
    loop: start=0, step=1, limit=6
    $region2: #{conditional_prop_forward.1} parent=1 // loop_pre_header
      _
    $region3: #{conditional_prop_forward.1} parent=1 // loop_header
      %s37 = sphi 0, %s41
      %p38 = scmp.ge.s32.totalorder %s37, 6
      %s44 = sphi 0, %s56
      %s45 = sphi 0, %s52
      %s46 = sphi 0, %s44
      %s47 = sphi 0, %s45
      %s48 = sphi 0, %s46
      %s49 = sphi 0, %s47
      %s57 = sphi 0, %s57
      %s59 = sphi 0, %s57
      %s60 = sphi 0, %s59
      %s74 = sphi 0, %s60
      %s80 = sphi 0, %s82
      %s83 = sphi 0, %s80
      %s84 = sphi 0, %s83
      %s100 = sphi 0, %s84
      %s106 = sphi 0, %s108
      %s109 = sphi 0, %s106
      %s110 = sphi 0, %s109
      %s126 = sphi 0, %s110
      %s132 = sphi 0, %s134
      %s135 = sphi 0, %s132
      %s136 = sphi 0, %s135
      %s152 = sphi 0, %s136
      %s158 = sphi 0, %s160
      %s161 = sphi 0, %s158
      %s162 = sphi 0, %s161
      %s178 = sphi 0, %s162
      %s184 = sphi 0, %s186
      %s187 = sphi 0, %s184
      %s188 = sphi 0, %s187
      %s204 = sphi 0, %s188
      %s210 = sphi 0, %s212
      %s213 = sphi 0, %s210
      %s214 = sphi 0, %s213
      %s230 = sphi 0, %s214
      %s236 = sphi 0, %s238
      %s239 = sphi 0, %s236
      %s240 = sphi 0, %s239
      %s256 = sphi 0, %s240
      %s262 = sphi 0, %s264
      %s265 = sphi 0, %s262
      %s266 = sphi 0, %s265
      %s282 = sphi 0, %s266
      %s288 = sphi 0, %s290
      %s291 = sphi 0, %s288
      %s292 = sphi 0, %s291
      %s308 = sphi 0, %s292
      %s314 = sphi 0, %s316
      %s317 = sphi 0, %s314
      %s318 = sphi 0, %s317
      %s334 = sphi 0, %s318
      %s340 = sphi 0, %s342
      %s343 = sphi 0, %s340
      %s344 = sphi 0, %s343
      %s360 = sphi 0, %s344
      %s366 = sphi 0, %s368
      %s369 = sphi 0, %s366
      %s370 = sphi 0, %s369
      %s386 = sphi 0, %s370
      %s392 = sphi 0, %s394
      %s395 = sphi 0, %s392
      %s396 = sphi 0, %s395
      %s412 = sphi 0, %s396
      %s416 = sphi 0, %s416
      %s418 = sphi 0, %s416
      %s419 = sphi 0, %s418
      %s433 = sphi 0, %s419
    $region4: #{conditional_prop_forward.1} parent=1 // loop_header_branch
      %40 = sbr.rel (%p38) target = $region8
    $region5: #{conditional_prop_forward.1} parent=1 // loop_body
      %s42 = ssub.s32 %s37, 1
      %s43 = ssub.s32 %s37, 2
      %s50 = sadd.s32 1, %s45
      %p51 = scmp.ge.s32.totalorder %s50, 2
      %s52 = scalar_select %p51, 0, %s50
      %s53 = sadd.s32 1, %s44
      %s54 = scalar_select %p51, %s53, %s44
      %p55 = scmp.ge.s32.totalorder %s54, 2
      %s56 = scalar_select %p55, 0, %s54
      %s58 = sadd.s32 %s57, 1
      %p61 = scmp.eq.s32.totalorder %s37, 3
      %p62 = scmp.ne.s32.totalorder %s57, %s59
      %p63 = scmp.eq.s32.totalorder %s37, 0
      %p64 = por %p62, %p63
      %p65 = scmp.ne.s32.totalorder %s57, %s59
      %p66 = scmp.eq.s32.totalorder %s42, 3
      %p67 = por %p65, %p66
      %p68 = scmp.ne.s32.totalorder %s59, %s60
      %p69 = scmp.eq.s32.totalorder %s42, 0
      %p70 = por %p68, %p69
      %p71 = scmp.ne.s32.totalorder %s59, %s60
      %p72 = scmp.eq.s32.totalorder %s43, 3
      %p73 = por %p71, %p72
      %p75 = scmp.ne.s32.totalorder %s60, %s74
      %p76 = scmp.eq.s32.totalorder %s43, 0
      %p77 = por %p75, %p76
      %s78 = ssub.s32 %s45, %s52
      %p79 = scmp.eq.s32.totalorder %s78, 0
      %s81 = sadd.s32 %s80, 1
      %s82 = scalar_select %p79, %s80, %s81
      %p85 = pneg %p79
      %p86 = scmp.eq.s32.totalorder %s37, 3
      %p87 = por %p85, %p86
      %p88 = scmp.ne.s32.totalorder %s80, %s83
      %p89 = scmp.eq.s32.totalorder %s37, 0
      %p90 = por %p88, %p89
      %p91 = scmp.ne.s32.totalorder %s80, %s83
      %p92 = scmp.eq.s32.totalorder %s42, 3
      %p93 = por %p91, %p92
      %p94 = scmp.ne.s32.totalorder %s83, %s84
      %p95 = scmp.eq.s32.totalorder %s42, 0
      %p96 = por %p94, %p95
      %p97 = scmp.ne.s32.totalorder %s83, %s84
      %p98 = scmp.eq.s32.totalorder %s43, 3
      %p99 = por %p97, %p98
      %p101 = scmp.ne.s32.totalorder %s84, %s100
      %p102 = scmp.eq.s32.totalorder %s43, 0
      %p103 = por %p101, %p102
      %s104 = ssub.s32 %s45, %s52
      %p105 = scmp.eq.s32.totalorder %s104, 0
      %s107 = sadd.s32 %s106, 1
      %s108 = scalar_select %p105, %s106, %s107
      %p111 = pneg %p105
      %p112 = scmp.eq.s32.totalorder %s37, 3
      %p113 = por %p111, %p112
      %p114 = scmp.ne.s32.totalorder %s106, %s109
      %p115 = scmp.eq.s32.totalorder %s37, 0
      %p116 = por %p114, %p115
      %p117 = scmp.ne.s32.totalorder %s106, %s109
      %p118 = scmp.eq.s32.totalorder %s42, 3
      %p119 = por %p117, %p118
      %p120 = scmp.ne.s32.totalorder %s109, %s110
      %p121 = scmp.eq.s32.totalorder %s42, 0
      %p122 = por %p120, %p121
      %p123 = scmp.ne.s32.totalorder %s109, %s110
      %p124 = scmp.eq.s32.totalorder %s43, 3
      %p125 = por %p123, %p124
      %p127 = scmp.ne.s32.totalorder %s110, %s126
      %p128 = scmp.eq.s32.totalorder %s43, 0
      %p129 = por %p127, %p128
      %s130 = ssub.s32 %s45, %s52
      %p131 = scmp.eq.s32.totalorder %s130, 0
      %s133 = sadd.s32 %s132, 1
      %s134 = scalar_select %p131, %s132, %s133
      %p137 = pneg %p131
      %p138 = scmp.eq.s32.totalorder %s37, 3
      %p139 = por %p137, %p138
      %p140 = scmp.ne.s32.totalorder %s132, %s135
      %p141 = scmp.eq.s32.totalorder %s37, 0
      %p142 = por %p140, %p141
      %p143 = scmp.ne.s32.totalorder %s132, %s135
      %p144 = scmp.eq.s32.totalorder %s42, 3
      %p145 = por %p143, %p144
      %p146 = scmp.ne.s32.totalorder %s135, %s136
      %p147 = scmp.eq.s32.totalorder %s42, 0
      %p148 = por %p146, %p147
      %p149 = scmp.ne.s32.totalorder %s135, %s136
      %p150 = scmp.eq.s32.totalorder %s43, 3
      %p151 = por %p149, %p150
      %p153 = scmp.ne.s32.totalorder %s136, %s152
      %p154 = scmp.eq.s32.totalorder %s43, 0
      %p155 = por %p153, %p154
      %s156 = ssub.s32 %s44, %s56
      %p157 = scmp.eq.s32.totalorder %s156, 0
      %s159 = sadd.s32 %s158, 1
      %s160 = scalar_select %p157, %s158, %s159
      %p163 = pneg %p157
      %p164 = scmp.eq.s32.totalorder %s37, 3
      %p165 = por %p163, %p164
      %p166 = scmp.ne.s32.totalorder %s158, %s161
      %p167 = scmp.eq.s32.totalorder %s37, 0
      %p168 = por %p166, %p167
      %p169 = scmp.ne.s32.totalorder %s158, %s161
      %p170 = scmp.eq.s32.totalorder %s42, 3
      %p171 = por %p169, %p170
      %p172 = scmp.ne.s32.totalorder %s161, %s162
      %p173 = scmp.eq.s32.totalorder %s42, 0
      %p174 = por %p172, %p173
      %p175 = scmp.ne.s32.totalorder %s161, %s162
      %p176 = scmp.eq.s32.totalorder %s43, 3
      %p177 = por %p175, %p176
      %p179 = scmp.ne.s32.totalorder %s162, %s178
      %p180 = scmp.eq.s32.totalorder %s43, 0
      %p181 = por %p179, %p180
      %s182 = ssub.s32 %s44, %s56
      %p183 = scmp.eq.s32.totalorder %s182, 0
      %s185 = sadd.s32 %s184, 1
      %s186 = scalar_select %p183, %s184, %s185
      %p189 = pneg %p183
      %p190 = scmp.eq.s32.totalorder %s37, 3
      %p191 = por %p189, %p190
      %p192 = scmp.ne.s32.totalorder %s184, %s187
      %p193 = scmp.eq.s32.totalorder %s37, 0
      %p194 = por %p192, %p193
      %p195 = scmp.ne.s32.totalorder %s184, %s187
      %p196 = scmp.eq.s32.totalorder %s42, 3
      %p197 = por %p195, %p196
      %p198 = scmp.ne.s32.totalorder %s187, %s188
      %p199 = scmp.eq.s32.totalorder %s42, 0
      %p200 = por %p198, %p199
      %p201 = scmp.ne.s32.totalorder %s187, %s188
      %p202 = scmp.eq.s32.totalorder %s43, 3
      %p203 = por %p201, %p202
      %p205 = scmp.ne.s32.totalorder %s188, %s204
      %p206 = scmp.eq.s32.totalorder %s43, 0
      %p207 = por %p205, %p206
      %s208 = ssub.s32 %s44, %s56
      %p209 = scmp.eq.s32.totalorder %s208, 0
      %s211 = sadd.s32 %s210, 1
      %s212 = scalar_select %p209, %s210, %s211
      %p215 = pneg %p209
      %p216 = scmp.eq.s32.totalorder %s37, 3
      %p217 = por %p215, %p216
      %p218 = scmp.ne.s32.totalorder %s210, %s213
      %p219 = scmp.eq.s32.totalorder %s37, 0
      %p220 = por %p218, %p219
      %p221 = scmp.ne.s32.totalorder %s210, %s213
      %p222 = scmp.eq.s32.totalorder %s42, 3
      %p223 = por %p221, %p222
      %p224 = scmp.ne.s32.totalorder %s213, %s214
      %p225 = scmp.eq.s32.totalorder %s42, 0
      %p226 = por %p224, %p225
      %p227 = scmp.ne.s32.totalorder %s213, %s214
      %p228 = scmp.eq.s32.totalorder %s43, 3
      %p229 = por %p227, %p228
      %p231 = scmp.ne.s32.totalorder %s214, %s230
      %p232 = scmp.eq.s32.totalorder %s43, 0
      %p233 = por %p231, %p232
      %s234 = ssub.s32 %s44, %s56
      %p235 = scmp.eq.s32.totalorder %s234, 0
      %s237 = sadd.s32 %s236, 1
      %s238 = scalar_select %p235, %s236, %s237
      %p241 = pneg %p235
      %p242 = scmp.eq.s32.totalorder %s37, 3
      %p243 = por %p241, %p242
      %p244 = scmp.ne.s32.totalorder %s236, %s239
      %p245 = scmp.eq.s32.totalorder %s37, 0
      %p246 = por %p244, %p245
      %p247 = scmp.ne.s32.totalorder %s236, %s239
      %p248 = scmp.eq.s32.totalorder %s42, 3
      %p249 = por %p247, %p248
      %p250 = scmp.ne.s32.totalorder %s239, %s240
      %p251 = scmp.eq.s32.totalorder %s42, 0
      %p252 = por %p250, %p251
      %p253 = scmp.ne.s32.totalorder %s239, %s240
      %p254 = scmp.eq.s32.totalorder %s43, 3
      %p255 = por %p253, %p254
      %p257 = scmp.ne.s32.totalorder %s240, %s256
      %p258 = scmp.eq.s32.totalorder %s43, 0
      %p259 = por %p257, %p258
      %s260 = ssub.s32 %s44, %s56
      %p261 = scmp.eq.s32.totalorder %s260, 0
      %s263 = sadd.s32 %s262, 1
      %s264 = scalar_select %p261, %s262, %s263
      %p267 = pneg %p261
      %p268 = scmp.eq.s32.totalorder %s37, 3
      %p269 = por %p267, %p268
      %p270 = scmp.ne.s32.totalorder %s262, %s265
      %p271 = scmp.eq.s32.totalorder %s37, 0
      %p272 = por %p270, %p271
      %p273 = scmp.ne.s32.totalorder %s262, %s265
      %p274 = scmp.eq.s32.totalorder %s42, 3
      %p275 = por %p273, %p274
      %p276 = scmp.ne.s32.totalorder %s265, %s266
      %p277 = scmp.eq.s32.totalorder %s42, 0
      %p278 = por %p276, %p277
      %p279 = scmp.ne.s32.totalorder %s265, %s266
      %p280 = scmp.eq.s32.totalorder %s43, 3
      %p281 = por %p279, %p280
      %p283 = scmp.ne.s32.totalorder %s266, %s282
      %p284 = scmp.eq.s32.totalorder %s43, 0
      %p285 = por %p283, %p284
      %s286 = ssub.s32 %s44, %s56
      %p287 = scmp.eq.s32.totalorder %s286, 0
      %s289 = sadd.s32 %s288, 1
      %s290 = scalar_select %p287, %s288, %s289
      %p293 = pneg %p287
      %p294 = scmp.eq.s32.totalorder %s37, 3
      %p295 = por %p293, %p294
      %p296 = scmp.ne.s32.totalorder %s288, %s291
      %p297 = scmp.eq.s32.totalorder %s37, 0
      %p298 = por %p296, %p297
      %p299 = scmp.ne.s32.totalorder %s288, %s291
      %p300 = scmp.eq.s32.totalorder %s42, 3
      %p301 = por %p299, %p300
      %p302 = scmp.ne.s32.totalorder %s291, %s292
      %p303 = scmp.eq.s32.totalorder %s42, 0
      %p304 = por %p302, %p303
      %p305 = scmp.ne.s32.totalorder %s291, %s292
      %p306 = scmp.eq.s32.totalorder %s43, 3
      %p307 = por %p305, %p306
      %p309 = scmp.ne.s32.totalorder %s292, %s308
      %p310 = scmp.eq.s32.totalorder %s43, 0
      %p311 = por %p309, %p310
      %s312 = ssub.s32 %s44, %s56
      %p313 = scmp.eq.s32.totalorder %s312, 0
      %s315 = sadd.s32 %s314, 1
      %s316 = scalar_select %p313, %s314, %s315
      %p319 = pneg %p313
      %p320 = scmp.eq.s32.totalorder %s37, 3
      %p321 = por %p319, %p320
      %p322 = scmp.ne.s32.totalorder %s314, %s317
      %p323 = scmp.eq.s32.totalorder %s37, 0
      %p324 = por %p322, %p323
      %p325 = scmp.ne.s32.totalorder %s314, %s317
      %p326 = scmp.eq.s32.totalorder %s42, 3
      %p327 = por %p325, %p326
      %p328 = scmp.ne.s32.totalorder %s317, %s318
      %p329 = scmp.eq.s32.totalorder %s42, 0
      %p330 = por %p328, %p329
      %p331 = scmp.ne.s32.totalorder %s317, %s318
      %p332 = scmp.eq.s32.totalorder %s43, 3
      %p333 = por %p331, %p332
      %p335 = scmp.ne.s32.totalorder %s318, %s334
      %p336 = scmp.eq.s32.totalorder %s43, 0
      %p337 = por %p335, %p336
      %s338 = ssub.s32 %s44, %s56
      %p339 = scmp.eq.s32.totalorder %s338, 0
      %s341 = sadd.s32 %s340, 1
      %s342 = scalar_select %p339, %s340, %s341
      %p345 = pneg %p339
      %p346 = scmp.eq.s32.totalorder %s37, 3
      %p347 = por %p345, %p346
      %p348 = scmp.ne.s32.totalorder %s340, %s343
      %p349 = scmp.eq.s32.totalorder %s37, 0
      %p350 = por %p348, %p349
      %p351 = scmp.ne.s32.totalorder %s340, %s343
      %p352 = scmp.eq.s32.totalorder %s42, 3
      %p353 = por %p351, %p352
      %p354 = scmp.ne.s32.totalorder %s343, %s344
      %p355 = scmp.eq.s32.totalorder %s42, 0
      %p356 = por %p354, %p355
      %p357 = scmp.ne.s32.totalorder %s343, %s344
      %p358 = scmp.eq.s32.totalorder %s43, 3
      %p359 = por %p357, %p358
      %p361 = scmp.ne.s32.totalorder %s344, %s360
      %p362 = scmp.eq.s32.totalorder %s43, 0
      %p363 = por %p361, %p362
      %s364 = ssub.s32 %s44, %s56
      %p365 = scmp.eq.s32.totalorder %s364, 0
      %s367 = sadd.s32 %s366, 1
      %s368 = scalar_select %p365, %s366, %s367
      %p371 = pneg %p365
      %p372 = scmp.eq.s32.totalorder %s37, 3
      %p373 = por %p371, %p372
      %p374 = scmp.ne.s32.totalorder %s366, %s369
      %p375 = scmp.eq.s32.totalorder %s37, 0
      %p376 = por %p374, %p375
      %p377 = scmp.ne.s32.totalorder %s366, %s369
      %p378 = scmp.eq.s32.totalorder %s42, 3
      %p379 = por %p377, %p378
      %p380 = scmp.ne.s32.totalorder %s369, %s370
      %p381 = scmp.eq.s32.totalorder %s42, 0
      %p382 = por %p380, %p381
      %p383 = scmp.ne.s32.totalorder %s369, %s370
      %p384 = scmp.eq.s32.totalorder %s43, 3
      %p385 = por %p383, %p384
      %p387 = scmp.ne.s32.totalorder %s370, %s386
      %p388 = scmp.eq.s32.totalorder %s43, 0
      %p389 = por %p387, %p388
      %s390 = ssub.s32 %s44, %s56
      %p391 = scmp.eq.s32.totalorder %s390, 0
      %s393 = sadd.s32 %s392, 1
      %s394 = scalar_select %p391, %s392, %s393
      %p397 = pneg %p391
      %p398 = scmp.eq.s32.totalorder %s37, 3
      %p399 = por %p397, %p398
      %p400 = scmp.ne.s32.totalorder %s392, %s395
      %p401 = scmp.eq.s32.totalorder %s37, 0
      %p402 = por %p400, %p401
      %p403 = scmp.ne.s32.totalorder %s392, %s395
      %p404 = scmp.eq.s32.totalorder %s42, 3
      %p405 = por %p403, %p404
      %p406 = scmp.ne.s32.totalorder %s395, %s396
      %p407 = scmp.eq.s32.totalorder %s42, 0
      %p408 = por %p406, %p407
      %p409 = scmp.ne.s32.totalorder %s395, %s396
      %p410 = scmp.eq.s32.totalorder %s43, 3
      %p411 = por %p409, %p410
      %p413 = scmp.ne.s32.totalorder %s396, %s412
      %p414 = scmp.eq.s32.totalorder %s43, 0
      %p415 = por %p413, %p414
      %s417 = sadd.s32 %s416, 1
      %p420 = scmp.eq.s32.totalorder %s37, 3
      %p421 = scmp.ne.s32.totalorder %s416, %s418
      %p422 = scmp.eq.s32.totalorder %s37, 0
      %p423 = por %p421, %p422
      %p424 = scmp.ne.s32.totalorder %s416, %s418
      %p425 = scmp.eq.s32.totalorder %s42, 3
      %p426 = por %p424, %p425
      %p427 = scmp.ne.s32.totalorder %s418, %s419
      %p428 = scmp.eq.s32.totalorder %s42, 0
      %p429 = por %p427, %p428
      %p430 = scmp.ne.s32.totalorder %s418, %s419
      %p431 = scmp.eq.s32.totalorder %s43, 3
      %p432 = por %p430, %p431
      %p434 = scmp.ne.s32.totalorder %s419, %s433
      %p435 = scmp.eq.s32.totalorder %s43, 0
      %p436 = por %p434, %p435
      %p437 = scmp.le.s32.totalorder 1, %s37
      %p438 = scmp.lt.s32.totalorder %s37, 5
      %p439 = pnand %p437, %p438
      %p440 = pneg %p439
      // Predicated region
      $region9: #{conditional_prop_forward.1} parent=5 // pred_check
        _
      $region10: #{conditional_prop_forward.1} parent=5 // pred_check_branch
        %442 = sbr.rel (%p439) target = $region12
      $region11: #{conditional_prop_forward.1} parent=5 // pred_region
        %s443 = ssub.s32 %s37, 1
        // Predicated region
        $region13: #{conditional_prop_forward.1} parent=11 // pred_check
          %p444 = pneg %p70
        $region14: #{conditional_prop_forward.1} parent=11 // pred_check_branch
          %446 = sbr.rel (%p444) target = $region16
        $region15: #{conditional_prop_forward.1} parent=11 // pred_region
          %s448 = ssub.s32 1024, 1024
          %449 = vsyncadd [#allocation4], %s448
          %s450 = sshll.u32 [#allocation3], 4
          %s451 = int_to_ptr.vmem [resolvable:$true] %s450
          %456 = dma.hbm_to_vmem [thread:$0]  %s0, 1024, %s451, [#allocation4], 128, 128, 8
        $region16: #{conditional_prop_forward.1} parent=11 // pred_fallthru
          _
      $region12: #{conditional_prop_forward.1} parent=5 // pred_fallthru
        _
      %p457 = scmp.lt.s32.totalorder %s37, 4
      // Predicated region
      $region17: #{conditional_prop_forward.1} parent=5 // pred_check
        %p458 = pneg %p457
      $region18: #{conditional_prop_forward.1} parent=5 // pred_check_branch
        %460 = sbr.rel (%p458) target = $region20
      $region19: #{conditional_prop_forward.1} parent=5 // pred_region
        // Predicated region
        $region21: #{conditional_prop_forward.1} parent=19 // pred_check
          %p461 = pneg %p90
        $region22: #{conditional_prop_forward.1} parent=19 // pred_check_branch
          %463 = sbr.rel (%p461) target = $region24
        $region23: #{conditional_prop_forward.1} parent=19 // pred_region
          %s464 = smul.u32 16, %s45
          %p465 = scmp.lt.s32.totalorder %s464, 31
          %s466 = scalar_select %p465, %s464, 31
          %s467 = smul.addr %s466, 2
          %s468 = smul.addr %s467, 8
          %s469 = scalar_lea.vmem %s1, %s468
          %s470 = smul.u32 16, %s45
        $region24: #{conditional_prop_forward.1} parent=19 // pred_fallthru
          _
        // Predicated region
        $region25: #{conditional_prop_forward.1} parent=19 // pred_check
          %p471 = pneg %p116
        $region26: #{conditional_prop_forward.1} parent=19 // pred_check_branch
          %473 = sbr.rel (%p471) target = $region28
        $region27: #{conditional_prop_forward.1} parent=19 // pred_region
          %s474 = smul.u32 16, %s45
          %p475 = scmp.lt.s32.totalorder %s474, 31
          %s476 = scalar_select %p475, %s474, 31
          %s477 = smul.addr %s476, 4
          %s478 = scalar_lea.vmem %s2, %s477
          %s479 = smul.u32 16, %s45
        $region28: #{conditional_prop_forward.1} parent=19 // pred_fallthru
          _
        // Predicated region
        $region29: #{conditional_prop_forward.1} parent=19 // pred_check
          %p480 = pneg %p142
        $region30: #{conditional_prop_forward.1} parent=19 // pred_check_branch
          %482 = sbr.rel (%p480) target = $region32
        $region31: #{conditional_prop_forward.1} parent=19 // pred_region
          %s483 = smul.u32 16, %s45
          %p484 = scmp.lt.s32.totalorder %s483, 31
          %s485 = scalar_select %p484, %s483, 31
          %s486 = smul.addr %s485, 4
          %s487 = scalar_lea.vmem %s3, %s486
          %s488 = smul.u32 16, %s45
        $region32: #{conditional_prop_forward.1} parent=19 // pred_fallthru
          _
        // Predicated region
        $region33: #{conditional_prop_forward.1} parent=19 // pred_check
          %p489 = pneg %p168
        $region34: #{conditional_prop_forward.1} parent=19 // pred_check_branch
          %491 = sbr.rel (%p489) target = $region36
        $region35: #{conditional_prop_forward.1} parent=19 // pred_region
          %s492 = sand.u32 %s37, 1
          %s493 = scalar_lea.sflag [#allocation7], %s492
          %s494 = sand.u32 %s158, 1
          %s495 = smul.addr %s494, 2744
          %s496 = scalar_lea.vmem [#allocation6], %s495
          %s498 = ssub.s32 43904, 43904
          %499 = vsyncadd %s493, %s498
          %s500 = smul.addr %s44, 343
          %s501 = smul.addr %s500, 128
          %s502 = scalar_lea.hbm %s4, %s501
          %s503 = sshll.u32 %s496, 4
          %s504 = int_to_ptr.vmem [resolvable:$true] %s503
          %509 = dma.hbm_to_vmem [thread:$0]  %s502, 43904, %s504, %s493, 896, 896, 56
        $region36: #{conditional_prop_forward.1} parent=19 // pred_fallthru
          _
        // Predicated region
        $region37: #{conditional_prop_forward.1} parent=19 // pred_check
          %p510 = pneg %p194
        $region38: #{conditional_prop_forward.1} parent=19 // pred_check_branch
          %512 = sbr.rel (%p510) target = $region40
        $region39: #{conditional_prop_forward.1} parent=19 // pred_region
          %s513 = sand.u32 %s37, 1
          %s514 = scalar_lea.sflag [#allocation7], %s513
          %s515 = sand.u32 %s184, 1
          %s516 = smul.addr %s515, 7
          %s517 = scalar_lea.vmem [#allocation8], %s516
          %s519 = ssub.s32 112, 112
          %520 = vsyncadd %s514, %s519
          %s521 = smul.addr %s44, 7
          %s522 = smul.addr %s521, 16
          %s523 = scalar_lea.hbm %s5, %s522
          %s525 = sshll.u32 %s517, 4
          %s526 = int_to_ptr.vmem [resolvable:$true] %s525
          %528 = dma.hbm_to_vmem [thread:$0]  %s523, 112, %s526, %s514
        $region40: #{conditional_prop_forward.1} parent=19 // pred_fallthru
          _
        // Predicated region
        $region41: #{conditional_prop_forward.1} parent=19 // pred_check
          %p529 = pneg %p220
        $region42: #{conditional_prop_forward.1} parent=19 // pred_check_branch
          %531 = sbr.rel (%p529) target = $region44
        $region43: #{conditional_prop_forward.1} parent=19 // pred_region
          %s532 = sand.u32 %s37, 1
          %s533 = scalar_lea.sflag [#allocation10], %s532
          %s534 = sand.u32 %s210, 1
          %s535 = smul.addr %s534, 784
          %s536 = scalar_lea.vmem [#allocation9], %s535
          %s538 = ssub.s32 12544, 12544
          %539 = vsyncadd %s533, %s538
          %s540 = smul.addr %s44, 98
          %s541 = smul.addr %s540, 128
          %s542 = scalar_lea.hbm %s6, %s541
          %s543 = sshll.u32 %s536, 4
          %s544 = int_to_ptr.vmem [resolvable:$true] %s543
          %549 = dma.hbm_to_vmem [thread:$0]  %s542, 12544, %s544, %s533, 128, 128, 8
        $region44: #{conditional_prop_forward.1} parent=19 // pred_fallthru
          _
        // Predicated region
        $region45: #{conditional_prop_forward.1} parent=19 // pred_check
          %p550 = pneg %p246
        $region46: #{conditional_prop_forward.1} parent=19 // pred_check_branch
          %552 = sbr.rel (%p550) target = $region48
        $region47: #{conditional_prop_forward.1} parent=19 // pred_region
          %s553 = sand.u32 %s37, 1
          %s554 = scalar_lea.sflag [#allocation10], %s553
          %s555 = sand.u32 %s236, 1
          %s556 = scalar_lea.vmem [#allocation11], %s555
          %s558 = ssub.s32 16, 16
          %559 = vsyncadd %s554, %s558
          %s560 = smul.addr %s44, 16
          %s561 = scalar_lea.hbm %s7, %s560
          %s563 = sshll.u32 %s556, 4
          %s564 = int_to_ptr.vmem [resolvable:$true] %s563
          %566 = dma.hbm_to_vmem [thread:$0]  %s561, 16, %s564, %s554
        $region48: #{conditional_prop_forward.1} parent=19 // pred_fallthru
          _
        // Predicated region
        $region49: #{conditional_prop_forward.1} parent=19 // pred_check
          %p567 = pneg %p272
        $region50: #{conditional_prop_forward.1} parent=19 // pred_check_branch
          %569 = sbr.rel (%p567) target = $region52
        $region51: #{conditional_prop_forward.1} parent=19 // pred_region
          %s570 = sand.u32 %s37, 1
          %s571 = scalar_lea.sflag [#allocation13], %s570
          %s572 = sand.u32 %s262, 1
          %s573 = smul.addr %s572, 512
          %s574 = scalar_lea.vmem [#allocation12], %s573
          %s576 = ssub.s32 8192, 8192
          %577 = vsyncadd %s571, %s576
          %s578 = smul.addr %s44, 64
          %s579 = smul.addr %s578, 128
          %s580 = scalar_lea.hbm %s8, %s579
          %s581 = sshll.u32 %s574, 4
          %s582 = int_to_ptr.vmem [resolvable:$true] %s581
          %587 = dma.hbm_to_vmem [thread:$0]  %s580, 8192, %s582, %s571, 256, 256, 16
        $region52: #{conditional_prop_forward.1} parent=19 // pred_fallthru
          _
        // Predicated region
        $region53: #{conditional_prop_forward.1} parent=19 // pred_check
          %p588 = pneg %p298
        $region54: #{conditional_prop_forward.1} parent=19 // pred_check_branch
          %590 = sbr.rel (%p588) target = $region56
        $region55: #{conditional_prop_forward.1} parent=19 // pred_region
          %s591 = sand.u32 %s37, 1
          %s592 = scalar_lea.sflag [#allocation13], %s591
          %s593 = sand.u32 %s288, 1
          %s594 = smul.addr %s593, 2
          %s595 = scalar_lea.vmem [#allocation14], %s594
          %s597 = ssub.s32 32, 32
          %598 = vsyncadd %s592, %s597
          %s599 = smul.addr %s44, 2
          %s600 = smul.addr %s599, 16
          %s601 = scalar_lea.hbm %s9, %s600
          %s603 = sshll.u32 %s595, 4
          %s604 = int_to_ptr.vmem [resolvable:$true] %s603
          %606 = dma.hbm_to_vmem [thread:$0]  %s601, 32, %s604, %s592
        $region56: #{conditional_prop_forward.1} parent=19 // pred_fallthru
          _
        // Predicated region
        $region57: #{conditional_prop_forward.1} parent=19 // pred_check
          %p607 = pneg %p324
        $region58: #{conditional_prop_forward.1} parent=19 // pred_check_branch
          %609 = sbr.rel (%p607) target = $region60
        $region59: #{conditional_prop_forward.1} parent=19 // pred_region
          %s610 = sand.u32 %s37, 1
          %s611 = scalar_lea.sflag [#allocation16], %s610
          %s612 = sand.u32 %s314, 1
          %s613 = smul.addr %s612, 128
          %s614 = scalar_lea.vmem [#allocation15], %s613
          %s616 = ssub.s32 2048, 2048
          %617 = vsyncadd %s611, %s616
          %s618 = smul.addr %s44, 16
          %s619 = smul.addr %s618, 128
          %s620 = scalar_lea.hbm %s10, %s619
          %s621 = sshll.u32 %s614, 4
          %s622 = int_to_ptr.vmem [resolvable:$true] %s621
          %627 = dma.hbm_to_vmem [thread:$0]  %s620, 2048, %s622, %s611, 128, 128, 8
        $region60: #{conditional_prop_forward.1} parent=19 // pred_fallthru
          _
        // Predicated region
        $region61: #{conditional_prop_forward.1} parent=19 // pred_check
          %p628 = pneg %p350
        $region62: #{conditional_prop_forward.1} parent=19 // pred_check_branch
          %630 = sbr.rel (%p628) target = $region64
        $region63: #{conditional_prop_forward.1} parent=19 // pred_region
          %s631 = sand.u32 %s37, 1
          %s632 = scalar_lea.sflag [#allocation16], %s631
          %s633 = sand.u32 %s340, 1
          %s634 = scalar_lea.vmem [#allocation17], %s633
          %s636 = ssub.s32 16, 16
          %637 = vsyncadd %s632, %s636
          %s638 = smul.addr %s44, 16
          %s639 = scalar_lea.hbm %s11, %s638
          %s641 = sshll.u32 %s634, 4
          %s642 = int_to_ptr.vmem [resolvable:$true] %s641
          %644 = dma.hbm_to_vmem [thread:$0]  %s639, 16, %s642, %s632
        $region64: #{conditional_prop_forward.1} parent=19 // pred_fallthru
          _
        // Predicated region
        $region65: #{conditional_prop_forward.1} parent=19 // pred_check
          %p645 = pneg %p376
        $region66: #{conditional_prop_forward.1} parent=19 // pred_check_branch
          %647 = sbr.rel (%p645) target = $region68
        $region67: #{conditional_prop_forward.1} parent=19 // pred_region
          %s648 = sand.u32 %s37, 1
          %s649 = scalar_lea.sflag [#allocation19], %s648
          %s650 = sand.u32 %s366, 1
          %s651 = smul.addr %s650, 128
          %s652 = scalar_lea.vmem [#allocation18], %s651
          %s654 = ssub.s32 2048, 2048
          %655 = vsyncadd %s649, %s654
          %s656 = smul.addr %s44, 16
          %s657 = smul.addr %s656, 128
          %s658 = scalar_lea.hbm %s12, %s657
          %s659 = sshll.u32 %s652, 4
          %s660 = int_to_ptr.vmem [resolvable:$true] %s659
          %665 = dma.hbm_to_vmem [thread:$0]  %s658, 2048, %s660, %s649, 128, 128, 8
        $region68: #{conditional_prop_forward.1} parent=19 // pred_fallthru
          _
        // Predicated region
        $region69: #{conditional_prop_forward.1} parent=19 // pred_check
          %p666 = pneg %p402
        $region70: #{conditional_prop_forward.1} parent=19 // pred_check_branch
          %668 = sbr.rel (%p666) target = $region72
        $region71: #{conditional_prop_forward.1} parent=19 // pred_region
          %s669 = sand.u32 %s37, 1
          %s670 = scalar_lea.sflag [#allocation19], %s669
          %s671 = sand.u32 %s392, 1
          %s672 = scalar_lea.vmem [#allocation20], %s671
          %s674 = ssub.s32 16, 16
          %675 = vsyncadd %s670, %s674
          %s676 = smul.addr %s44, 16
          %s677 = scalar_lea.hbm %s13, %s676
          %s679 = sshll.u32 %s672, 4
          %s680 = int_to_ptr.vmem [resolvable:$true] %s679
          %682 = dma.hbm_to_vmem [thread:$0]  %s677, 16, %s680, %s670
        $region72: #{conditional_prop_forward.1} parent=19 // pred_fallthru
          _
      $region20: #{conditional_prop_forward.1} parent=5 // pred_fallthru
        _
      %p683 = scmp.le.s32.totalorder 1, %s37
      %p684 = scmp.lt.s32.totalorder %s37, 5
      %p685 = pnand %p683, %p684
      %p686 = pneg %p685
      // Predicated region
      $region73: #{conditional_prop_forward.1} parent=5 // pred_check
        _
      $region74: #{conditional_prop_forward.1} parent=5 // pred_check_branch
        %688 = sbr.rel (%p685) target = $region76
      $region75: #{conditional_prop_forward.1} parent=5 // pred_region
        %s689 = ssub.s32 %s37, 1
        // Predicated region
        $region77: #{conditional_prop_forward.1} parent=75 // pred_check
          %p690 = pneg %p70
        $region78: #{conditional_prop_forward.1} parent=75 // pred_check_branch
          %692 = sbr.rel (%p690) target = $region80
        $region79: #{conditional_prop_forward.1} parent=75 // pred_region
          %693 = dma.done [#allocation4], 1024
        $region80: #{conditional_prop_forward.1} parent=75 // pred_fallthru
          _
        %s694 = sand.u32 %s42, 1
        %s695 = scalar_lea.sflag [#allocation7], %s694
        %s696 = sand.u32 %s161, 1
        %s697 = smul.addr %s696, 2744
        %s698 = scalar_lea.vmem [#allocation6], %s697
        // Predicated region
        $region81: #{conditional_prop_forward.1} parent=75 // pred_check
          %p699 = pneg %p174
        $region82: #{conditional_prop_forward.1} parent=75 // pred_check_branch
          %701 = sbr.rel (%p699) target = $region84
        $region83: #{conditional_prop_forward.1} parent=75 // pred_region
          %702 = dma.done %s695, 43904
        $region84: #{conditional_prop_forward.1} parent=75 // pred_fallthru
          _
        %s703 = sand.u32 %s42, 1
        %s704 = scalar_lea.sflag [#allocation7], %s703
        %s705 = sand.u32 %s187, 1
        %s706 = smul.addr %s705, 7
        %s707 = scalar_lea.vmem [#allocation8], %s706
        // Predicated region
        $region85: #{conditional_prop_forward.1} parent=75 // pred_check
          %p708 = pneg %p200
        $region86: #{conditional_prop_forward.1} parent=75 // pred_check_branch
          %710 = sbr.rel (%p708) target = $region88
        $region87: #{conditional_prop_forward.1} parent=75 // pred_region
          %711 = dma.done %s704, 112
        $region88: #{conditional_prop_forward.1} parent=75 // pred_fallthru
          _
        %s712 = sand.u32 %s42, 1
        %s713 = scalar_lea.sflag [#allocation10], %s712
        %s714 = sand.u32 %s213, 1
        %s715 = smul.addr %s714, 784
        %s716 = scalar_lea.vmem [#allocation9], %s715
        // Predicated region
        $region89: #{conditional_prop_forward.1} parent=75 // pred_check
          %p717 = pneg %p226
        $region90: #{conditional_prop_forward.1} parent=75 // pred_check_branch
          %719 = sbr.rel (%p717) target = $region92
        $region91: #{conditional_prop_forward.1} parent=75 // pred_region
          %720 = dma.done %s713, 12544
        $region92: #{conditional_prop_forward.1} parent=75 // pred_fallthru
          _
        %s721 = sand.u32 %s42, 1
        %s722 = scalar_lea.sflag [#allocation10], %s721
        %s723 = sand.u32 %s239, 1
        %s724 = scalar_lea.vmem [#allocation11], %s723
        // Predicated region
        $region93: #{conditional_prop_forward.1} parent=75 // pred_check
          %p725 = pneg %p252
        $region94: #{conditional_prop_forward.1} parent=75 // pred_check_branch
          %727 = sbr.rel (%p725) target = $region96
        $region95: #{conditional_prop_forward.1} parent=75 // pred_region
          %728 = dma.done %s722, 16
        $region96: #{conditional_prop_forward.1} parent=75 // pred_fallthru
          _
        %s729 = sand.u32 %s42, 1
        %s730 = scalar_lea.sflag [#allocation13], %s729
        %s731 = sand.u32 %s265, 1
        %s732 = smul.addr %s731, 512
        %s733 = scalar_lea.vmem [#allocation12], %s732
        // Predicated region
        $region97: #{conditional_prop_forward.1} parent=75 // pred_check
          %p734 = pneg %p278
        $region98: #{conditional_prop_forward.1} parent=75 // pred_check_branch
          %736 = sbr.rel (%p734) target = $region100
        $region99: #{conditional_prop_forward.1} parent=75 // pred_region
          %737 = dma.done %s730, 8192
        $region100: #{conditional_prop_forward.1} parent=75 // pred_fallthru
          _
        %s738 = sand.u32 %s42, 1
        %s739 = scalar_lea.sflag [#allocation13], %s738
        %s740 = sand.u32 %s291, 1
        %s741 = smul.addr %s740, 2
        %s742 = scalar_lea.vmem [#allocation14], %s741
        // Predicated region
        $region101: #{conditional_prop_forward.1} parent=75 // pred_check
          %p743 = pneg %p304
        $region102: #{conditional_prop_forward.1} parent=75 // pred_check_branch
          %745 = sbr.rel (%p743) target = $region104
        $region103: #{conditional_prop_forward.1} parent=75 // pred_region
          %746 = dma.done %s739, 32
        $region104: #{conditional_prop_forward.1} parent=75 // pred_fallthru
          _
        %s747 = sand.u32 %s42, 1
        %s748 = scalar_lea.sflag [#allocation16], %s747
        %s749 = sand.u32 %s317, 1
        %s750 = smul.addr %s749, 128
        %s751 = scalar_lea.vmem [#allocation15], %s750
        // Predicated region
        $region105: #{conditional_prop_forward.1} parent=75 // pred_check
          %p752 = pneg %p330
        $region106: #{conditional_prop_forward.1} parent=75 // pred_check_branch
          %754 = sbr.rel (%p752) target = $region108
        $region107: #{conditional_prop_forward.1} parent=75 // pred_region
          %755 = dma.done %s748, 2048
        $region108: #{conditional_prop_forward.1} parent=75 // pred_fallthru
          _
        %s756 = sand.u32 %s42, 1
        %s757 = scalar_lea.sflag [#allocation16], %s756
        %s758 = sand.u32 %s343, 1
        %s759 = scalar_lea.vmem [#allocation17], %s758
        // Predicated region
        $region109: #{conditional_prop_forward.1} parent=75 // pred_check
          %p760 = pneg %p356
        $region110: #{conditional_prop_forward.1} parent=75 // pred_check_branch
          %762 = sbr.rel (%p760) target = $region112
        $region111: #{conditional_prop_forward.1} parent=75 // pred_region
          %763 = dma.done %s757, 16
        $region112: #{conditional_prop_forward.1} parent=75 // pred_fallthru
          _
        %s764 = sand.u32 %s42, 1
        %s765 = scalar_lea.sflag [#allocation19], %s764
        %s766 = sand.u32 %s369, 1
        %s767 = smul.addr %s766, 128
        %s768 = scalar_lea.vmem [#allocation18], %s767
        // Predicated region
        $region113: #{conditional_prop_forward.1} parent=75 // pred_check
          %p769 = pneg %p382
        $region114: #{conditional_prop_forward.1} parent=75 // pred_check_branch
          %771 = sbr.rel (%p769) target = $region116
        $region115: #{conditional_prop_forward.1} parent=75 // pred_region
          %772 = dma.done %s765, 2048
        $region116: #{conditional_prop_forward.1} parent=75 // pred_fallthru
          _
        %s773 = sand.u32 %s42, 1
        %s774 = scalar_lea.sflag [#allocation19], %s773
        %s775 = sand.u32 %s395, 1
        %s776 = scalar_lea.vmem [#allocation20], %s775
        // Predicated region
        $region117: #{conditional_prop_forward.1} parent=75 // pred_check
          %p777 = pneg %p408
        $region118: #{conditional_prop_forward.1} parent=75 // pred_check_branch
          %779 = sbr.rel (%p777) target = $region120
        $region119: #{conditional_prop_forward.1} parent=75 // pred_region
          %780 = dma.done %s774, 16
        $region120: #{conditional_prop_forward.1} parent=75 // pred_fallthru
          _
        %p781 = pneg %p70
        %p782 = pneg %p67
        %s783 = smul.u32 16, %s47
        %p784 = scmp.lt.s32.totalorder %s783, 31
        %s785 = scalar_select %p784, %s783, 31
        %s786 = smul.addr %s785, 2
        %s787 = smul.addr %s786, 8
        %s788 = scalar_lea.vmem %s1, %s787
        %p789 = pneg %p96
        %p790 = pneg %p93
        %s791 = smul.u32 16, %s47
        %p792 = scmp.lt.s32.totalorder %s791, 31
        %s793 = scalar_select %p792, %s791, 31
        %s794 = smul.addr %s793, 4
        %s795 = scalar_lea.vmem %s2, %s794
        %p796 = pneg %p122
        %p797 = pneg %p119
        %s798 = smul.u32 16, %s47
        %p799 = scmp.lt.s32.totalorder %s798, 31
        %s800 = scalar_select %p799, %s798, 31
        %s801 = smul.addr %s800, 4
        %s802 = scalar_lea.vmem %s3, %s801
        %p803 = pneg %p148
        %p804 = pneg %p145
        %s805 = sand.u32 %s42, 1
        %s806 = scalar_lea.sflag [#allocation7], %s805
        %s807 = sand.u32 %s161, 1
        %s808 = smul.addr %s807, 2744
        %s809 = scalar_lea.vmem [#allocation6], %s808
        %p810 = pneg %p174
        %p811 = pneg %p171
        %s812 = sand.u32 %s42, 1
        %s813 = scalar_lea.sflag [#allocation7], %s812
        %s814 = sand.u32 %s187, 1
        %s815 = smul.addr %s814, 7
        %s816 = scalar_lea.vmem [#allocation8], %s815
        %p817 = pneg %p200
        %p818 = pneg %p197
        %s819 = sand.u32 %s42, 1
        %s820 = scalar_lea.sflag [#allocation10], %s819
        %s821 = sand.u32 %s213, 1
        %s822 = smul.addr %s821, 784
        %s823 = scalar_lea.vmem [#allocation9], %s822
        %p824 = pneg %p226
        %p825 = pneg %p223
        %s826 = sand.u32 %s42, 1
        %s827 = scalar_lea.sflag [#allocation10], %s826
        %s828 = sand.u32 %s239, 1
        %s829 = scalar_lea.vmem [#allocation11], %s828
        %p830 = pneg %p252
        %p831 = pneg %p249
        %s832 = sand.u32 %s42, 1
        %s833 = scalar_lea.sflag [#allocation13], %s832
        %s834 = sand.u32 %s265, 1
        %s835 = smul.addr %s834, 512
        %s836 = scalar_lea.vmem [#allocation12], %s835
        %p837 = pneg %p278
        %p838 = pneg %p275
        %s839 = sand.u32 %s42, 1
        %s840 = scalar_lea.sflag [#allocation13], %s839
        %s841 = sand.u32 %s291, 1
        %s842 = smul.addr %s841, 2
        %s843 = scalar_lea.vmem [#allocation14], %s842
        %p844 = pneg %p304
        %p845 = pneg %p301
        %s846 = sand.u32 %s42, 1
        %s847 = scalar_lea.sflag [#allocation16], %s846
        %s848 = sand.u32 %s317, 1
        %s849 = smul.addr %s848, 128
        %s850 = scalar_lea.vmem [#allocation15], %s849
        %p851 = pneg %p330
        %p852 = pneg %p327
        %s853 = sand.u32 %s42, 1
        %s854 = scalar_lea.sflag [#allocation16], %s853
        %s855 = sand.u32 %s343, 1
        %s856 = scalar_lea.vmem [#allocation17], %s855
        %p857 = pneg %p356
        %p858 = pneg %p353
        %s859 = sand.u32 %s42, 1
        %s860 = scalar_lea.sflag [#allocation19], %s859
        %s861 = sand.u32 %s369, 1
        %s862 = smul.addr %s861, 128
        %s863 = scalar_lea.vmem [#allocation18], %s862
        %p864 = pneg %p382
        %p865 = pneg %p379
        %s866 = sand.u32 %s42, 1
        %s867 = scalar_lea.sflag [#allocation19], %s866
        %s868 = sand.u32 %s395, 1
        %s869 = scalar_lea.vmem [#allocation20], %s868
        %p870 = pneg %p408
        %p871 = pneg %p405
        %p872 = pneg %p429
        %p873 = pneg %p426
        %s874 = smul.u32 16, %s47
        %p875 = scmp.lt.s32.totalorder %s874, 31
        %s876 = scalar_select %p875, %s874, 31
        %s877 = smul.addr %s876, 2
        %s878 = smul.addr %s877, 8
        %s879 = scalar_lea.vmem %s1, %s878
        %s880 = smul.u32 16, %s47
        %s881 = smul.u32 16, %s47
        %p882 = scmp.lt.s32.totalorder %s881, 31
        %s883 = scalar_select %p882, %s881, 31
        %s884 = smul.addr %s883, 4
        %s885 = scalar_lea.vmem %s2, %s884
        %s886 = smul.u32 16, %s47
        %s887 = smul.u32 16, %s47
        %p888 = scmp.lt.s32.totalorder %s887, 31
        %s889 = scalar_select %p888, %s887, 31
        %s890 = smul.addr %s889, 4
        %s891 = scalar_lea.vmem %s3, %s890
        %s892 = smul.u32 16, %s47
        %p893 = scmp.eq.s32.totalorder %s46, 0
        %p894 = scmp.eq.s32.totalorder %s47, 0
        %p895 = pnand %p893, %p894
        %p896 = pneg %p895
        // Predicated region
        $region121: #{conditional_prop_forward.1} parent=75 // pred_check
          _
        $region122: #{conditional_prop_forward.1} parent=75 // pred_check_branch
          %898 = sbr.rel (%p895) target = $region124
        $region123: #{conditional_prop_forward.1} parent=75 // pred_region
          %v899 = vld [vmem:[#allocation3] sm:$0xff]
          %v900 = vld [vmem:[#allocation3 + $0x8] sm:$0xff]
          %v901 = vld [vmem:[#allocation3 + $0x10] sm:$0xff]
          %v902 = vld [vmem:[#allocation3 + $0x18] sm:$0xff]
          %v903 = vld [vmem:[#allocation3 + $0x20] sm:$0xff]
          %v904 = vld [vmem:[#allocation3 + $0x28] sm:$0xff]
          %v905 = vld [vmem:[#allocation3 + $0x30] sm:$0xff]
          %v906 = vld [vmem:[#allocation3 + $0x38] sm:$0xff]
          %907 = vst [vmem:[#allocation21] sm:$0xff] %v899
          %908 = vst [vmem:[#allocation21 + $0x8] sm:$0xff] %v900
          %909 = vst [vmem:[#allocation21 + $0x10] sm:$0xff] %v901
          %910 = vst [vmem:[#allocation21 + $0x18] sm:$0xff] %v902
          %911 = vst [vmem:[#allocation21 + $0x20] sm:$0xff] %v903
          %912 = vst [vmem:[#allocation21 + $0x28] sm:$0xff] %v904
          %913 = vst [vmem:[#allocation21 + $0x30] sm:$0xff] %v905
          %914 = vst [vmem:[#allocation21 + $0x38] sm:$0xff] %v906
        $region124: #{conditional_prop_forward.1} parent=75 // pred_fallthru
          _
        // Predicated region
        $region125: #{conditional_prop_forward.1} parent=75 // pred_check
          %p915 = pneg %p894
        $region126: #{conditional_prop_forward.1} parent=75 // pred_check_branch
          %917 = sbr.rel (%p915) target = $region128
        $region127: #{conditional_prop_forward.1} parent=75 // pred_region
          %918 = vst [vmem:[#allocation2] sm:$0xff] 0.0
          %919 = vst [vmem:[#allocation2 + $0x8] sm:$0xff] 0.0
          %920 = vst [vmem:[#allocation2 + $0x10] sm:$0xff] 0.0
          %921 = vst [vmem:[#allocation2 + $0x18] sm:$0xff] 0.0
          %922 = vst [vmem:[#allocation2 + $0x20] sm:$0xff] 0.0
          %923 = vst [vmem:[#allocation2 + $0x28] sm:$0xff] 0.0
          %924 = vst [vmem:[#allocation2 + $0x30] sm:$0xff] 0.0
          %925 = vst [vmem:[#allocation2 + $0x38] sm:$0xff] 0.0
        $region128: #{conditional_prop_forward.1} parent=75 // pred_fallthru
          _
        %v926 = vld [vmem:[#allocation21] sm:$0xff]
        %v927 = vld [vmem:[#allocation21 + $0x8] sm:$0xff]
        %v928 = vld [vmem:[#allocation21 + $0x10] sm:$0xff]
        %v929 = vld [vmem:[#allocation21 + $0x18] sm:$0xff]
        %v930 = vld [vmem:[#allocation21 + $0x20] sm:$0xff]
        %v931 = vld [vmem:[#allocation21 + $0x28] sm:$0xff]
        %v932 = vld [vmem:[#allocation21 + $0x30] sm:$0xff]
        %v933 = vld [vmem:[#allocation21 + $0x38] sm:$0xff]
        %v934 = vld [vmem:[%s885] sm:$0xf]
        %v935 = vld [vmem:[%s885 + $0x4] sm:$0xf]
        %v936 = vld [vmem:[%s885 + $0x8] sm:$0xf]
        %v937 = vld [vmem:[%s885 + $0xc] sm:$0xf]
        %v938 = vld [vmem:[%s885 + $0x10] sm:$0xf]
        %v939 = vld [vmem:[%s885 + $0x14] sm:$0xf]
        %v940 = vld [vmem:[%s885 + $0x18] sm:$0xf]
        %v941 = vld [vmem:[%s885 + $0x1c] sm:$0xf]
        %v942 = vld [vmem:[%s885 + $0x20] sm:$0xf]
        %v943 = vld [vmem:[%s885 + $0x24] sm:$0xf]
        %v944 = vld [vmem:[%s885 + $0x28] sm:$0xf]
        %v945 = vld [vmem:[%s885 + $0x2c] sm:$0xf]
        %v946 = vld [vmem:[%s885 + $0x30] sm:$0xf]
        %v947 = vld [vmem:[%s885 + $0x34] sm:$0xf]
        %v948 = vld [vmem:[%s885 + $0x38] sm:$0xf]
        %v949 = vld [vmem:[%s885 + $0x3c] sm:$0xf]
        %v950 = vunpack.c.l.bf16 %v934
        %v951 = vunpack.c.l.bf16 %v935
        %v952 = vunpack.c.l.bf16 %v936
        %v953 = vunpack.c.l.bf16 %v937
        %v954 = vunpack.c.l.bf16 %v938
        %v955 = vunpack.c.l.bf16 %v939
        %v956 = vunpack.c.l.bf16 %v940
        %v957 = vunpack.c.l.bf16 %v941
        %v958 = vunpack.c.l.bf16 %v942
        %v959 = vunpack.c.l.bf16 %v943
        %v960 = vunpack.c.l.bf16 %v944
        %v961 = vunpack.c.l.bf16 %v945
        %v962 = vunpack.c.l.bf16 %v946
        %v963 = vunpack.c.l.bf16 %v947
        %v964 = vunpack.c.l.bf16 %v948
        %v965 = vunpack.c.l.bf16 %v949
        %v966 = vld [vmem:[%s891] sm:$0xf]
        %v967 = vld [vmem:[%s891 + $0x4] sm:$0xf]
        %v968 = vld [vmem:[%s891 + $0x8] sm:$0xf]
        %v969 = vld [vmem:[%s891 + $0xc] sm:$0xf]
        %v970 = vld [vmem:[%s891 + $0x10] sm:$0xf]
        %v971 = vld [vmem:[%s891 + $0x14] sm:$0xf]
        %v972 = vld [vmem:[%s891 + $0x18] sm:$0xf]
        %v973 = vld [vmem:[%s891 + $0x1c] sm:$0xf]
        %v974 = vld [vmem:[%s891 + $0x20] sm:$0xf]
        %v975 = vld [vmem:[%s891 + $0x24] sm:$0xf]
        %v976 = vld [vmem:[%s891 + $0x28] sm:$0xf]
        %v977 = vld [vmem:[%s891 + $0x2c] sm:$0xf]
        %v978 = vld [vmem:[%s891 + $0x30] sm:$0xf]
        %v979 = vld [vmem:[%s891 + $0x34] sm:$0xf]
        %v980 = vld [vmem:[%s891 + $0x38] sm:$0xf]
        %v981 = vld [vmem:[%s891 + $0x3c] sm:$0xf]
        %v982 = vunpack.c.l.bf16 %v966
        %v983 = vunpack.c.l.bf16 %v967
        %v984 = vunpack.c.l.bf16 %v968
        %v985 = vunpack.c.l.bf16 %v969
        %v986 = vunpack.c.l.bf16 %v970
        %v987 = vunpack.c.l.bf16 %v971
        %v988 = vunpack.c.l.bf16 %v972
        %v989 = vunpack.c.l.bf16 %v973
        %v990 = vunpack.c.l.bf16 %v974
        %v991 = vunpack.c.l.bf16 %v975
        %v992 = vunpack.c.l.bf16 %v976
        %v993 = vunpack.c.l.bf16 %v977
        %v994 = vunpack.c.l.bf16 %v978
        %v995 = vunpack.c.l.bf16 %v979
        %v996 = vunpack.c.l.bf16 %v980
        %v997 = vunpack.c.l.bf16 %v981
        %vm998 = vcmask 523264
        %v1000 = vsel %vm998, %v982, 0
        %v1003 = vsel %vm998, %v983, 0
        %v1006 = vsel %vm998, %v984, 0
        %v1009 = vsel %vm998, %v985, 0
        %v1012 = vsel %vm998, %v986, 0
        %v1015 = vsel %vm998, %v987, 0
        %v1018 = vsel %vm998, %v988, 0
        %v1021 = vsel %vm998, %v989, 0
        %v1024 = vsel %vm998, %v990, 0
        %v1027 = vsel %vm998, %v991, 0
        %v1030 = vsel %vm998, %v992, 0
        %v1033 = vsel %vm998, %v993, 0
        %v1036 = vsel %vm998, %v994, 0
        %v1039 = vsel %vm998, %v995, 0
        %v1042 = vsel %vm998, %v996, 0
        %v1045 = vsel %vm998, %v997, 0
        %1047 = vmatprep.subr.mxu0 0.0
        %1048 = vmatpush1.msra.mxu0 %v926
        %1049 = vmatprep.subr.mxu0 0.0
        %1050 = vmatpush1.msra.mxu0 %v927
        %1051 = vmatprep.subr.mxu0 0.0
        %1052 = vmatpush1.msra.mxu0 %v928
        %1053 = vmatprep.subr.mxu0 0.0
        %1054 = vmatpush1.msra.mxu0 %v929
        %1055 = vmatprep.subr.mxu0 0.0
        %1056 = vmatpush1.msra.mxu0 %v930
        %1057 = vmatprep.subr.mxu0 0.0
        %1058 = vmatpush1.msra.mxu0 %v931
        %1059 = vmatprep.subr.mxu0 0.0
        %1060 = vmatpush1.msra.mxu0 %v932
        %1061 = vmatprep.subr.mxu0 0.0
        %1062 = vmatpush1.msra.mxu0 %v933
        %1063 = vmatprep.subr.mxu0 0.0
        %1064 = vmatpush1.msra.mxu0 0.0
        %1065 = vmatprep.subr.mxu0 0.0
        %1066 = vmatpush1.msra.mxu0 0.0
        %1067 = vmatprep.subr.mxu0 0.0
        %1068 = vmatpush1.msra.mxu0 0.0
        %1069 = vmatprep.subr.mxu0 0.0
        %1070 = vmatpush1.msra.mxu0 0.0
        %1071 = vmatprep.subr.mxu0 0.0
        %1072 = vmatpush1.msra.mxu0 0.0
        %1073 = vmatprep.subr.mxu0 0.0
        %1074 = vmatpush1.msra.mxu0 0.0
        %1075 = vmatprep.subr.mxu0 0.0
        %1076 = vmatpush1.msra.mxu0 0.0
        %1077 = vmatprep.subr.mxu0 0.0
        %1078 = vmatpush1.msra.mxu0 0.0
        %1079 = vmatprep.subr.mxu0 0.0
        %1080 = vmatpush1.msra.mxu0 0.0
        %1081 = vmatprep.subr.mxu0 0.0
        %1082 = vmatpush1.msra.mxu0 0.0
        %1083 = vmatprep.subr.mxu0 0.0
        %1084 = vmatpush1.msra.mxu0 0.0
        %1085 = vmatprep.subr.mxu0 0.0
        %1086 = vmatpush1.msra.mxu0 0.0
        %1087 = vmatprep.subr.mxu0 0.0
        %1088 = vmatpush1.msra.mxu0 0.0
        %1089 = vmatprep.subr.mxu0 0.0
        %1090 = vmatpush1.msra.mxu0 0.0
        %1091 = vmatprep.subr.mxu0 0.0
        %1092 = vmatpush1.msra.mxu0 0.0
        %1093 = vmatprep.subr.mxu0 0.0
        %1094 = vmatpush1.msra.mxu0 0.0
        %1095 = vmatprep.subr.mxu0 0.0
        %1096 = vmatpush1.msra.mxu0 0.0
        %1097 = vmatprep.subr.mxu0 0.0
        %1098 = vmatpush1.msra.mxu0 0.0
        %1099 = vmatprep.subr.mxu0 0.0
        %1100 = vmatpush1.msra.mxu0 0.0
        %1101 = vmatprep.subr.mxu0 0.0
        %1102 = vmatpush1.msra.mxu0 0.0
        %1103 = vmatprep.subr.mxu0 0.0
        %1104 = vmatpush1.msra.mxu0 0.0
        %1105 = vmatprep.subr.mxu0 0.0
        %1106 = vmatpush1.msra.mxu0 0.0
        %1107 = vmatprep.subr.mxu0 0.0
        %1108 = vmatpush1.msra.mxu0 0.0
        %1109 = vmatprep.subr.mxu0 0.0
        %1110 = vmatpush1.msra.mxu0 0.0
        %1111 = vmatprep.mubr.f32.mxu0 0.0
        %1112 = vmatmul.mubr.f32.gmra.mrb[0].mxu0 %v1000
        %v1113 = vpop.f32.mrb[0].mxu0
        %v1114 = vadd.f32 0.0, %v1113
        %v1115 = vpop.f32.mrb[0].mxu0
        %1116 = vmatprep.mubr.f32.mxu0 0.0
        %1117 = vmatmul.mubr.f32.gmra.mrb[0].mxu0 %v1003
        %v1118 = vpop.f32.mrb[0].mxu0
        %v1119 = vadd.f32 0.0, %v1118
        %v1120 = vpop.f32.mrb[0].mxu0
        %1121 = vmatprep.mubr.f32.mxu0 0.0
        %1122 = vmatmul.mubr.f32.gmra.mrb[0].mxu0 %v1006
        %v1123 = vpop.f32.mrb[0].mxu0
        %v1124 = vadd.f32 0.0, %v1123
        %v1125 = vpop.f32.mrb[0].mxu0
        %1126 = vmatprep.mubr.f32.mxu0 0.0
        %1127 = vmatmul.mubr.f32.gmra.mrb[0].mxu0 %v1009
        %v1128 = vpop.f32.mrb[0].mxu0
        %v1129 = vadd.f32 0.0, %v1128
        %v1130 = vpop.f32.mrb[0].mxu0
        %1131 = vmatprep.mubr.f32.mxu0 0.0
        %1132 = vmatmul.mubr.f32.gmra.mrb[0].mxu0 %v1012
        %v1133 = vpop.f32.mrb[0].mxu0
        %v1134 = vadd.f32 0.0, %v1133
        %v1135 = vpop.f32.mrb[0].mxu0
        %1136 = vmatprep.mubr.f32.mxu0 0.0
        %1137 = vmatmul.mubr.f32.gmra.mrb[0].mxu0 %v1015
        %v1138 = vpop.f32.mrb[0].mxu0
        %v1139 = vadd.f32 0.0, %v1138
        %v1140 = vpop.f32.mrb[0].mxu0
        %1141 = vmatprep.mubr.f32.mxu0 0.0
        %1142 = vmatmul.mubr.f32.gmra.mrb[0].mxu0 %v1018
        %v1143 = vpop.f32.mrb[0].mxu0
        %v1144 = vadd.f32 0.0, %v1143
        %v1145 = vpop.f32.mrb[0].mxu0
        %1146 = vmatprep.mubr.f32.mxu0 0.0
        %1147 = vmatmul.mubr.f32.gmra.mrb[0].mxu0 %v1021
        %v1148 = vpop.f32.mrb[0].mxu0
        %v1149 = vadd.f32 0.0, %v1148
        %v1150 = vpop.f32.mrb[0].mxu0
        %1151 = vmatprep.mubr.f32.mxu0 0.0
        %1152 = vmatmul.mubr.f32.gmra.mrb[0].mxu0 %v1024
        %v1153 = vpop.f32.mrb[0].mxu0
        %v1154 = vadd.f32 0.0, %v1153
        %v1155 = vpop.f32.mrb[0].mxu0
        %1156 = vmatprep.mubr.f32.mxu0 0.0
        %1157 = vmatmul.mubr.f32.gmra.mrb[0].mxu0 %v1027
        %v1158 = vpop.f32.mrb[0].mxu0
        %v1159 = vadd.f32 0.0, %v1158
        %v1160 = vpop.f32.mrb[0].mxu0
        %1161 = vmatprep.mubr.f32.mxu0 0.0
        %1162 = vmatmul.mubr.f32.gmra.mrb[0].mxu0 %v1030
        %v1163 = vpop.f32.mrb[0].mxu0
        %v1164 = vadd.f32 0.0, %v1163
        %v1165 = vpop.f32.mrb[0].mxu0
        %1166 = vmatprep.mubr.f32.mxu0 0.0
        %1167 = vmatmul.mubr.f32.gmra.mrb[0].mxu0 %v1033
        %v1168 = vpop.f32.mrb[0].mxu0
        %v1169 = vadd.f32 0.0, %v1168
        %v1170 = vpop.f32.mrb[0].mxu0
        %1171 = vmatprep.mubr.f32.mxu0 0.0
        %1172 = vmatmul.mubr.f32.gmra.mrb[0].mxu0 %v1036
        %v1173 = vpop.f32.mrb[0].mxu0
        %v1174 = vadd.f32 0.0, %v1173
        %v1175 = vpop.f32.mrb[0].mxu0
        %1176 = vmatprep.mubr.f32.mxu0 0.0
        %1177 = vmatmul.mubr.f32.gmra.mrb[0].mxu0 %v1039
        %v1178 = vpop.f32.mrb[0].mxu0
        %v1179 = vadd.f32 0.0, %v1178
        %v1180 = vpop.f32.mrb[0].mxu0
        %1181 = vmatprep.mubr.f32.mxu0 0.0
        %1182 = vmatmul.mubr.f32.gmra.mrb[0].mxu0 %v1042
        %v1183 = vpop.f32.mrb[0].mxu0
        %v1184 = vadd.f32 0.0, %v1183
        %v1185 = vpop.f32.mrb[0].mxu0
        %1186 = vmatprep.mubr.f32.mxu0 0.0
        %1187 = vmatmul.mubr.f32.gmra.mrb[0].mxu0 %v1045
        %v1188 = vpop.f32.mrb[0].mxu0
        %v1189 = vadd.f32 0.0, %v1188
        %v1190 = vpop.f32.mrb[0].mxu0
        %1191 = vdwg.mxu0
        %v1193 = vsel %vm998, %v950, 0
        %v1196 = vsel %vm998, %v951, 0
        %v1199 = vsel %vm998, %v952, 0
        %v1202 = vsel %vm998, %v953, 0
        %v1205 = vsel %vm998, %v954, 0
        %v1208 = vsel %vm998, %v955, 0
        %v1211 = vsel %vm998, %v956, 0
        %v1214 = vsel %vm998, %v957, 0
        %v1217 = vsel %vm998, %v958, 0
        %v1220 = vsel %vm998, %v959, 0
        %v1223 = vsel %vm998, %v960, 0
        %v1226 = vsel %vm998, %v961, 0
        %v1229 = vsel %vm998, %v962, 0
        %v1232 = vsel %vm998, %v963, 0
        %v1235 = vsel %vm998, %v964, 0
        %v1238 = vsel %vm998, %v965, 0
        %1240 = vmatprep.subr.mxu0 0.0
        %1241 = vmatpush1.msra.mxu0 %v926
        %1242 = vmatprep.subr.mxu0 0.0
        %1243 = vmatpush1.msra.mxu0 %v927
        %1244 = vmatprep.subr.mxu0 0.0
        %1245 = vmatpush1.msra.mxu0 %v928
        %1246 = vmatprep.subr.mxu0 0.0
        %1247 = vmatpush1.msra.mxu0 %v929
        %1248 = vmatprep.subr.mxu0 0.0
        %1249 = vmatpush1.msra.mxu0 %v930
        %1250 = vmatprep.subr.mxu0 0.0
        %1251 = vmatpush1.msra.mxu0 %v931
        %1252 = vmatprep.subr.mxu0 0.0
        %1253 = vmatpush1.msra.mxu0 %v932
        %1254 = vmatprep.subr.mxu0 0.0
        %1255 = vmatpush1.msra.mxu0 %v933
        %1256 = vmatprep.subr.mxu0 0.0
        %1257 = vmatpush1.msra.mxu0 0.0
        %1258 = vmatprep.subr.mxu0 0.0
        %1259 = vmatpush1.msra.mxu0 0.0
        %1260 = vmatprep.subr.mxu0 0.0
        %1261 = vmatpush1.msra.mxu0 0.0
        %1262 = vmatprep.subr.mxu0 0.0
        %1263 = vmatpush1.msra.mxu0 0.0
        %1264 = vmatprep.subr.mxu0 0.0
        %1265 = vmatpush1.msra.mxu0 0.0
        %1266 = vmatprep.subr.mxu0 0.0
        %1267 = vmatpush1.msra.mxu0 0.0
        %1268 = vmatprep.subr.mxu0 0.0
        %1269 = vmatpush1.msra.mxu0 0.0
        %1270 = vmatprep.subr.mxu0 0.0
        %1271 = vmatpush1.msra.mxu0 0.0
        %1272 = vmatprep.subr.mxu0 0.0
        %1273 = vmatpush1.msra.mxu0 0.0
        %1274 = vmatprep.subr.mxu0 0.0
        %1275 = vmatpush1.msra.mxu0 0.0
        %1276 = vmatprep.subr.mxu0 0.0
        %1277 = vmatpush1.msra.mxu0 0.0
        %1278 = vmatprep.subr.mxu0 0.0
        %1279 = vmatpush1.msra.mxu0 0.0
        %1280 = vmatprep.subr.mxu0 0.0
        %1281 = vmatpush1.msra.mxu0 0.0
        %1282 = vmatprep.subr.mxu0 0.0
        %1283 = vmatpush1.msra.mxu0 0.0
        %1284 = vmatprep.subr.mxu0 0.0
        %1285 = vmatpush1.msra.mxu0 0.0
        %1286 = vmatprep.subr.mxu0 0.0
        %1287 = vmatpush1.msra.mxu0 0.0
        %1288 = vmatprep.subr.mxu0 0.0
        %1289 = vmatpush1.msra.mxu0 0.0
        %1290 = vmatprep.subr.mxu0 0.0
        %1291 = vmatpush1.msra.mxu0 0.0
        %1292 = vmatprep.subr.mxu0 0.0
        %1293 = vmatpush1.msra.mxu0 0.0
        %1294 = vmatprep.subr.mxu0 0.0
        %1295 = vmatpush1.msra.mxu0 0.0
        %1296 = vmatprep.subr.mxu0 0.0
        %1297 = vmatpush1.msra.mxu0 0.0
        %1298 = vmatprep.subr.mxu0 0.0
        %1299 = vmatpush1.msra.mxu0 0.0
        %1300 = vmatprep.subr.mxu0 0.0
        %1301 = vmatpush1.msra.mxu0 0.0
        %1302 = vmatprep.subr.mxu0 0.0
        %1303 = vmatpush1.msra.mxu0 0.0
        %1304 = vmatprep.mubr.f32.mxu0 0.0
        %1305 = vmatmul.mubr.f32.gmra.mrb[0].mxu0 %v1193
        %v1306 = vpop.f32.mrb[0].mxu0
        %v1307 = vadd.f32 0.0, %v1306
        %v1308 = vpop.f32.mrb[0].mxu0
        %1309 = vmatprep.mubr.f32.mxu0 0.0
        %1310 = vmatmul.mubr.f32.gmra.mrb[0].mxu0 %v1196
        %v1311 = vpop.f32.mrb[0].mxu0
        %v1312 = vadd.f32 0.0, %v1311
        %v1313 = vpop.f32.mrb[0].mxu0
        %1314 = vmatprep.mubr.f32.mxu0 0.0
        %1315 = vmatmul.mubr.f32.gmra.mrb[0].mxu0 %v1199
        %v1316 = vpop.f32.mrb[0].mxu0
        %v1317 = vadd.f32 0.0, %v1316
        %v1318 = vpop.f32.mrb[0].mxu0
        %1319 = vmatprep.mubr.f32.mxu0 0.0
        %1320 = vmatmul.mubr.f32.gmra.mrb[0].mxu0 %v1202
        %v1321 = vpop.f32.mrb[0].mxu0
        %v1322 = vadd.f32 0.0, %v1321
        %v1323 = vpop.f32.mrb[0].mxu0
        %1324 = vmatprep.mubr.f32.mxu0 0.0
        %1325 = vmatmul.mubr.f32.gmra.mrb[0].mxu0 %v1205
        %v1326 = vpop.f32.mrb[0].mxu0
        %v1327 = vadd.f32 0.0, %v1326
        %v1328 = vpop.f32.mrb[0].mxu0
        %1329 = vmatprep.mubr.f32.mxu0 0.0
        %1330 = vmatmul.mubr.f32.gmra.mrb[0].mxu0 %v1208
        %v1331 = vpop.f32.mrb[0].mxu0
        %v1332 = vadd.f32 0.0, %v1331
        %v1333 = vpop.f32.mrb[0].mxu0
        %1334 = vmatprep.mubr.f32.mxu0 0.0
        %1335 = vmatmul.mubr.f32.gmra.mrb[0].mxu0 %v1211
        %v1336 = vpop.f32.mrb[0].mxu0
        %v1337 = vadd.f32 0.0, %v1336
        %v1338 = vpop.f32.mrb[0].mxu0
        %1339 = vmatprep.mubr.f32.mxu0 0.0
        %1340 = vmatmul.mubr.f32.gmra.mrb[0].mxu0 %v1214
        %v1341 = vpop.f32.mrb[0].mxu0
        %v1342 = vadd.f32 0.0, %v1341
        %v1343 = vpop.f32.mrb[0].mxu0
        %1344 = vmatprep.mubr.f32.mxu0 0.0
        %1345 = vmatmul.mubr.f32.gmra.mrb[0].mxu0 %v1217
        %v1346 = vpop.f32.mrb[0].mxu0
        %v1347 = vadd.f32 0.0, %v1346
        %v1348 = vpop.f32.mrb[0].mxu0
        %1349 = vmatprep.mubr.f32.mxu0 0.0
        %1350 = vmatmul.mubr.f32.gmra.mrb[0].mxu0 %v1220
        %v1351 = vpop.f32.mrb[0].mxu0
        %v1352 = vadd.f32 0.0, %v1351
        %v1353 = vpop.f32.mrb[0].mxu0
        %1354 = vmatprep.mubr.f32.mxu0 0.0
        %1355 = vmatmul.mubr.f32.gmra.mrb[0].mxu0 %v1223
        %v1356 = vpop.f32.mrb[0].mxu0
        %v1357 = vadd.f32 0.0, %v1356
        %v1358 = vpop.f32.mrb[0].mxu0
        %1359 = vmatprep.mubr.f32.mxu0 0.0
        %1360 = vmatmul.mubr.f32.gmra.mrb[0].mxu0 %v1226
        %v1361 = vpop.f32.mrb[0].mxu0
        %v1362 = vadd.f32 0.0, %v1361
        %v1363 = vpop.f32.mrb[0].mxu0
        %1364 = vmatprep.mubr.f32.mxu0 0.0
        %1365 = vmatmul.mubr.f32.gmra.mrb[0].mxu0 %v1229
        %v1366 = vpop.f32.mrb[0].mxu0
        %v1367 = vadd.f32 0.0, %v1366
        %v1368 = vpop.f32.mrb[0].mxu0
        %1369 = vmatprep.mubr.f32.mxu0 0.0
        %1370 = vmatmul.mubr.f32.gmra.mrb[0].mxu0 %v1232
        %v1371 = vpop.f32.mrb[0].mxu0
        %v1372 = vadd.f32 0.0, %v1371
        %v1373 = vpop.f32.mrb[0].mxu0
        %1374 = vmatprep.mubr.f32.mxu0 0.0
        %1375 = vmatmul.mubr.f32.gmra.mrb[0].mxu0 %v1235
        %v1376 = vpop.f32.mrb[0].mxu0
        %v1377 = vadd.f32 0.0, %v1376
        %v1378 = vpop.f32.mrb[0].mxu0
        %1379 = vmatprep.mubr.f32.mxu0 0.0
        %1380 = vmatmul.mubr.f32.gmra.mrb[0].mxu0 %v1238
        %v1381 = vpop.f32.mrb[0].mxu0
        %v1382 = vadd.f32 0.0, %v1381
        %v1383 = vpop.f32.mrb[0].mxu0
        %1384 = vdwg.mxu0
        %v1385 = vld [vmem:[%s879] sm:$0xff]
        %v1386 = vld [vmem:[%s879 + $0x8] sm:$0xff]
        %v1387 = vld [vmem:[%s879 + $0x10] sm:$0xff]
        %v1388 = vld [vmem:[%s879 + $0x18] sm:$0xff]
        %v1389 = vld [vmem:[%s879 + $0x20] sm:$0xff]
        %v1390 = vld [vmem:[%s879 + $0x28] sm:$0xff]
        %v1391 = vld [vmem:[%s879 + $0x30] sm:$0xff]
        %v1392 = vld [vmem:[%s879 + $0x38] sm:$0xff]
        %v1393 = vld [vmem:[%s879 + $0x40] sm:$0xff]
        %v1394 = vld [vmem:[%s879 + $0x48] sm:$0xff]
        %v1395 = vld [vmem:[%s879 + $0x50] sm:$0xff]
        %v1396 = vld [vmem:[%s879 + $0x58] sm:$0xff]
        %v1397 = vld [vmem:[%s879 + $0x60] sm:$0xff]
        %v1398 = vld [vmem:[%s879 + $0x68] sm:$0xff]
        %v1399 = vld [vmem:[%s879 + $0x70] sm:$0xff]
        %v1400 = vld [vmem:[%s879 + $0x78] sm:$0xff]
        %v1401 = vld [vmem:[%s879 + $0x80] sm:$0xff]
        %v1402 = vld [vmem:[%s879 + $0x88] sm:$0xff]
        %v1403 = vld [vmem:[%s879 + $0x90] sm:$0xff]
        %v1404 = vld [vmem:[%s879 + $0x98] sm:$0xff]
        %v1405 = vld [vmem:[%s879 + $0xa0] sm:$0xff]
        %v1406 = vld [vmem:[%s879 + $0xa8] sm:$0xff]
        %v1407 = vld [vmem:[%s879 + $0xb0] sm:$0xff]
        %v1408 = vld [vmem:[%s879 + $0xb8] sm:$0xff]
        %v1409 = vld [vmem:[%s879 + $0xc0] sm:$0xff]
        %v1410 = vld [vmem:[%s879 + $0xc8] sm:$0xff]
        %v1411 = vld [vmem:[%s879 + $0xd0] sm:$0xff]
        %v1412 = vld [vmem:[%s879 + $0xd8] sm:$0xff]
        %v1413 = vld [vmem:[%s879 + $0xe0] sm:$0xff]
        %v1414 = vld [vmem:[%s879 + $0xe8] sm:$0xff]
        %v1415 = vld [vmem:[%s879 + $0xf0] sm:$0xff]
        %v1416 = vld [vmem:[%s879 + $0xf8] sm:$0xff]
        %v1417 = vld [vmem:[%s698] sm:$0xff]
        %v1418 = vld [vmem:[%s698 + $0x8] sm:$0xff]
        %v1419 = vld [vmem:[%s698 + $0x10] sm:$0xff]
        %v1420 = vld [vmem:[%s698 + $0x18] sm:$0xff]
        %v1421 = vld [vmem:[%s698 + $0x20] sm:$0xff]
        %v1422 = vld [vmem:[%s698 + $0x28] sm:$0xff]
        %v1423 = vld [vmem:[%s698 + $0x30] sm:$0xff]
        %v1424 = vld [vmem:[%s698 + $0x38] sm:$0xff]
        %v1425 = vld [vmem:[%s698 + $0x40] sm:$0xff]
        %v1426 = vld [vmem:[%s698 + $0x48] sm:$0xff]
        %v1427 = vld [vmem:[%s698 + $0x50] sm:$0xff]
        %v1428 = vld [vmem:[%s698 + $0x58] sm:$0xff]
        %v1429 = vld [vmem:[%s698 + $0x60] sm:$0xff]
        %v1430 = vld [vmem:[%s698 + $0x68] sm:$0xff]
        %v1431 = vld [vmem:[%s698 + $0x70] sm:$0xff]
        %v1432 = vld [vmem:[%s698 + $0x78] sm:$0xff]
        %v1433 = vld [vmem:[%s698 + $0x80] sm:$0xff]
        %v1434 = vld [vmem:[%s698 + $0x88] sm:$0xff]
        %v1435 = vld [vmem:[%s698 + $0x90] sm:$0xff]
        %v1436 = vld [vmem:[%s698 + $0x98] sm:$0xff]
        %v1437 = vld [vmem:[%s698 + $0xa0] sm:$0xff]
        %v1438 = vld [vmem:[%s698 + $0xa8] sm:$0xff]
        %v1439 = vld [vmem:[%s698 + $0xb0] sm:$0xff]
        %v1440 = vld [vmem:[%s698 + $0xb8] sm:$0xff]
        %v1441 = vld [vmem:[%s698 + $0xc0] sm:$0xff]
        %v1442 = vld [vmem:[%s698 + $0xc8] sm:$0xff]
        %v1443 = vld [vmem:[%s698 + $0xd0] sm:$0xff]
        %v1444 = vld [vmem:[%s698 + $0xd8] sm:$0xff]
        %v1445 = vld [vmem:[%s698 + $0xe0] sm:$0xff]
        %v1446 = vld [vmem:[%s698 + $0xe8] sm:$0xff]
        %v1447 = vld [vmem:[%s698 + $0xf0] sm:$0xff]
        %v1448 = vld [vmem:[%s698 + $0xf8] sm:$0xff]
        %v1449 = vld [vmem:[%s698 + $0x100] sm:$0xff]
        %v1450 = vld [vmem:[%s698 + $0x108] sm:$0xff]
        %v1451 = vld [vmem:[%s698 + $0x110] sm:$0xff]
        %v1452 = vld [vmem:[%s698 + $0x118] sm:$0xff]
        %v1453 = vld [vmem:[%s698 + $0x120] sm:$0xff]
        %v1454 = vld [vmem:[%s698 + $0x128] sm:$0xff]
        %v1455 = vld [vmem:[%s698 + $0x130] sm:$0xff]
        %v1456 = vld [vmem:[%s698 + $0x138] sm:$0xff]
        %v1457 = vld [vmem:[%s698 + $0x140] sm:$0xff]
        %v1458 = vld [vmem:[%s698 + $0x148] sm:$0xff]
        %v1459 = vld [vmem:[%s698 + $0x150] sm:$0xff]
        %v1460 = vld [vmem:[%s698 + $0x158] sm:$0xff]
        %v1461 = vld [vmem:[%s698 + $0x160] sm:$0xff]
        %v1462 = vld [vmem:[%s698 + $0x168] sm:$0xff]
        %v1463 = vld [vmem:[%s698 + $0x170] sm:$0xff]
        %v1464 = vld [vmem:[%s698 + $0x178] sm:$0xff]
        %v1465 = vld [vmem:[%s698 + $0x180] sm:$0xff]
        %v1466 = vld [vmem:[%s698 + $0x188] sm:$0xff]
        %v1467 = vld [vmem:[%s698 + $0x190] sm:$0xff]
        %v1468 = vld [vmem:[%s698 + $0x198] sm:$0xff]
        %v1469 = vld [vmem:[%s698 + $0x1a0] sm:$0xff]
        %v1470 = vld [vmem:[%s698 + $0x1a8] sm:$0xff]
        %v1471 = vld [vmem:[%s698 + $0x1b0] sm:$0xff]
        %v1472 = vld [vmem:[%s698 + $0x1b8] sm:$0xff]
        %v1473 = vld [vmem:[%s698 + $0x1c0] sm:$0xff]
        %v1474 = vld [vmem:[%s698 + $0x1c8] sm:$0xff]
        %v1475 = vld [vmem:[%s698 + $0x1d0] sm:$0xff]
        %v1476 = vld [vmem:[%s698 + $0x1d8] sm:$0xff]
        %v1477 = vld [vmem:[%s698 + $0x1e0] sm:$0xff]
        %v1478 = vld [vmem:[%s698 + $0x1e8] sm:$0xff]
        %v1479 = vld [vmem:[%s698 + $0x1f0] sm:$0xff]
        %v1480 = vld [vmem:[%s698 + $0x1f8] sm:$0xff]
        %v1481 = vld [vmem:[%s698 + $0x200] sm:$0xff]
        %v1482 = vld [vmem:[%s698 + $0x208] sm:$0xff]
        %v1483 = vld [vmem:[%s698 + $0x210] sm:$0xff]
        %v1484 = vld [vmem:[%s698 + $0x218] sm:$0xff]
        %v1485 = vld [vmem:[%s698 + $0x220] sm:$0xff]
        %v1486 = vld [vmem:[%s698 + $0x228] sm:$0xff]
        %v1487 = vld [vmem:[%s698 + $0x230] sm:$0xff]
        %v1488 = vld [vmem:[%s698 + $0x238] sm:$0xff]
        %v1489 = vld [vmem:[%s698 + $0x240] sm:$0xff]
        %v1490 = vld [vmem:[%s698 + $0x248] sm:$0xff]
        %v1491 = vld [vmem:[%s698 + $0x250] sm:$0xff]
        %v1492 = vld [vmem:[%s698 + $0x258] sm:$0xff]
        %v1493 = vld [vmem:[%s698 + $0x260] sm:$0xff]
        %v1494 = vld [vmem:[%s698 + $0x268] sm:$0xff]
        %v1495 = vld [vmem:[%s698 + $0x270] sm:$0xff]
        %v1496 = vld [vmem:[%s698 + $0x278] sm:$0xff]
        %v1497 = vld [vmem:[%s698 + $0x280] sm:$0xff]
        %v1498 = vld [vmem:[%s698 + $0x288] sm:$0xff]
        %v1499 = vld [vmem:[%s698 + $0x290] sm:$0xff]
        %v1500 = vld [vmem:[%s698 + $0x298] sm:$0xff]
        %v1501 = vld [vmem:[%s698 + $0x2a0] sm:$0xff]
        %v1502 = vld [vmem:[%s698 + $0x2a8] sm:$0xff]
        %v1503 = vld [vmem:[%s698 + $0x2b0] sm:$0xff]
        %v1504 = vld [vmem:[%s698 + $0x2b8] sm:$0xff]
        %v1505 = vld [vmem:[%s698 + $0x2c0] sm:$0xff]
        %v1506 = vld [vmem:[%s698 + $0x2c8] sm:$0xff]
        %v1507 = vld [vmem:[%s698 + $0x2d0] sm:$0xff]
        %v1508 = vld [vmem:[%s698 + $0x2d8] sm:$0xff]
        %v1509 = vld [vmem:[%s698 + $0x2e0] sm:$0xff]
        %v1510 = vld [vmem:[%s698 + $0x2e8] sm:$0xff]
        %v1511 = vld [vmem:[%s698 + $0x2f0] sm:$0xff]
        %v1512 = vld [vmem:[%s698 + $0x2f8] sm:$0xff]
        %v1513 = vld [vmem:[%s698 + $0x300] sm:$0xff]
        %v1514 = vld [vmem:[%s698 + $0x308] sm:$0xff]
        %v1515 = vld [vmem:[%s698 + $0x310] sm:$0xff]
        %v1516 = vld [vmem:[%s698 + $0x318] sm:$0xff]
        %v1517 = vld [vmem:[%s698 + $0x320] sm:$0xff]
        %v1518 = vld [vmem:[%s698 + $0x328] sm:$0xff]
        %v1519 = vld [vmem:[%s698 + $0x330] sm:$0xff]
        %v1520 = vld [vmem:[%s698 + $0x338] sm:$0xff]
        %v1521 = vld [vmem:[%s698 + $0x340] sm:$0xff]
        %v1522 = vld [vmem:[%s698 + $0x348] sm:$0xff]
        %v1523 = vld [vmem:[%s698 + $0x350] sm:$0xff]
        %v1524 = vld [vmem:[%s698 + $0x358] sm:$0xff]
        %v1525 = vld [vmem:[%s698 + $0x360] sm:$0xff]
        %v1526 = vld [vmem:[%s698 + $0x368] sm:$0xff]
        %v1527 = vld [vmem:[%s698 + $0x370] sm:$0xff]
        %v1528 = vld [vmem:[%s698 + $0x378] sm:$0xff]
        %v1529 = vld [vmem:[%s698 + $0x380] sm:$0xff]
        %v1530 = vld [vmem:[%s698 + $0x388] sm:$0xff]
        %v1531 = vld [vmem:[%s698 + $0x390] sm:$0xff]
        %v1532 = vld [vmem:[%s698 + $0x398] sm:$0xff]
        %v1533 = vld [vmem:[%s698 + $0x3a0] sm:$0xff]
        %v1534 = vld [vmem:[%s698 + $0x3a8] sm:$0xff]
        %v1535 = vld [vmem:[%s698 + $0x3b0] sm:$0xff]
        %v1536 = vld [vmem:[%s698 + $0x3b8] sm:$0xff]
        %v1537 = vld [vmem:[%s698 + $0x3c0] sm:$0xff]
        %v1538 = vld [vmem:[%s698 + $0x3c8] sm:$0xff]
        %v1539 = vld [vmem:[%s698 + $0x3d0] sm:$0xff]
        %v1540 = vld [vmem:[%s698 + $0x3d8] sm:$0xff]
        %v1541 = vld [vmem:[%s698 + $0x3e0] sm:$0xff]
        %v1542 = vld [vmem:[%s698 + $0x3e8] sm:$0xff]
        %v1543 = vld [vmem:[%s698 + $0x3f0] sm:$0xff]
        %v1544 = vld [vmem:[%s698 + $0x3f8] sm:$0xff]
        %v1545 = vld [vmem:[%s698 + $0x400] sm:$0xff]
        %v1546 = vld [vmem:[%s698 + $0x408] sm:$0xff]
        %v1547 = vld [vmem:[%s698 + $0x410] sm:$0xff]
        %v1548 = vld [vmem:[%s698 + $0x418] sm:$0xff]
        %v1549 = vld [vmem:[%s698 + $0x420] sm:$0xff]
        %v1550 = vld [vmem:[%s698 + $0x428] sm:$0xff]
        %v1551 = vld [vmem:[%s698 + $0x430] sm:$0xff]
        %v1552 = vld [vmem:[%s698 + $0x438] sm:$0xff]
        %v1553 = vld [vmem:[%s698 + $0x440] sm:$0xff]
        %v1554 = vld [vmem:[%s698 + $0x448] sm:$0xff]
        %v1555 = vld [vmem:[%s698 + $0x450] sm:$0xff]
        %v1556 = vld [vmem:[%s698 + $0x458] sm:$0xff]
        %v1557 = vld [vmem:[%s698 + $0x460] sm:$0xff]
        %v1558 = vld [vmem:[%s698 + $0x468] sm:$0xff]
        %v1559 = vld [vmem:[%s698 + $0x470] sm:$0xff]
        %v1560 = vld [vmem:[%s698 + $0x478] sm:$0xff]
        %v1561 = vld [vmem:[%s698 + $0x480] sm:$0xff]
        %v1562 = vld [vmem:[%s698 + $0x488] sm:$0xff]
        %v1563 = vld [vmem:[%s698 + $0x490] sm:$0xff]
        %v1564 = vld [vmem:[%s698 + $0x498] sm:$0xff]
        %v1565 = vld [vmem:[%s698 + $0x4a0] sm:$0xff]
        %v1566 = vld [vmem:[%s698 + $0x4a8] sm:$0xff]
        %v1567 = vld [vmem:[%s698 + $0x4b0] sm:$0xff]
        %v1568 = vld [vmem:[%s698 + $0x4b8] sm:$0xff]
        %v1569 = vld [vmem:[%s698 + $0x4c0] sm:$0xff]
        %v1570 = vld [vmem:[%s698 + $0x4c8] sm:$0xff]
        %v1571 = vld [vmem:[%s698 + $0x4d0] sm:$0xff]
        %v1572 = vld [vmem:[%s698 + $0x4d8] sm:$0xff]
        %v1573 = vld [vmem:[%s698 + $0x4e0] sm:$0xff]
        %v1574 = vld [vmem:[%s698 + $0x4e8] sm:$0xff]
        %v1575 = vld [vmem:[%s698 + $0x4f0] sm:$0xff]
        %v1576 = vld [vmem:[%s698 + $0x4f8] sm:$0xff]
        %v1577 = vld [vmem:[%s698 + $0x500] sm:$0xff]
        %v1578 = vld [vmem:[%s698 + $0x508] sm:$0xff]
        %v1579 = vld [vmem:[%s698 + $0x510] sm:$0xff]
        %v1580 = vld [vmem:[%s698 + $0x518] sm:$0xff]
        %v1581 = vld [vmem:[%s698 + $0x520] sm:$0xff]
        %v1582 = vld [vmem:[%s698 + $0x528] sm:$0xff]
        %v1583 = vld [vmem:[%s698 + $0x530] sm:$0xff]
        %v1584 = vld [vmem:[%s698 + $0x538] sm:$0xff]
        %v1585 = vld [vmem:[%s698 + $0x540] sm:$0xff]
        %v1586 = vld [vmem:[%s698 + $0x548] sm:$0xff]
        %v1587 = vld [vmem:[%s698 + $0x550] sm:$0xff]
        %v1588 = vld [vmem:[%s698 + $0x558] sm:$0xff]
        %v1589 = vld [vmem:[%s698 + $0x560] sm:$0xff]
        %v1590 = vld [vmem:[%s698 + $0x568] sm:$0xff]
        %v1591 = vld [vmem:[%s698 + $0x570] sm:$0xff]
        %v1592 = vld [vmem:[%s698 + $0x578] sm:$0xff]
        %v1593 = vld [vmem:[%s698 + $0x580] sm:$0xff]
        %v1594 = vld [vmem:[%s698 + $0x588] sm:$0xff]
        %v1595 = vld [vmem:[%s698 + $0x590] sm:$0xff]
        %v1596 = vld [vmem:[%s698 + $0x598] sm:$0xff]
        %v1597 = vld [vmem:[%s698 + $0x5a0] sm:$0xff]
        %v1598 = vld [vmem:[%s698 + $0x5a8] sm:$0xff]
        %v1599 = vld [vmem:[%s698 + $0x5b0] sm:$0xff]
        %v1600 = vld [vmem:[%s698 + $0x5b8] sm:$0xff]
        %v1601 = vld [vmem:[%s698 + $0x5c0] sm:$0xff]
        %v1602 = vld [vmem:[%s698 + $0x5c8] sm:$0xff]
        %v1603 = vld [vmem:[%s698 + $0x5d0] sm:$0xff]
        %v1604 = vld [vmem:[%s698 + $0x5d8] sm:$0xff]
        %v1605 = vld [vmem:[%s698 + $0x5e0] sm:$0xff]
        %v1606 = vld [vmem:[%s698 + $0x5e8] sm:$0xff]
        %v1607 = vld [vmem:[%s698 + $0x5f0] sm:$0xff]
        %v1608 = vld [vmem:[%s698 + $0x5f8] sm:$0xff]
        %v1609 = vld [vmem:[%s698 + $0x600] sm:$0xff]
        %v1610 = vld [vmem:[%s698 + $0x608] sm:$0xff]
        %v1611 = vld [vmem:[%s698 + $0x610] sm:$0xff]
        %v1612 = vld [vmem:[%s698 + $0x618] sm:$0xff]
        %v1613 = vld [vmem:[%s698 + $0x620] sm:$0xff]
        %v1614 = vld [vmem:[%s698 + $0x628] sm:$0xff]
        %v1615 = vld [vmem:[%s698 + $0x630] sm:$0xff]
        %v1616 = vld [vmem:[%s698 + $0x638] sm:$0xff]
        %v1617 = vld [vmem:[%s698 + $0x640] sm:$0xff]
        %v1618 = vld [vmem:[%s698 + $0x648] sm:$0xff]
        %v1619 = vld [vmem:[%s698 + $0x650] sm:$0xff]
        %v1620 = vld [vmem:[%s698 + $0x658] sm:$0xff]
        %v1621 = vld [vmem:[%s698 + $0x660] sm:$0xff]
        %v1622 = vld [vmem:[%s698 + $0x668] sm:$0xff]
        %v1623 = vld [vmem:[%s698 + $0x670] sm:$0xff]
        %v1624 = vld [vmem:[%s698 + $0x678] sm:$0xff]
        %v1625 = vld [vmem:[%s698 + $0x680] sm:$0xff]
        %v1626 = vld [vmem:[%s698 + $0x688] sm:$0xff]
        %v1627 = vld [vmem:[%s698 + $0x690] sm:$0xff]
        %v1628 = vld [vmem:[%s698 + $0x698] sm:$0xff]
        %v1629 = vld [vmem:[%s698 + $0x6a0] sm:$0xff]
        %v1630 = vld [vmem:[%s698 + $0x6a8] sm:$0xff]
        %v1631 = vld [vmem:[%s698 + $0x6b0] sm:$0xff]
        %v1632 = vld [vmem:[%s698 + $0x6b8] sm:$0xff]
        %v1633 = vld [vmem:[%s698 + $0x6c0] sm:$0xff]
        %v1634 = vld [vmem:[%s698 + $0x6c8] sm:$0xff]
        %v1635 = vld [vmem:[%s698 + $0x6d0] sm:$0xff]
        %v1636 = vld [vmem:[%s698 + $0x6d8] sm:$0xff]
        %v1637 = vld [vmem:[%s698 + $0x6e0] sm:$0xff]
        %v1638 = vld [vmem:[%s698 + $0x6e8] sm:$0xff]
        %v1639 = vld [vmem:[%s698 + $0x6f0] sm:$0xff]
        %v1640 = vld [vmem:[%s698 + $0x6f8] sm:$0xff]
        %v1641 = vld [vmem:[%s698 + $0x700] sm:$0xff]
        %v1642 = vld [vmem:[%s698 + $0x708] sm:$0xff]
        %v1643 = vld [vmem:[%s698 + $0x710] sm:$0xff]
        %v1644 = vld [vmem:[%s698 + $0x718] sm:$0xff]
        %v1645 = vld [vmem:[%s698 + $0x720] sm:$0xff]
        %v1646 = vld [vmem:[%s698 + $0x728] sm:$0xff]
        %v1647 = vld [vmem:[%s698 + $0x730] sm:$0xff]
        %v1648 = vld [vmem:[%s698 + $0x738] sm:$0xff]
        %v1649 = vld [vmem:[%s698 + $0x740] sm:$0xff]
        %v1650 = vld [vmem:[%s698 + $0x748] sm:$0xff]
        %v1651 = vld [vmem:[%s698 + $0x750] sm:$0xff]
        %v1652 = vld [vmem:[%s698 + $0x758] sm:$0xff]
        %v1653 = vld [vmem:[%s698 + $0x760] sm:$0xff]
        %v1654 = vld [vmem:[%s698 + $0x768] sm:$0xff]
        %v1655 = vld [vmem:[%s698 + $0x770] sm:$0xff]
        %v1656 = vld [vmem:[%s698 + $0x778] sm:$0xff]
        %v1657 = vld [vmem:[%s698 + $0x780] sm:$0xff]
        %v1658 = vld [vmem:[%s698 + $0x788] sm:$0xff]
        %v1659 = vld [vmem:[%s698 + $0x790] sm:$0xff]
        %v1660 = vld [vmem:[%s698 + $0x798] sm:$0xff]
        %v1661 = vld [vmem:[%s698 + $0x7a0] sm:$0xff]
        %v1662 = vld [vmem:[%s698 + $0x7a8] sm:$0xff]
        %v1663 = vld [vmem:[%s698 + $0x7b0] sm:$0xff]
        %v1664 = vld [vmem:[%s698 + $0x7b8] sm:$0xff]
        %v1665 = vld [vmem:[%s698 + $0x7c0] sm:$0xff]
        %v1666 = vld [vmem:[%s698 + $0x7c8] sm:$0xff]
        %v1667 = vld [vmem:[%s698 + $0x7d0] sm:$0xff]
        %v1668 = vld [vmem:[%s698 + $0x7d8] sm:$0xff]
        %v1669 = vld [vmem:[%s698 + $0x7e0] sm:$0xff]
        %v1670 = vld [vmem:[%s698 + $0x7e8] sm:$0xff]
        %v1671 = vld [vmem:[%s698 + $0x7f0] sm:$0xff]
        %v1672 = vld [vmem:[%s698 + $0x7f8] sm:$0xff]
        %v1673 = vld [vmem:[%s698 + $0x800] sm:$0xff]
        %v1674 = vld [vmem:[%s698 + $0x808] sm:$0xff]
        %v1675 = vld [vmem:[%s698 + $0x810] sm:$0xff]
        %v1676 = vld [vmem:[%s698 + $0x818] sm:$0xff]
        %v1677 = vld [vmem:[%s698 + $0x820] sm:$0xff]
        %v1678 = vld [vmem:[%s698 + $0x828] sm:$0xff]
        %v1679 = vld [vmem:[%s698 + $0x830] sm:$0xff]
        %v1680 = vld [vmem:[%s698 + $0x838] sm:$0xff]
        %v1681 = vld [vmem:[%s698 + $0x840] sm:$0xff]
        %v1682 = vld [vmem:[%s698 + $0x848] sm:$0xff]
        %v1683 = vld [vmem:[%s698 + $0x850] sm:$0xff]
        %v1684 = vld [vmem:[%s698 + $0x858] sm:$0xff]
        %v1685 = vld [vmem:[%s698 + $0x860] sm:$0xff]
        %v1686 = vld [vmem:[%s698 + $0x868] sm:$0xff]
        %v1687 = vld [vmem:[%s698 + $0x870] sm:$0xff]
        %v1688 = vld [vmem:[%s698 + $0x878] sm:$0xff]
        %v1689 = vld [vmem:[%s698 + $0x880] sm:$0xff]
        %v1690 = vld [vmem:[%s698 + $0x888] sm:$0xff]
        %v1691 = vld [vmem:[%s698 + $0x890] sm:$0xff]
        %v1692 = vld [vmem:[%s698 + $0x898] sm:$0xff]
        %v1693 = vld [vmem:[%s698 + $0x8a0] sm:$0xff]
        %v1694 = vld [vmem:[%s698 + $0x8a8] sm:$0xff]
        %v1695 = vld [vmem:[%s698 + $0x8b0] sm:$0xff]
        %v1696 = vld [vmem:[%s698 + $0x8b8] sm:$0xff]
        %v1697 = vld [vmem:[%s698 + $0x8c0] sm:$0xff]
        %v1698 = vld [vmem:[%s698 + $0x8c8] sm:$0xff]
        %v1699 = vld [vmem:[%s698 + $0x8d0] sm:$0xff]
        %v1700 = vld [vmem:[%s698 + $0x8d8] sm:$0xff]
        %v1701 = vld [vmem:[%s698 + $0x8e0] sm:$0xff]
        %v1702 = vld [vmem:[%s698 + $0x8e8] sm:$0xff]
        %v1703 = vld [vmem:[%s698 + $0x8f0] sm:$0xff]
        %v1704 = vld [vmem:[%s698 + $0x8f8] sm:$0xff]
        %v1705 = vld [vmem:[%s698 + $0x900] sm:$0xff]
        %v1706 = vld [vmem:[%s698 + $0x908] sm:$0xff]
        %v1707 = vld [vmem:[%s698 + $0x910] sm:$0xff]
        %v1708 = vld [vmem:[%s698 + $0x918] sm:$0xff]
        %v1709 = vld [vmem:[%s698 + $0x920] sm:$0xff]
        %v1710 = vld [vmem:[%s698 + $0x928] sm:$0xff]
        %v1711 = vld [vmem:[%s698 + $0x930] sm:$0xff]
        %v1712 = vld [vmem:[%s698 + $0x938] sm:$0xff]
        %v1713 = vld [vmem:[%s698 + $0x940] sm:$0xff]
        %v1714 = vld [vmem:[%s698 + $0x948] sm:$0xff]
        %v1715 = vld [vmem:[%s698 + $0x950] sm:$0xff]
        %v1716 = vld [vmem:[%s698 + $0x958] sm:$0xff]
        %v1717 = vld [vmem:[%s698 + $0x960] sm:$0xff]
        %v1718 = vld [vmem:[%s698 + $0x968] sm:$0xff]
        %v1719 = vld [vmem:[%s698 + $0x970] sm:$0xff]
        %v1720 = vld [vmem:[%s698 + $0x978] sm:$0xff]
        %v1721 = vld [vmem:[%s698 + $0x980] sm:$0xff]
        %v1722 = vld [vmem:[%s698 + $0x988] sm:$0xff]
        %v1723 = vld [vmem:[%s698 + $0x990] sm:$0xff]
        %v1724 = vld [vmem:[%s698 + $0x998] sm:$0xff]
        %v1725 = vld [vmem:[%s698 + $0x9a0] sm:$0xff]
        %v1726 = vld [vmem:[%s698 + $0x9a8] sm:$0xff]
        %v1727 = vld [vmem:[%s698 + $0x9b0] sm:$0xff]
        %v1728 = vld [vmem:[%s698 + $0x9b8] sm:$0xff]
        %v1729 = vld [vmem:[%s698 + $0x9c0] sm:$0xff]
        %v1730 = vld [vmem:[%s698 + $0x9c8] sm:$0xff]
        %v1731 = vld [vmem:[%s698 + $0x9d0] sm:$0xff]
        %v1732 = vld [vmem:[%s698 + $0x9d8] sm:$0xff]
        %v1733 = vld [vmem:[%s698 + $0x9e0] sm:$0xff]
        %v1734 = vld [vmem:[%s698 + $0x9e8] sm:$0xff]
        %v1735 = vld [vmem:[%s698 + $0x9f0] sm:$0xff]
        %v1736 = vld [vmem:[%s698 + $0x9f8] sm:$0xff]
        %v1737 = vld [vmem:[%s698 + $0xa00] sm:$0xff]
        %v1738 = vld [vmem:[%s698 + $0xa08] sm:$0xff]
        %v1739 = vld [vmem:[%s698 + $0xa10] sm:$0xff]
        %v1740 = vld [vmem:[%s698 + $0xa18] sm:$0xff]
        %v1741 = vld [vmem:[%s698 + $0xa20] sm:$0xff]
        %v1742 = vld [vmem:[%s698 + $0xa28] sm:$0xff]
        %v1743 = vld [vmem:[%s698 + $0xa30] sm:$0xff]
        %v1744 = vld [vmem:[%s698 + $0xa38] sm:$0xff]
        %v1745 = vld [vmem:[%s698 + $0xa40] sm:$0xff]
        %v1746 = vld [vmem:[%s698 + $0xa48] sm:$0xff]
        %v1747 = vld [vmem:[%s698 + $0xa50] sm:$0xff]
        %v1748 = vld [vmem:[%s698 + $0xa58] sm:$0xff]
        %v1749 = vld [vmem:[%s698 + $0xa60] sm:$0xff]
        %v1750 = vld [vmem:[%s698 + $0xa68] sm:$0xff]
        %v1751 = vld [vmem:[%s698 + $0xa70] sm:$0xff]
        %v1752 = vld [vmem:[%s698 + $0xa78] sm:$0xff]
        %v1753 = vld [vmem:[%s698 + $0xa80] sm:$0xff]
        %v1754 = vld [vmem:[%s698 + $0xa88] sm:$0xff]
        %v1755 = vld [vmem:[%s698 + $0xa90] sm:$0xff]
        %v1756 = vld [vmem:[%s698 + $0xa98] sm:$0xff]
        %v1757 = vld [vmem:[%s698 + $0xaa0] sm:$0xff]
        %v1758 = vld [vmem:[%s698 + $0xaa8] sm:$0xff]
        %v1759 = vld [vmem:[%s698 + $0xab0] sm:$0xff]
        %v1760 = vld [vmem:[%s707] sm:$0x7f]
        %v1762 = vlaneseq
        %v1763 = vshrl.u32 %v1762, 7
        %v1764 = vsub.s32 0, %v1763
        %v1765 = vrot.slane %v1760, %v1764
        %v1766 = vlaneseq
        %v1767 = vshrl.u32 %v1766, 7
        %v1768 = vsub.s32 1, %v1767
        %v1769 = vrot.slane %v1760, %v1768
        %v1770 = vlaneseq
        %v1771 = vshrl.u32 %v1770, 7
        %v1772 = vsub.s32 2, %v1771
        %v1773 = vrot.slane %v1760, %v1772
        %v1774 = vlaneseq
        %v1775 = vshrl.u32 %v1774, 7
        %v1776 = vsub.s32 3, %v1775
        %v1777 = vrot.slane %v1760, %v1776
        %v1778 = vlaneseq
        %v1779 = vshrl.u32 %v1778, 7
        %v1780 = vsub.s32 4, %v1779
        %v1781 = vrot.slane %v1760, %v1780
        %v1782 = vlaneseq
        %v1783 = vshrl.u32 %v1782, 7
        %v1784 = vsub.s32 5, %v1783
        %v1785 = vrot.slane %v1760, %v1784
        %v1786 = vlaneseq
        %v1787 = vshrl.u32 %v1786, 7
        %v1788 = vsub.s32 6, %v1787
        %v1789 = vrot.slane %v1760, %v1788
        %vm1797 = vcmask 64512
        %v1799 = vsel %vm1797, %v1386, 0
        %v1802 = vsel %vm1797, %v1388, 0
        %v1805 = vsel %vm1797, %v1390, 0
        %v1808 = vsel %vm1797, %v1392, 0
        %v1811 = vsel %vm1797, %v1394, 0
        %v1814 = vsel %vm1797, %v1396, 0
        %v1817 = vsel %vm1797, %v1398, 0
        %v1820 = vsel %vm1797, %v1400, 0
        %v1823 = vsel %vm1797, %v1402, 0
        %v1826 = vsel %vm1797, %v1404, 0
        %v1829 = vsel %vm1797, %v1406, 0
        %v1832 = vsel %vm1797, %v1408, 0
        %v1835 = vsel %vm1797, %v1410, 0
        %v1838 = vsel %vm1797, %v1412, 0
        %v1841 = vsel %vm1797, %v1414, 0
        %v1844 = vsel %vm1797, %v1416, 0
        %1846 = vmatprep.subr.mxu0 %v1418
        %1847 = vmatpush1.msra.mxu0 %v1417
        %1848 = vmatprep.subr.mxu0 %v1425
        %1849 = vmatpush1.msra.mxu0 %v1424
        %1850 = vmatprep.subr.mxu0 %v1432
        %1851 = vmatpush1.msra.mxu0 %v1431
        %1852 = vmatprep.subr.mxu0 %v1439
        %1853 = vmatpush1.msra.mxu0 %v1438
        %1854 = vmatprep.subr.mxu0 %v1446
        %1855 = vmatpush1.msra.mxu0 %v1445
        %1856 = vmatprep.subr.mxu0 %v1453
        %1857 = vmatpush1.msra.mxu0 %v1452
        %1858 = vmatprep.subr.mxu0 %v1460
        %1859 = vmatpush1.msra.mxu0 %v1459
        %1860 = vmatprep.subr.mxu0 %v1467
        %1861 = vmatpush1.msra.mxu0 %v1466
        %1862 = vmatprep.subr.mxu0 %v1474
        %1863 = vmatpush1.msra.mxu0 %v1473
        %1864 = vmatprep.subr.mxu0 %v1481
        %1865 = vmatpush1.msra.mxu0 %v1480
        %1866 = vmatprep.subr.mxu0 %v1488
        %1867 = vmatpush1.msra.mxu0 %v1487
        %1868 = vmatprep.subr.mxu0 %v1495
        %1869 = vmatpush1.msra.mxu0 %v1494
        %1870 = vmatprep.subr.mxu0 %v1502
        %1871 = vmatpush1.msra.mxu0 %v1501
        %1872 = vmatprep.subr.mxu0 %v1509
        %1873 = vmatpush1.msra.mxu0 %v1508
        %1874 = vmatprep.subr.mxu0 %v1516
        %1875 = vmatpush1.msra.mxu0 %v1515
        %1876 = vmatprep.subr.mxu0 %v1523
        %1877 = vmatpush1.msra.mxu0 %v1522
        %1878 = vmatprep.subr.mxu0 %v1530
        %1879 = vmatpush1.msra.mxu0 %v1529
        %1880 = vmatprep.subr.mxu0 %v1537
        %1881 = vmatpush1.msra.mxu0 %v1536
        %1882 = vmatprep.subr.mxu0 %v1544
        %1883 = vmatpush1.msra.mxu0 %v1543
        %1884 = vmatprep.subr.mxu0 %v1551
        %1885 = vmatpush1.msra.mxu0 %v1550
        %1886 = vmatprep.subr.mxu0 %v1558
        %1887 = vmatpush1.msra.mxu0 %v1557
        %1888 = vmatprep.subr.mxu0 %v1565
        %1889 = vmatpush1.msra.mxu0 %v1564
        %1890 = vmatprep.subr.mxu0 %v1572
        %1891 = vmatpush1.msra.mxu0 %v1571
        %1892 = vmatprep.subr.mxu0 %v1579
        %1893 = vmatpush1.msra.mxu0 %v1578
        %1894 = vmatprep.subr.mxu0 %v1586
        %1895 = vmatpush1.msra.mxu0 %v1585
        %1896 = vmatprep.subr.mxu0 %v1593
        %1897 = vmatpush1.msra.mxu0 %v1592
        %1898 = vmatprep.subr.mxu0 %v1600
        %1899 = vmatpush1.msra.mxu0 %v1599
        %1900 = vmatprep.subr.mxu0 %v1607
        %1901 = vmatpush1.msra.mxu0 %v1606
        %1902 = vmatprep.subr.mxu0 %v1614
        %1903 = vmatpush1.msra.mxu0 %v1613
        %1904 = vmatprep.subr.mxu0 %v1621
        %1905 = vmatpush1.msra.mxu0 %v1620
        %1906 = vmatprep.subr.mxu0 %v1628
        %1907 = vmatpush1.msra.mxu0 %v1627
        %1908 = vmatprep.subr.mxu0 %v1635
        %1909 = vmatpush1.msra.mxu0 %v1634
        %1910 = vmatprep.mubr.f32.mxu0 %v1307
        %1911 = vmatmul.mubr.f32.gmra.mrb[0].mxu0 %v1114
        %v1912 = vpop.f32.mrb[0].mxu0
        %v1913 = vadd.f32 %v1765, %v1912
        %v1914 = vpop.f32.mrb[0].mxu0
        %v1915 = vadd.f32 %v1769, %v1914
        %1916 = vmatprep.mubr.f32.mxu0 %v1312
        %1917 = vmatmul.mubr.f32.gmra.mrb[0].mxu0 %v1119
        %v1918 = vpop.f32.mrb[0].mxu0
        %v1919 = vadd.f32 %v1765, %v1918
        %v1920 = vpop.f32.mrb[0].mxu0
        %v1921 = vadd.f32 %v1769, %v1920
        %1922 = vmatprep.mubr.f32.mxu0 %v1317
        %1923 = vmatmul.mubr.f32.gmra.mrb[0].mxu0 %v1124
        %v1924 = vpop.f32.mrb[0].mxu0
        %v1925 = vadd.f32 %v1765, %v1924
        %v1926 = vpop.f32.mrb[0].mxu0
        %v1927 = vadd.f32 %v1769, %v1926
        %1928 = vmatprep.mubr.f32.mxu0 %v1322
        %1929 = vmatmul.mubr.f32.gmra.mrb[0].mxu0 %v1129
        %v1930 = vpop.f32.mrb[0].mxu0
        %v1931 = vadd.f32 %v1765, %v1930
        %v1932 = vpop.f32.mrb[0].mxu0
        %v1933 = vadd.f32 %v1769, %v1932
        %1934 = vmatprep.mubr.f32.mxu0 %v1327
        %1935 = vmatmul.mubr.f32.gmra.mrb[0].mxu0 %v1134
        %v1936 = vpop.f32.mrb[0].mxu0
        %v1937 = vadd.f32 %v1765, %v1936
        %v1938 = vpop.f32.mrb[0].mxu0
        %v1939 = vadd.f32 %v1769, %v1938
        %1940 = vmatprep.mubr.f32.mxu0 %v1332
        %1941 = vmatmul.mubr.f32.gmra.mrb[0].mxu0 %v1139
        %v1942 = vpop.f32.mrb[0].mxu0
        %v1943 = vadd.f32 %v1765, %v1942
        %v1944 = vpop.f32.mrb[0].mxu0
        %v1945 = vadd.f32 %v1769, %v1944
        %1946 = vmatprep.mubr.f32.mxu0 %v1337
        %1947 = vmatmul.mubr.f32.gmra.mrb[0].mxu0 %v1144
        %v1948 = vpop.f32.mrb[0].mxu0
        %v1949 = vadd.f32 %v1765, %v1948
        %v1950 = vpop.f32.mrb[0].mxu0
        %v1951 = vadd.f32 %v1769, %v1950
        %1952 = vmatprep.mubr.f32.mxu0 %v1342
        %1953 = vmatmul.mubr.f32.gmra.mrb[0].mxu0 %v1149
        %v1954 = vpop.f32.mrb[0].mxu0
        %v1955 = vadd.f32 %v1765, %v1954
        %v1956 = vpop.f32.mrb[0].mxu0
        %v1957 = vadd.f32 %v1769, %v1956
        %1958 = vmatprep.mubr.f32.mxu0 %v1347
        %1959 = vmatmul.mubr.f32.gmra.mrb[0].mxu0 %v1154
        %v1960 = vpop.f32.mrb[0].mxu0
        %v1961 = vadd.f32 %v1765, %v1960
        %v1962 = vpop.f32.mrb[0].mxu0
        %v1963 = vadd.f32 %v1769, %v1962
        %1964 = vmatprep.mubr.f32.mxu0 %v1352
        %1965 = vmatmul.mubr.f32.gmra.mrb[0].mxu0 %v1159
        %v1966 = vpop.f32.mrb[0].mxu0
        %v1967 = vadd.f32 %v1765, %v1966
        %v1968 = vpop.f32.mrb[0].mxu0
        %v1969 = vadd.f32 %v1769, %v1968
        %1970 = vmatprep.mubr.f32.mxu0 %v1357
        %1971 = vmatmul.mubr.f32.gmra.mrb[0].mxu0 %v1164
        %v1972 = vpop.f32.mrb[0].mxu0
        %v1973 = vadd.f32 %v1765, %v1972
        %v1974 = vpop.f32.mrb[0].mxu0
        %v1975 = vadd.f32 %v1769, %v1974
        %1976 = vmatprep.mubr.f32.mxu0 %v1362
        %1977 = vmatmul.mubr.f32.gmra.mrb[0].mxu0 %v1169
        %v1978 = vpop.f32.mrb[0].mxu0
        %v1979 = vadd.f32 %v1765, %v1978
        %v1980 = vpop.f32.mrb[0].mxu0
        %v1981 = vadd.f32 %v1769, %v1980
        %1982 = vmatprep.mubr.f32.mxu0 %v1367
        %1983 = vmatmul.mubr.f32.gmra.mrb[0].mxu0 %v1174
        %v1984 = vpop.f32.mrb[0].mxu0
        %v1985 = vadd.f32 %v1765, %v1984
        %v1986 = vpop.f32.mrb[0].mxu0
        %v1987 = vadd.f32 %v1769, %v1986
        %1988 = vmatprep.mubr.f32.mxu0 %v1372
        %1989 = vmatmul.mubr.f32.gmra.mrb[0].mxu0 %v1179
        %v1990 = vpop.f32.mrb[0].mxu0
        %v1991 = vadd.f32 %v1765, %v1990
        %v1992 = vpop.f32.mrb[0].mxu0
        %v1993 = vadd.f32 %v1769, %v1992
        %1994 = vmatprep.mubr.f32.mxu0 %v1377
        %1995 = vmatmul.mubr.f32.gmra.mrb[0].mxu0 %v1184
        %v1996 = vpop.f32.mrb[0].mxu0
        %v1997 = vadd.f32 %v1765, %v1996
        %v1998 = vpop.f32.mrb[0].mxu0
        %v1999 = vadd.f32 %v1769, %v1998
        %2000 = vmatprep.mubr.f32.mxu0 %v1382
        %2001 = vmatmul.mubr.f32.gmra.mrb[0].mxu0 %v1189
        %v2002 = vpop.f32.mrb[0].mxu0
        %v2003 = vadd.f32 %v1765, %v2002
        %v2004 = vpop.f32.mrb[0].mxu0
        %v2005 = vadd.f32 %v1769, %v2004
        %2006 = vdwg.mxu0
        %2007 = vmatprep.subr.mxu0 %v1642
        %2008 = vmatpush1.msra.mxu0 %v1641
        %2009 = vmatprep.subr.mxu0 %v1649
        %2010 = vmatpush1.msra.mxu0 %v1648
        %2011 = vmatprep.subr.mxu0 %v1656
        %2012 = vmatpush1.msra.mxu0 %v1655
        %2013 = vmatprep.subr.mxu0 %v1663
        %2014 = vmatpush1.msra.mxu0 %v1662
        %2015 = vmatprep.subr.mxu0 %v1670
        %2016 = vmatpush1.msra.mxu0 %v1669
        %2017 = vmatprep.subr.mxu0 %v1677
        %2018 = vmatpush1.msra.mxu0 %v1676
        %2019 = vmatprep.subr.mxu0 %v1684
        %2020 = vmatpush1.msra.mxu0 %v1683
        %2021 = vmatprep.subr.mxu0 %v1691
        %2022 = vmatpush1.msra.mxu0 %v1690
        %2023 = vmatprep.subr.mxu0 %v1698
        %2024 = vmatpush1.msra.mxu0 %v1697
        %2025 = vmatprep.subr.mxu0 %v1705
        %2026 = vmatpush1.msra.mxu0 %v1704
        %2027 = vmatprep.subr.mxu0 %v1712
        %2028 = vmatpush1.msra.mxu0 %v1711
        %2029 = vmatprep.subr.mxu0 %v1719
        %2030 = vmatpush1.msra.mxu0 %v1718
        %2031 = vmatprep.subr.mxu0 %v1726
        %2032 = vmatpush1.msra.mxu0 %v1725
        %2033 = vmatprep.subr.mxu0 %v1733
        %2034 = vmatpush1.msra.mxu0 %v1732
        %2035 = vmatprep.subr.mxu0 %v1740
        %2036 = vmatpush1.msra.mxu0 %v1739
        %2037 = vmatprep.subr.mxu0 %v1747
        %2038 = vmatpush1.msra.mxu0 %v1746
        %2039 = vmatprep.subr.mxu0 %v1754
        %2040 = vmatpush1.msra.mxu0 %v1753
        %2041 = vmatprep.subr.mxu0 0.0
        %2042 = vmatpush1.msra.mxu0 0.0
        %2043 = vmatprep.subr.mxu0 0.0
        %2044 = vmatpush1.msra.mxu0 0.0
        %2045 = vmatprep.subr.mxu0 0.0
        %2046 = vmatpush1.msra.mxu0 0.0
        %2047 = vmatprep.subr.mxu0 0.0
        %2048 = vmatpush1.msra.mxu0 0.0
        %2049 = vmatprep.subr.mxu0 0.0
        %2050 = vmatpush1.msra.mxu0 0.0
        %2051 = vmatprep.subr.mxu0 0.0
        %2052 = vmatpush1.msra.mxu0 0.0
        %2053 = vmatprep.subr.mxu0 0.0
        %2054 = vmatpush1.msra.mxu0 0.0
        %2055 = vmatprep.subr.mxu0 0.0
        %2056 = vmatpush1.msra.mxu0 0.0
        %2057 = vmatprep.subr.mxu0 0.0
        %2058 = vmatpush1.msra.mxu0 0.0
        %2059 = vmatprep.subr.mxu0 0.0
        %2060 = vmatpush1.msra.mxu0 0.0
        %2061 = vmatprep.subr.mxu0 0.0
        %2062 = vmatpush1.msra.mxu0 0.0
        %2063 = vmatprep.subr.mxu0 0.0
        %2064 = vmatpush1.msra.mxu0 0.0
        %2065 = vmatprep.subr.mxu0 0.0
        %2066 = vmatpush1.msra.mxu0 0.0
        %2067 = vmatprep.subr.mxu0 0.0
        %2068 = vmatpush1.msra.mxu0 0.0
        %2069 = vmatprep.subr.mxu0 0.0
        %2070 = vmatpush1.msra.mxu0 0.0
        %2071 = vmatprep.mubr.f32.mxu0 %v1799
        %2072 = vmatmul.mubr.f32.gmra.mrb[0].mxu0 %v1385
        %v2073 = vpop.f32.mrb[0].mxu0
        %v2074 = vadd.f32 %v1913, %v2073
        %v2075 = vpop.f32.mrb[0].mxu0
        %v2076 = vadd.f32 %v1915, %v2075
        %2077 = vmatprep.mubr.f32.mxu0 %v1802
        %2078 = vmatmul.mubr.f32.gmra.mrb[0].mxu0 %v1387
        %v2079 = vpop.f32.mrb[0].mxu0
        %v2080 = vadd.f32 %v1919, %v2079
        %v2081 = vpop.f32.mrb[0].mxu0
        %v2082 = vadd.f32 %v1921, %v2081
        %2083 = vmatprep.mubr.f32.mxu0 %v1805
        %2084 = vmatmul.mubr.f32.gmra.mrb[0].mxu0 %v1389
        %v2085 = vpop.f32.mrb[0].mxu0
        %v2086 = vadd.f32 %v1925, %v2085
        %v2087 = vpop.f32.mrb[0].mxu0
        %v2088 = vadd.f32 %v1927, %v2087
        %2089 = vmatprep.mubr.f32.mxu0 %v1808
        %2090 = vmatmul.mubr.f32.gmra.mrb[0].mxu0 %v1391
        %v2091 = vpop.f32.mrb[0].mxu0
        %v2092 = vadd.f32 %v1931, %v2091
        %v2093 = vpop.f32.mrb[0].mxu0
        %v2094 = vadd.f32 %v1933, %v2093
        %2095 = vmatprep.mubr.f32.mxu0 %v1811
        %2096 = vmatmul.mubr.f32.gmra.mrb[0].mxu0 %v1393
        %v2097 = vpop.f32.mrb[0].mxu0
        %v2098 = vadd.f32 %v1937, %v2097
        %v2099 = vpop.f32.mrb[0].mxu0
        %v2100 = vadd.f32 %v1939, %v2099
        %2101 = vmatprep.mubr.f32.mxu0 %v1814
        %2102 = vmatmul.mubr.f32.gmra.mrb[0].mxu0 %v1395
        %v2103 = vpop.f32.mrb[0].mxu0
        %v2104 = vadd.f32 %v1943, %v2103
        %v2105 = vpop.f32.mrb[0].mxu0
        %v2106 = vadd.f32 %v1945, %v2105
        %2107 = vmatprep.mubr.f32.mxu0 %v1817
        %2108 = vmatmul.mubr.f32.gmra.mrb[0].mxu0 %v1397
        %v2109 = vpop.f32.mrb[0].mxu0
        %v2110 = vadd.f32 %v1949, %v2109
        %v2111 = vpop.f32.mrb[0].mxu0
        %v2112 = vadd.f32 %v1951, %v2111
        %2113 = vmatprep.mubr.f32.mxu0 %v1820
        %2114 = vmatmul.mubr.f32.gmra.mrb[0].mxu0 %v1399
        %v2115 = vpop.f32.mrb[0].mxu0
        %v2116 = vadd.f32 %v1955, %v2115
        %v2117 = vpop.f32.mrb[0].mxu0
        %v2118 = vadd.f32 %v1957, %v2117
        %2119 = vmatprep.mubr.f32.mxu0 %v1823
        %2120 = vmatmul.mubr.f32.gmra.mrb[0].mxu0 %v1401
        %v2121 = vpop.f32.mrb[0].mxu0
        %v2122 = vadd.f32 %v1961, %v2121
        %v2123 = vpop.f32.mrb[0].mxu0
        %v2124 = vadd.f32 %v1963, %v2123
        %2125 = vmatprep.mubr.f32.mxu0 %v1826
        %2126 = vmatmul.mubr.f32.gmra.mrb[0].mxu0 %v1403
        %v2127 = vpop.f32.mrb[0].mxu0
        %v2128 = vadd.f32 %v1967, %v2127
        %v2129 = vpop.f32.mrb[0].mxu0
        %v2130 = vadd.f32 %v1969, %v2129
        %2131 = vmatprep.mubr.f32.mxu0 %v1829
        %2132 = vmatmul.mubr.f32.gmra.mrb[0].mxu0 %v1405
        %v2133 = vpop.f32.mrb[0].mxu0
        %v2134 = vadd.f32 %v1973, %v2133
        %v2135 = vpop.f32.mrb[0].mxu0
        %v2136 = vadd.f32 %v1975, %v2135
        %2137 = vmatprep.mubr.f32.mxu0 %v1832
        %2138 = vmatmul.mubr.f32.gmra.mrb[0].mxu0 %v1407
        %v2139 = vpop.f32.mrb[0].mxu0
        %v2140 = vadd.f32 %v1979, %v2139
        %v2141 = vpop.f32.mrb[0].mxu0
        %v2142 = vadd.f32 %v1981, %v2141
        %2143 = vmatprep.mubr.f32.mxu0 %v1835
        %2144 = vmatmul.mubr.f32.gmra.mrb[0].mxu0 %v1409
        %v2145 = vpop.f32.mrb[0].mxu0
        %v2146 = vadd.f32 %v1985, %v2145
        %v2147 = vpop.f32.mrb[0].mxu0
        %v2148 = vadd.f32 %v1987, %v2147
        %2149 = vmatprep.mubr.f32.mxu0 %v1838
        %2150 = vmatmul.mubr.f32.gmra.mrb[0].mxu0 %v1411
        %v2151 = vpop.f32.mrb[0].mxu0
        %v2152 = vadd.f32 %v1991, %v2151
        %v2153 = vpop.f32.mrb[0].mxu0
        %v2154 = vadd.f32 %v1993, %v2153
        %2155 = vmatprep.mubr.f32.mxu0 %v1841
        %2156 = vmatmul.mubr.f32.gmra.mrb[0].mxu0 %v1413
        %v2157 = vpop.f32.mrb[0].mxu0
        %v2158 = vadd.f32 %v1997, %v2157
        %v2159 = vpop.f32.mrb[0].mxu0
        %v2160 = vadd.f32 %v1999, %v2159
        %2161 = vmatprep.mubr.f32.mxu0 %v1844
        %2162 = vmatmul.mubr.f32.gmra.mrb[0].mxu0 %v1415
        %v2163 = vpop.f32.mrb[0].mxu0
        %v2164 = vadd.f32 %v2003, %v2163
        %v2165 = vpop.f32.mrb[0].mxu0
        %v2166 = vadd.f32 %v2005, %v2165
        %2167 = vdwg.mxu0
        %2168 = vmatprep.subr.mxu0 %v1420
        %2169 = vmatpush1.msra.mxu0 %v1419
        %2170 = vmatprep.subr.mxu0 %v1427
        %2171 = vmatpush1.msra.mxu0 %v1426
        %2172 = vmatprep.subr.mxu0 %v1434
        %2173 = vmatpush1.msra.mxu0 %v1433
        %2174 = vmatprep.subr.mxu0 %v1441
        %2175 = vmatpush1.msra.mxu0 %v1440
        %2176 = vmatprep.subr.mxu0 %v1448
        %2177 = vmatpush1.msra.mxu0 %v1447
        %2178 = vmatprep.subr.mxu0 %v1455
        %2179 = vmatpush1.msra.mxu0 %v1454
        %2180 = vmatprep.subr.mxu0 %v1462
        %2181 = vmatpush1.msra.mxu0 %v1461
        %2182 = vmatprep.subr.mxu0 %v1469
        %2183 = vmatpush1.msra.mxu0 %v1468
        %2184 = vmatprep.subr.mxu0 %v1476
        %2185 = vmatpush1.msra.mxu0 %v1475
        %2186 = vmatprep.subr.mxu0 %v1483
        %2187 = vmatpush1.msra.mxu0 %v1482
        %2188 = vmatprep.subr.mxu0 %v1490
        %2189 = vmatpush1.msra.mxu0 %v1489
        %2190 = vmatprep.subr.mxu0 %v1497
        %2191 = vmatpush1.msra.mxu0 %v1496
        %2192 = vmatprep.subr.mxu0 %v1504
        %2193 = vmatpush1.msra.mxu0 %v1503
        %2194 = vmatprep.subr.mxu0 %v1511
        %2195 = vmatpush1.msra.mxu0 %v1510
        %2196 = vmatprep.subr.mxu0 %v1518
        %2197 = vmatpush1.msra.mxu0 %v1517
        %2198 = vmatprep.subr.mxu0 %v1525
        %2199 = vmatpush1.msra.mxu0 %v1524
        %2200 = vmatprep.subr.mxu0 %v1532
        %2201 = vmatpush1.msra.mxu0 %v1531
        %2202 = vmatprep.subr.mxu0 %v1539
        %2203 = vmatpush1.msra.mxu0 %v1538
        %2204 = vmatprep.subr.mxu0 %v1546
        %2205 = vmatpush1.msra.mxu0 %v1545
        %2206 = vmatprep.subr.mxu0 %v1553
        %2207 = vmatpush1.msra.mxu0 %v1552
        %2208 = vmatprep.subr.mxu0 %v1560
        %2209 = vmatpush1.msra.mxu0 %v1559
        %2210 = vmatprep.subr.mxu0 %v1567
        %2211 = vmatpush1.msra.mxu0 %v1566
        %2212 = vmatprep.subr.mxu0 %v1574
        %2213 = vmatpush1.msra.mxu0 %v1573
        %2214 = vmatprep.subr.mxu0 %v1581
        %2215 = vmatpush1.msra.mxu0 %v1580
        %2216 = vmatprep.subr.mxu0 %v1588
        %2217 = vmatpush1.msra.mxu0 %v1587
        %2218 = vmatprep.subr.mxu0 %v1595
        %2219 = vmatpush1.msra.mxu0 %v1594
        %2220 = vmatprep.subr.mxu0 %v1602
        %2221 = vmatpush1.msra.mxu0 %v1601
        %2222 = vmatprep.subr.mxu0 %v1609
        %2223 = vmatpush1.msra.mxu0 %v1608
        %2224 = vmatprep.subr.mxu0 %v1616
        %2225 = vmatpush1.msra.mxu0 %v1615
        %2226 = vmatprep.subr.mxu0 %v1623
        %2227 = vmatpush1.msra.mxu0 %v1622
        %2228 = vmatprep.subr.mxu0 %v1630
        %2229 = vmatpush1.msra.mxu0 %v1629
        %2230 = vmatprep.subr.mxu0 %v1637
        %2231 = vmatpush1.msra.mxu0 %v1636
        %2232 = vmatprep.mubr.f32.mxu0 %v1307
        %2233 = vmatmul.mubr.f32.gmra.mrb[0].mxu0 %v1114
        %v2234 = vpop.f32.mrb[0].mxu0
        %v2235 = vadd.f32 %v1773, %v2234
        %v2236 = vpop.f32.mrb[0].mxu0
        %v2237 = vadd.f32 %v1777, %v2236
        %2238 = vmatprep.mubr.f32.mxu0 %v1312
        %2239 = vmatmul.mubr.f32.gmra.mrb[0].mxu0 %v1119
        %v2240 = vpop.f32.mrb[0].mxu0
        %v2241 = vadd.f32 %v1773, %v2240
        %v2242 = vpop.f32.mrb[0].mxu0
        %v2243 = vadd.f32 %v1777, %v2242
        %2244 = vmatprep.mubr.f32.mxu0 %v1317
        %2245 = vmatmul.mubr.f32.gmra.mrb[0].mxu0 %v1124
        %v2246 = vpop.f32.mrb[0].mxu0
        %v2247 = vadd.f32 %v1773, %v2246
        %v2248 = vpop.f32.mrb[0].mxu0
        %v2249 = vadd.f32 %v1777, %v2248
        %2250 = vmatprep.mubr.f32.mxu0 %v1322
        %2251 = vmatmul.mubr.f32.gmra.mrb[0].mxu0 %v1129
        %v2252 = vpop.f32.mrb[0].mxu0
        %v2253 = vadd.f32 %v1773, %v2252
        %v2254 = vpop.f32.mrb[0].mxu0
        %v2255 = vadd.f32 %v1777, %v2254
        %2256 = vmatprep.mubr.f32.mxu0 %v1327
        %2257 = vmatmul.mubr.f32.gmra.mrb[0].mxu0 %v1134
        %v2258 = vpop.f32.mrb[0].mxu0
        %v2259 = vadd.f32 %v1773, %v2258
        %v2260 = vpop.f32.mrb[0].mxu0
        %v2261 = vadd.f32 %v1777, %v2260
        %2262 = vmatprep.mubr.f32.mxu0 %v1332
        %2263 = vmatmul.mubr.f32.gmra.mrb[0].mxu0 %v1139
        %v2264 = vpop.f32.mrb[0].mxu0
        %v2265 = vadd.f32 %v1773, %v2264
        %v2266 = vpop.f32.mrb[0].mxu0
        %v2267 = vadd.f32 %v1777, %v2266
        %2268 = vmatprep.mubr.f32.mxu0 %v1337
        %2269 = vmatmul.mubr.f32.gmra.mrb[0].mxu0 %v1144
        %v2270 = vpop.f32.mrb[0].mxu0
        %v2271 = vadd.f32 %v1773, %v2270
        %v2272 = vpop.f32.mrb[0].mxu0
        %v2273 = vadd.f32 %v1777, %v2272
        %2274 = vmatprep.mubr.f32.mxu0 %v1342
        %2275 = vmatmul.mubr.f32.gmra.mrb[0].mxu0 %v1149
        %v2276 = vpop.f32.mrb[0].mxu0
        %v2277 = vadd.f32 %v1773, %v2276
        %v2278 = vpop.f32.mrb[0].mxu0
        %v2279 = vadd.f32 %v1777, %v2278
        %2280 = vmatprep.mubr.f32.mxu0 %v1347
        %2281 = vmatmul.mubr.f32.gmra.mrb[0].mxu0 %v1154
        %v2282 = vpop.f32.mrb[0].mxu0
        %v2283 = vadd.f32 %v1773, %v2282
        %v2284 = vpop.f32.mrb[0].mxu0
        %v2285 = vadd.f32 %v1777, %v2284
        %2286 = vmatprep.mubr.f32.mxu0 %v1352
        %2287 = vmatmul.mubr.f32.gmra.mrb[0].mxu0 %v1159
        %v2288 = vpop.f32.mrb[0].mxu0
        %v2289 = vadd.f32 %v1773, %v2288
        %v2290 = vpop.f32.mrb[0].mxu0
        %v2291 = vadd.f32 %v1777, %v2290
        %2292 = vmatprep.mubr.f32.mxu0 %v1357
        %2293 = vmatmul.mubr.f32.gmra.mrb[0].mxu0 %v1164
        %v2294 = vpop.f32.mrb[0].mxu0
        %v2295 = vadd.f32 %v1773, %v2294
        %v2296 = vpop.f32.mrb[0].mxu0
        %v2297 = vadd.f32 %v1777, %v2296
        %2298 = vmatprep.mubr.f32.mxu0 %v1362
        %2299 = vmatmul.mubr.f32.gmra.mrb[0].mxu0 %v1169
        %v2300 = vpop.f32.mrb[0].mxu0
        %v2301 = vadd.f32 %v1773, %v2300
        %v2302 = vpop.f32.mrb[0].mxu0
        %v2303 = vadd.f32 %v1777, %v2302
        %2304 = vmatprep.mubr.f32.mxu0 %v1367
        %2305 = vmatmul.mubr.f32.gmra.mrb[0].mxu0 %v1174
        %v2306 = vpop.f32.mrb[0].mxu0
        %v2307 = vadd.f32 %v1773, %v2306
        %v2308 = vpop.f32.mrb[0].mxu0
        %v2309 = vadd.f32 %v1777, %v2308
        %2310 = vmatprep.mubr.f32.mxu0 %v1372
        %2311 = vmatmul.mubr.f32.gmra.mrb[0].mxu0 %v1179
        %v2312 = vpop.f32.mrb[0].mxu0
        %v2313 = vadd.f32 %v1773, %v2312
        %v2314 = vpop.f32.mrb[0].mxu0
        %v2315 = vadd.f32 %v1777, %v2314
        %2316 = vmatprep.mubr.f32.mxu0 %v1377
        %2317 = vmatmul.mubr.f32.gmra.mrb[0].mxu0 %v1184
        %v2318 = vpop.f32.mrb[0].mxu0
        %v2319 = vadd.f32 %v1773, %v2318
        %v2320 = vpop.f32.mrb[0].mxu0
        %v2321 = vadd.f32 %v1777, %v2320
        %2322 = vmatprep.mubr.f32.mxu0 %v1382
        %2323 = vmatmul.mubr.f32.gmra.mrb[0].mxu0 %v1189
        %v2324 = vpop.f32.mrb[0].mxu0
        %v2325 = vadd.f32 %v1773, %v2324
        %v2326 = vpop.f32.mrb[0].mxu0
        %v2327 = vadd.f32 %v1777, %v2326
        %2328 = vdwg.mxu0
        %2329 = vmatprep.subr.mxu0 %v1644
        %2330 = vmatpush1.msra.mxu0 %v1643
        %2331 = vmatprep.subr.mxu0 %v1651
        %2332 = vmatpush1.msra.mxu0 %v1650
        %2333 = vmatprep.subr.mxu0 %v1658
        %2334 = vmatpush1.msra.mxu0 %v1657
        %2335 = vmatprep.subr.mxu0 %v1665
        %2336 = vmatpush1.msra.mxu0 %v1664
        %2337 = vmatprep.subr.mxu0 %v1672
        %2338 = vmatpush1.msra.mxu0 %v1671
        %2339 = vmatprep.subr.mxu0 %v1679
        %2340 = vmatpush1.msra.mxu0 %v1678
        %2341 = vmatprep.subr.mxu0 %v1686
        %2342 = vmatpush1.msra.mxu0 %v1685
        %2343 = vmatprep.subr.mxu0 %v1693
        %2344 = vmatpush1.msra.mxu0 %v1692
        %2345 = vmatprep.subr.mxu0 %v1700
        %2346 = vmatpush1.msra.mxu0 %v1699
        %2347 = vmatprep.subr.mxu0 %v1707
        %2348 = vmatpush1.msra.mxu0 %v1706
        %2349 = vmatprep.subr.mxu0 %v1714
        %2350 = vmatpush1.msra.mxu0 %v1713
        %2351 = vmatprep.subr.mxu0 %v1721
        %2352 = vmatpush1.msra.mxu0 %v1720
        %2353 = vmatprep.subr.mxu0 %v1728
        %2354 = vmatpush1.msra.mxu0 %v1727
        %2355 = vmatprep.subr.mxu0 %v1735
        %2356 = vmatpush1.msra.mxu0 %v1734
        %2357 = vmatprep.subr.mxu0 %v1742
        %2358 = vmatpush1.msra.mxu0 %v1741
        %2359 = vmatprep.subr.mxu0 %v1749
        %2360 = vmatpush1.msra.mxu0 %v1748
        %2361 = vmatprep.subr.mxu0 %v1756
        %2362 = vmatpush1.msra.mxu0 %v1755
        %2363 = vmatprep.subr.mxu0 0.0
        %2364 = vmatpush1.msra.mxu0 0.0
        %2365 = vmatprep.subr.mxu0 0.0
        %2366 = vmatpush1.msra.mxu0 0.0
        %2367 = vmatprep.subr.mxu0 0.0
        %2368 = vmatpush1.msra.mxu0 0.0
        %2369 = vmatprep.subr.mxu0 0.0
        %2370 = vmatpush1.msra.mxu0 0.0
        %2371 = vmatprep.subr.mxu0 0.0
        %2372 = vmatpush1.msra.mxu0 0.0
        %2373 = vmatprep.subr.mxu0 0.0
        %2374 = vmatpush1.msra.mxu0 0.0
        %2375 = vmatprep.subr.mxu0 0.0
        %2376 = vmatpush1.msra.mxu0 0.0
        %2377 = vmatprep.subr.mxu0 0.0
        %2378 = vmatpush1.msra.mxu0 0.0
        %2379 = vmatprep.subr.mxu0 0.0
        %2380 = vmatpush1.msra.mxu0 0.0
        %2381 = vmatprep.subr.mxu0 0.0
        %2382 = vmatpush1.msra.mxu0 0.0
        %2383 = vmatprep.subr.mxu0 0.0
        %2384 = vmatpush1.msra.mxu0 0.0
        %2385 = vmatprep.subr.mxu0 0.0
        %2386 = vmatpush1.msra.mxu0 0.0
        %2387 = vmatprep.subr.mxu0 0.0
        %2388 = vmatpush1.msra.mxu0 0.0
        %2389 = vmatprep.subr.mxu0 0.0
        %2390 = vmatpush1.msra.mxu0 0.0
        %2391 = vmatprep.subr.mxu0 0.0
        %2392 = vmatpush1.msra.mxu0 0.0
        %2393 = vmatprep.mubr.f32.mxu0 %v1799
        %2394 = vmatmul.mubr.f32.gmra.mrb[0].mxu0 %v1385
        %v2395 = vpop.f32.mrb[0].mxu0
        %v2396 = vadd.f32 %v2235, %v2395
        %v2397 = vpop.f32.mrb[0].mxu0
        %v2398 = vadd.f32 %v2237, %v2397
        %2399 = vmatprep.mubr.f32.mxu0 %v1802
        %2400 = vmatmul.mubr.f32.gmra.mrb[0].mxu0 %v1387
        %v2401 = vpop.f32.mrb[0].mxu0
        %v2402 = vadd.f32 %v2241, %v2401
        %v2403 = vpop.f32.mrb[0].mxu0
        %v2404 = vadd.f32 %v2243, %v2403
        %2405 = vmatprep.mubr.f32.mxu0 %v1805
        %2406 = vmatmul.mubr.f32.gmra.mrb[0].mxu0 %v1389
        %v2407 = vpop.f32.mrb[0].mxu0
        %v2408 = vadd.f32 %v2247, %v2407
        %v2409 = vpop.f32.mrb[0].mxu0
        %v2410 = vadd.f32 %v2249, %v2409
        %2411 = vmatprep.mubr.f32.mxu0 %v1808
        %2412 = vmatmul.mubr.f32.gmra.mrb[0].mxu0 %v1391
        %v2413 = vpop.f32.mrb[0].mxu0
        %v2414 = vadd.f32 %v2253, %v2413
        %v2415 = vpop.f32.mrb[0].mxu0
        %v2416 = vadd.f32 %v2255, %v2415
        %2417 = vmatprep.mubr.f32.mxu0 %v1811
        %2418 = vmatmul.mubr.f32.gmra.mrb[0].mxu0 %v1393
        %v2419 = vpop.f32.mrb[0].mxu0
        %v2420 = vadd.f32 %v2259, %v2419
        %v2421 = vpop.f32.mrb[0].mxu0
        %v2422 = vadd.f32 %v2261, %v2421
        %2423 = vmatprep.mubr.f32.mxu0 %v1814
        %2424 = vmatmul.mubr.f32.gmra.mrb[0].mxu0 %v1395
        %v2425 = vpop.f32.mrb[0].mxu0
        %v2426 = vadd.f32 %v2265, %v2425
        %v2427 = vpop.f32.mrb[0].mxu0
        %v2428 = vadd.f32 %v2267, %v2427
        %2429 = vmatprep.mubr.f32.mxu0 %v1817
        %2430 = vmatmul.mubr.f32.gmra.mrb[0].mxu0 %v1397
        %v2431 = vpop.f32.mrb[0].mxu0
        %v2432 = vadd.f32 %v2271, %v2431
        %v2433 = vpop.f32.mrb[0].mxu0
        %v2434 = vadd.f32 %v2273, %v2433
        %2435 = vmatprep.mubr.f32.mxu0 %v1820
        %2436 = vmatmul.mubr.f32.gmra.mrb[0].mxu0 %v1399
        %v2437 = vpop.f32.mrb[0].mxu0
        %v2438 = vadd.f32 %v2277, %v2437
        %v2439 = vpop.f32.mrb[0].mxu0
        %v2440 = vadd.f32 %v2279, %v2439
        %2441 = vmatprep.mubr.f32.mxu0 %v1823
        %2442 = vmatmul.mubr.f32.gmra.mrb[0].mxu0 %v1401
        %v2443 = vpop.f32.mrb[0].mxu0
        %v2444 = vadd.f32 %v2283, %v2443
        %v2445 = vpop.f32.mrb[0].mxu0
        %v2446 = vadd.f32 %v2285, %v2445
        %2447 = vmatprep.mubr.f32.mxu0 %v1826
        %2448 = vmatmul.mubr.f32.gmra.mrb[0].mxu0 %v1403
        %v2449 = vpop.f32.mrb[0].mxu0
        %v2450 = vadd.f32 %v2289, %v2449
        %v2451 = vpop.f32.mrb[0].mxu0
        %v2452 = vadd.f32 %v2291, %v2451
        %2453 = vmatprep.mubr.f32.mxu0 %v1829
        %2454 = vmatmul.mubr.f32.gmra.mrb[0].mxu0 %v1405
        %v2455 = vpop.f32.mrb[0].mxu0
        %v2456 = vadd.f32 %v2295, %v2455
        %v2457 = vpop.f32.mrb[0].mxu0
        %v2458 = vadd.f32 %v2297, %v2457
        %2459 = vmatprep.mubr.f32.mxu0 %v1832
        %2460 = vmatmul.mubr.f32.gmra.mrb[0].mxu0 %v1407
        %v2461 = vpop.f32.mrb[0].mxu0
        %v2462 = vadd.f32 %v2301, %v2461
        %v2463 = vpop.f32.mrb[0].mxu0
        %v2464 = vadd.f32 %v2303, %v2463
        %2465 = vmatprep.mubr.f32.mxu0 %v1835
        %2466 = vmatmul.mubr.f32.gmra.mrb[0].mxu0 %v1409
        %v2467 = vpop.f32.mrb[0].mxu0
        %v2468 = vadd.f32 %v2307, %v2467
        %v2469 = vpop.f32.mrb[0].mxu0
        %v2470 = vadd.f32 %v2309, %v2469
        %2471 = vmatprep.mubr.f32.mxu0 %v1838
        %2472 = vmatmul.mubr.f32.gmra.mrb[0].mxu0 %v1411
        %v2473 = vpop.f32.mrb[0].mxu0
        %v2474 = vadd.f32 %v2313, %v2473
        %v2475 = vpop.f32.mrb[0].mxu0
        %v2476 = vadd.f32 %v2315, %v2475
        %2477 = vmatprep.mubr.f32.mxu0 %v1841
        %2478 = vmatmul.mubr.f32.gmra.mrb[0].mxu0 %v1413
        %v2479 = vpop.f32.mrb[0].mxu0
        %v2480 = vadd.f32 %v2319, %v2479
        %v2481 = vpop.f32.mrb[0].mxu0
        %v2482 = vadd.f32 %v2321, %v2481
        %2483 = vmatprep.mubr.f32.mxu0 %v1844
        %2484 = vmatmul.mubr.f32.gmra.mrb[0].mxu0 %v1415
        %v2485 = vpop.f32.mrb[0].mxu0
        %v2486 = vadd.f32 %v2325, %v2485
        %v2487 = vpop.f32.mrb[0].mxu0
        %v2488 = vadd.f32 %v2327, %v2487
        %2489 = vdwg.mxu0
        %2490 = vmatprep.subr.mxu0 %v1422
        %2491 = vmatpush1.msra.mxu0 %v1421
        %2492 = vmatprep.subr.mxu0 %v1429
        %2493 = vmatpush1.msra.mxu0 %v1428
        %2494 = vmatprep.subr.mxu0 %v1436
        %2495 = vmatpush1.msra.mxu0 %v1435
        %2496 = vmatprep.subr.mxu0 %v1443
        %2497 = vmatpush1.msra.mxu0 %v1442
        %2498 = vmatprep.subr.mxu0 %v1450
        %2499 = vmatpush1.msra.mxu0 %v1449
        %2500 = vmatprep.subr.mxu0 %v1457
        %2501 = vmatpush1.msra.mxu0 %v1456
        %2502 = vmatprep.subr.mxu0 %v1464
        %2503 = vmatpush1.msra.mxu0 %v1463
        %2504 = vmatprep.subr.mxu0 %v1471
        %2505 = vmatpush1.msra.mxu0 %v1470
        %2506 = vmatprep.subr.mxu0 %v1478
        %2507 = vmatpush1.msra.mxu0 %v1477
        %2508 = vmatprep.subr.mxu0 %v1485
        %2509 = vmatpush1.msra.mxu0 %v1484
        %2510 = vmatprep.subr.mxu0 %v1492
        %2511 = vmatpush1.msra.mxu0 %v1491
        %2512 = vmatprep.subr.mxu0 %v1499
        %2513 = vmatpush1.msra.mxu0 %v1498
        %2514 = vmatprep.subr.mxu0 %v1506
        %2515 = vmatpush1.msra.mxu0 %v1505
        %2516 = vmatprep.subr.mxu0 %v1513
        %2517 = vmatpush1.msra.mxu0 %v1512
        %2518 = vmatprep.subr.mxu0 %v1520
        %2519 = vmatpush1.msra.mxu0 %v1519
        %2520 = vmatprep.subr.mxu0 %v1527
        %2521 = vmatpush1.msra.mxu0 %v1526
        %2522 = vmatprep.subr.mxu0 %v1534
        %2523 = vmatpush1.msra.mxu0 %v1533
        %2524 = vmatprep.subr.mxu0 %v1541
        %2525 = vmatpush1.msra.mxu0 %v1540
        %2526 = vmatprep.subr.mxu0 %v1548
        %2527 = vmatpush1.msra.mxu0 %v1547
        %2528 = vmatprep.subr.mxu0 %v1555
        %2529 = vmatpush1.msra.mxu0 %v1554
        %2530 = vmatprep.subr.mxu0 %v1562
        %2531 = vmatpush1.msra.mxu0 %v1561
        %2532 = vmatprep.subr.mxu0 %v1569
        %2533 = vmatpush1.msra.mxu0 %v1568
        %2534 = vmatprep.subr.mxu0 %v1576
        %2535 = vmatpush1.msra.mxu0 %v1575
        %2536 = vmatprep.subr.mxu0 %v1583
        %2537 = vmatpush1.msra.mxu0 %v1582
        %2538 = vmatprep.subr.mxu0 %v1590
        %2539 = vmatpush1.msra.mxu0 %v1589
        %2540 = vmatprep.subr.mxu0 %v1597
        %2541 = vmatpush1.msra.mxu0 %v1596
        %2542 = vmatprep.subr.mxu0 %v1604
        %2543 = vmatpush1.msra.mxu0 %v1603
        %2544 = vmatprep.subr.mxu0 %v1611
        %2545 = vmatpush1.msra.mxu0 %v1610
        %2546 = vmatprep.subr.mxu0 %v1618
        %2547 = vmatpush1.msra.mxu0 %v1617
        %2548 = vmatprep.subr.mxu0 %v1625
        %2549 = vmatpush1.msra.mxu0 %v1624
        %2550 = vmatprep.subr.mxu0 %v1632
        %2551 = vmatpush1.msra.mxu0 %v1631
        %2552 = vmatprep.subr.mxu0 %v1639
        %2553 = vmatpush1.msra.mxu0 %v1638
        %2554 = vmatprep.mubr.f32.mxu0 %v1307
        %2555 = vmatmul.mubr.f32.gmra.mrb[0].mxu0 %v1114
        %v2556 = vpop.f32.mrb[0].mxu0
        %v2557 = vadd.f32 %v1781, %v2556
        %v2558 = vpop.f32.mrb[0].mxu0
        %v2559 = vadd.f32 %v1785, %v2558
        %2560 = vmatprep.mubr.f32.mxu0 %v1312
        %2561 = vmatmul.mubr.f32.gmra.mrb[0].mxu0 %v1119
        %v2562 = vpop.f32.mrb[0].mxu0
        %v2563 = vadd.f32 %v1781, %v2562
        %v2564 = vpop.f32.mrb[0].mxu0
        %v2565 = vadd.f32 %v1785, %v2564
        %2566 = vmatprep.mubr.f32.mxu0 %v1317
        %2567 = vmatmul.mubr.f32.gmra.mrb[0].mxu0 %v1124
        %v2568 = vpop.f32.mrb[0].mxu0
        %v2569 = vadd.f32 %v1781, %v2568
        %v2570 = vpop.f32.mrb[0].mxu0
        %v2571 = vadd.f32 %v1785, %v2570
        %2572 = vmatprep.mubr.f32.mxu0 %v1322
        %2573 = vmatmul.mubr.f32.gmra.mrb[0].mxu0 %v1129
        %v2574 = vpop.f32.mrb[0].mxu0
        %v2575 = vadd.f32 %v1781, %v2574
        %v2576 = vpop.f32.mrb[0].mxu0
        %v2577 = vadd.f32 %v1785, %v2576
        %2578 = vmatprep.mubr.f32.mxu0 %v1327
        %2579 = vmatmul.mubr.f32.gmra.mrb[0].mxu0 %v1134
        %v2580 = vpop.f32.mrb[0].mxu0
        %v2581 = vadd.f32 %v1781, %v2580
        %v2582 = vpop.f32.mrb[0].mxu0
        %v2583 = vadd.f32 %v1785, %v2582
        %2584 = vmatprep.mubr.f32.mxu0 %v1332
        %2585 = vmatmul.mubr.f32.gmra.mrb[0].mxu0 %v1139
        %v2586 = vpop.f32.mrb[0].mxu0
        %v2587 = vadd.f32 %v1781, %v2586
        %v2588 = vpop.f32.mrb[0].mxu0
        %v2589 = vadd.f32 %v1785, %v2588
        %2590 = vmatprep.mubr.f32.mxu0 %v1337
        %2591 = vmatmul.mubr.f32.gmra.mrb[0].mxu0 %v1144
        %v2592 = vpop.f32.mrb[0].mxu0
        %v2593 = vadd.f32 %v1781, %v2592
        %v2594 = vpop.f32.mrb[0].mxu0
        %v2595 = vadd.f32 %v1785, %v2594
        %2596 = vmatprep.mubr.f32.mxu0 %v1342
        %2597 = vmatmul.mubr.f32.gmra.mrb[0].mxu0 %v1149
        %v2598 = vpop.f32.mrb[0].mxu0
        %v2599 = vadd.f32 %v1781, %v2598
        %v2600 = vpop.f32.mrb[0].mxu0
        %v2601 = vadd.f32 %v1785, %v2600
        %2602 = vmatprep.mubr.f32.mxu0 %v1347
        %2603 = vmatmul.mubr.f32.gmra.mrb[0].mxu0 %v1154
        %v2604 = vpop.f32.mrb[0].mxu0
        %v2605 = vadd.f32 %v1781, %v2604
        %v2606 = vpop.f32.mrb[0].mxu0
        %v2607 = vadd.f32 %v1785, %v2606
        %2608 = vmatprep.mubr.f32.mxu0 %v1352
        %2609 = vmatmul.mubr.f32.gmra.mrb[0].mxu0 %v1159
        %v2610 = vpop.f32.mrb[0].mxu0
        %v2611 = vadd.f32 %v1781, %v2610
        %v2612 = vpop.f32.mrb[0].mxu0
        %v2613 = vadd.f32 %v1785, %v2612
        %2614 = vmatprep.mubr.f32.mxu0 %v1357
        %2615 = vmatmul.mubr.f32.gmra.mrb[0].mxu0 %v1164
        %v2616 = vpop.f32.mrb[0].mxu0
        %v2617 = vadd.f32 %v1781, %v2616
        %v2618 = vpop.f32.mrb[0].mxu0
        %v2619 = vadd.f32 %v1785, %v2618
        %2620 = vmatprep.mubr.f32.mxu0 %v1362
        %2621 = vmatmul.mubr.f32.gmra.mrb[0].mxu0 %v1169
        %v2622 = vpop.f32.mrb[0].mxu0
        %v2623 = vadd.f32 %v1781, %v2622
        %v2624 = vpop.f32.mrb[0].mxu0
        %v2625 = vadd.f32 %v1785, %v2624
        %2626 = vmatprep.mubr.f32.mxu0 %v1367
        %2627 = vmatmul.mubr.f32.gmra.mrb[0].mxu0 %v1174
        %v2628 = vpop.f32.mrb[0].mxu0
        %v2629 = vadd.f32 %v1781, %v2628
        %v2630 = vpop.f32.mrb[0].mxu0
        %v2631 = vadd.f32 %v1785, %v2630
        %2632 = vmatprep.mubr.f32.mxu0 %v1372
        %2633 = vmatmul.mubr.f32.gmra.mrb[0].mxu0 %v1179
        %v2634 = vpop.f32.mrb[0].mxu0
        %v2635 = vadd.f32 %v1781, %v2634
        %v2636 = vpop.f32.mrb[0].mxu0
        %v2637 = vadd.f32 %v1785, %v2636
        %2638 = vmatprep.mubr.f32.mxu0 %v1377
        %2639 = vmatmul.mubr.f32.gmra.mrb[0].mxu0 %v1184
        %v2640 = vpop.f32.mrb[0].mxu0
        %v2641 = vadd.f32 %v1781, %v2640
        %v2642 = vpop.f32.mrb[0].mxu0
        %v2643 = vadd.f32 %v1785, %v2642
        %2644 = vmatprep.mubr.f32.mxu0 %v1382
        %2645 = vmatmul.mubr.f32.gmra.mrb[0].mxu0 %v1189
        %v2646 = vpop.f32.mrb[0].mxu0
        %v2647 = vadd.f32 %v1781, %v2646
        %v2648 = vpop.f32.mrb[0].mxu0
        %v2649 = vadd.f32 %v1785, %v2648
        %2650 = vdwg.mxu0
        %2651 = vmatprep.subr.mxu0 %v1646
        %2652 = vmatpush1.msra.mxu0 %v1645
        %2653 = vmatprep.subr.mxu0 %v1653
        %2654 = vmatpush1.msra.mxu0 %v1652
        %2655 = vmatprep.subr.mxu0 %v1660
        %2656 = vmatpush1.msra.mxu0 %v1659
        %2657 = vmatprep.subr.mxu0 %v1667
        %2658 = vmatpush1.msra.mxu0 %v1666
        %2659 = vmatprep.subr.mxu0 %v1674
        %2660 = vmatpush1.msra.mxu0 %v1673
        %2661 = vmatprep.subr.mxu0 %v1681
        %2662 = vmatpush1.msra.mxu0 %v1680
        %2663 = vmatprep.subr.mxu0 %v1688
        %2664 = vmatpush1.msra.mxu0 %v1687
        %2665 = vmatprep.subr.mxu0 %v1695
        %2666 = vmatpush1.msra.mxu0 %v1694
        %2667 = vmatprep.subr.mxu0 %v1702
        %2668 = vmatpush1.msra.mxu0 %v1701
        %2669 = vmatprep.subr.mxu0 %v1709
        %2670 = vmatpush1.msra.mxu0 %v1708
        %2671 = vmatprep.subr.mxu0 %v1716
        %2672 = vmatpush1.msra.mxu0 %v1715
        %2673 = vmatprep.subr.mxu0 %v1723
        %2674 = vmatpush1.msra.mxu0 %v1722
        %2675 = vmatprep.subr.mxu0 %v1730
        %2676 = vmatpush1.msra.mxu0 %v1729
        %2677 = vmatprep.subr.mxu0 %v1737
        %2678 = vmatpush1.msra.mxu0 %v1736
        %2679 = vmatprep.subr.mxu0 %v1744
        %2680 = vmatpush1.msra.mxu0 %v1743
        %2681 = vmatprep.subr.mxu0 %v1751
        %2682 = vmatpush1.msra.mxu0 %v1750
        %2683 = vmatprep.subr.mxu0 %v1758
        %2684 = vmatpush1.msra.mxu0 %v1757
        %2685 = vmatprep.subr.mxu0 0.0
        %2686 = vmatpush1.msra.mxu0 0.0
        %2687 = vmatprep.subr.mxu0 0.0
        %2688 = vmatpush1.msra.mxu0 0.0
        %2689 = vmatprep.subr.mxu0 0.0
        %2690 = vmatpush1.msra.mxu0 0.0
        %2691 = vmatprep.subr.mxu0 0.0
        %2692 = vmatpush1.msra.mxu0 0.0
        %2693 = vmatprep.subr.mxu0 0.0
        %2694 = vmatpush1.msra.mxu0 0.0
        %2695 = vmatprep.subr.mxu0 0.0
        %2696 = vmatpush1.msra.mxu0 0.0
        %2697 = vmatprep.subr.mxu0 0.0
        %2698 = vmatpush1.msra.mxu0 0.0
        %2699 = vmatprep.subr.mxu0 0.0
        %2700 = vmatpush1.msra.mxu0 0.0
        %2701 = vmatprep.subr.mxu0 0.0
        %2702 = vmatpush1.msra.mxu0 0.0
        %2703 = vmatprep.subr.mxu0 0.0
        %2704 = vmatpush1.msra.mxu0 0.0
        %2705 = vmatprep.subr.mxu0 0.0
        %2706 = vmatpush1.msra.mxu0 0.0
        %2707 = vmatprep.subr.mxu0 0.0
        %2708 = vmatpush1.msra.mxu0 0.0
        %2709 = vmatprep.subr.mxu0 0.0
        %2710 = vmatpush1.msra.mxu0 0.0
        %2711 = vmatprep.subr.mxu0 0.0
        %2712 = vmatpush1.msra.mxu0 0.0
        %2713 = vmatprep.subr.mxu0 0.0
        %2714 = vmatpush1.msra.mxu0 0.0
        %2715 = vmatprep.mubr.f32.mxu0 %v1799
        %2716 = vmatmul.mubr.f32.gmra.mrb[0].mxu0 %v1385
        %v2717 = vpop.f32.mrb[0].mxu0
        %v2718 = vadd.f32 %v2557, %v2717
        %v2719 = vpop.f32.mrb[0].mxu0
        %v2720 = vadd.f32 %v2559, %v2719
        %2721 = vmatprep.mubr.f32.mxu0 %v1802
        %2722 = vmatmul.mubr.f32.gmra.mrb[0].mxu0 %v1387
        %v2723 = vpop.f32.mrb[0].mxu0
        %v2724 = vadd.f32 %v2563, %v2723
        %v2725 = vpop.f32.mrb[0].mxu0
        %v2726 = vadd.f32 %v2565, %v2725
        %2727 = vmatprep.mubr.f32.mxu0 %v1805
        %2728 = vmatmul.mubr.f32.gmra.mrb[0].mxu0 %v1389
        %v2729 = vpop.f32.mrb[0].mxu0
        %v2730 = vadd.f32 %v2569, %v2729
        %v2731 = vpop.f32.mrb[0].mxu0
        %v2732 = vadd.f32 %v2571, %v2731
        %2733 = vmatprep.mubr.f32.mxu0 %v1808
        %2734 = vmatmul.mubr.f32.gmra.mrb[0].mxu0 %v1391
        %v2735 = vpop.f32.mrb[0].mxu0
        %v2736 = vadd.f32 %v2575, %v2735
        %v2737 = vpop.f32.mrb[0].mxu0
        %v2738 = vadd.f32 %v2577, %v2737
        %2739 = vmatprep.mubr.f32.mxu0 %v1811
        %2740 = vmatmul.mubr.f32.gmra.mrb[0].mxu0 %v1393
        %v2741 = vpop.f32.mrb[0].mxu0
        %v2742 = vadd.f32 %v2581, %v2741
        %v2743 = vpop.f32.mrb[0].mxu0
        %v2744 = vadd.f32 %v2583, %v2743
        %2745 = vmatprep.mubr.f32.mxu0 %v1814
        %2746 = vmatmul.mubr.f32.gmra.mrb[0].mxu0 %v1395
        %v2747 = vpop.f32.mrb[0].mxu0
        %v2748 = vadd.f32 %v2587, %v2747
        %v2749 = vpop.f32.mrb[0].mxu0
        %v2750 = vadd.f32 %v2589, %v2749
        %2751 = vmatprep.mubr.f32.mxu0 %v1817
        %2752 = vmatmul.mubr.f32.gmra.mrb[0].mxu0 %v1397
        %v2753 = vpop.f32.mrb[0].mxu0
        %v2754 = vadd.f32 %v2593, %v2753
        %v2755 = vpop.f32.mrb[0].mxu0
        %v2756 = vadd.f32 %v2595, %v2755
        %2757 = vmatprep.mubr.f32.mxu0 %v1820
        %2758 = vmatmul.mubr.f32.gmra.mrb[0].mxu0 %v1399
        %v2759 = vpop.f32.mrb[0].mxu0
        %v2760 = vadd.f32 %v2599, %v2759
        %v2761 = vpop.f32.mrb[0].mxu0
        %v2762 = vadd.f32 %v2601, %v2761
        %2763 = vmatprep.mubr.f32.mxu0 %v1823
        %2764 = vmatmul.mubr.f32.gmra.mrb[0].mxu0 %v1401
        %v2765 = vpop.f32.mrb[0].mxu0
        %v2766 = vadd.f32 %v2605, %v2765
        %v2767 = vpop.f32.mrb[0].mxu0
        %v2768 = vadd.f32 %v2607, %v2767
        %2769 = vmatprep.mubr.f32.mxu0 %v1826
        %2770 = vmatmul.mubr.f32.gmra.mrb[0].mxu0 %v1403
        %v2771 = vpop.f32.mrb[0].mxu0
        %v2772 = vadd.f32 %v2611, %v2771
        %v2773 = vpop.f32.mrb[0].mxu0
        %v2774 = vadd.f32 %v2613, %v2773
        %2775 = vmatprep.mubr.f32.mxu0 %v1829
        %2776 = vmatmul.mubr.f32.gmra.mrb[0].mxu0 %v1405
        %v2777 = vpop.f32.mrb[0].mxu0
        %v2778 = vadd.f32 %v2617, %v2777
        %v2779 = vpop.f32.mrb[0].mxu0
        %v2780 = vadd.f32 %v2619, %v2779
        %2781 = vmatprep.mubr.f32.mxu0 %v1832
        %2782 = vmatmul.mubr.f32.gmra.mrb[0].mxu0 %v1407
        %v2783 = vpop.f32.mrb[0].mxu0
        %v2784 = vadd.f32 %v2623, %v2783
        %v2785 = vpop.f32.mrb[0].mxu0
        %v2786 = vadd.f32 %v2625, %v2785
        %2787 = vmatprep.mubr.f32.mxu0 %v1835
        %2788 = vmatmul.mubr.f32.gmra.mrb[0].mxu0 %v1409
        %v2789 = vpop.f32.mrb[0].mxu0
        %v2790 = vadd.f32 %v2629, %v2789
        %v2791 = vpop.f32.mrb[0].mxu0
        %v2792 = vadd.f32 %v2631, %v2791
        %2793 = vmatprep.mubr.f32.mxu0 %v1838
        %2794 = vmatmul.mubr.f32.gmra.mrb[0].mxu0 %v1411
        %v2795 = vpop.f32.mrb[0].mxu0
        %v2796 = vadd.f32 %v2635, %v2795
        %v2797 = vpop.f32.mrb[0].mxu0
        %v2798 = vadd.f32 %v2637, %v2797
        %2799 = vmatprep.mubr.f32.mxu0 %v1841
        %2800 = vmatmul.mubr.f32.gmra.mrb[0].mxu0 %v1413
        %v2801 = vpop.f32.mrb[0].mxu0
        %v2802 = vadd.f32 %v2641, %v2801
        %v2803 = vpop.f32.mrb[0].mxu0
        %v2804 = vadd.f32 %v2643, %v2803
        %2805 = vmatprep.mubr.f32.mxu0 %v1844
        %2806 = vmatmul.mubr.f32.gmra.mrb[0].mxu0 %v1415
        %v2807 = vpop.f32.mrb[0].mxu0
        %v2808 = vadd.f32 %v2647, %v2807
        %v2809 = vpop.f32.mrb[0].mxu0
        %v2810 = vadd.f32 %v2649, %v2809
        %2811 = vdwg.mxu0
        %2812 = vmatprep.subr.mxu0 0.0
        %2813 = vmatpush1.msra.mxu0 %v1423
        %2814 = vmatprep.subr.mxu0 0.0
        %2815 = vmatpush1.msra.mxu0 %v1430
        %2816 = vmatprep.subr.mxu0 0.0
        %2817 = vmatpush1.msra.mxu0 %v1437
        %2818 = vmatprep.subr.mxu0 0.0
        %2819 = vmatpush1.msra.mxu0 %v1444
        %2820 = vmatprep.subr.mxu0 0.0
        %2821 = vmatpush1.msra.mxu0 %v1451
        %2822 = vmatprep.subr.mxu0 0.0
        %2823 = vmatpush1.msra.mxu0 %v1458
        %2824 = vmatprep.subr.mxu0 0.0
        %2825 = vmatpush1.msra.mxu0 %v1465
        %2826 = vmatprep.subr.mxu0 0.0
        %2827 = vmatpush1.msra.mxu0 %v1472
        %2828 = vmatprep.subr.mxu0 0.0
        %2829 = vmatpush1.msra.mxu0 %v1479
        %2830 = vmatprep.subr.mxu0 0.0
        %2831 = vmatpush1.msra.mxu0 %v1486
        %2832 = vmatprep.subr.mxu0 0.0
        %2833 = vmatpush1.msra.mxu0 %v1493
        %2834 = vmatprep.subr.mxu0 0.0
        %2835 = vmatpush1.msra.mxu0 %v1500
        %2836 = vmatprep.subr.mxu0 0.0
        %2837 = vmatpush1.msra.mxu0 %v1507
        %2838 = vmatprep.subr.mxu0 0.0
        %2839 = vmatpush1.msra.mxu0 %v1514
        %2840 = vmatprep.subr.mxu0 0.0
        %2841 = vmatpush1.msra.mxu0 %v1521
        %2842 = vmatprep.subr.mxu0 0.0
        %2843 = vmatpush1.msra.mxu0 %v1528
        %2844 = vmatprep.subr.mxu0 0.0
        %2845 = vmatpush1.msra.mxu0 %v1535
        %2846 = vmatprep.subr.mxu0 0.0
        %2847 = vmatpush1.msra.mxu0 %v1542
        %2848 = vmatprep.subr.mxu0 0.0
        %2849 = vmatpush1.msra.mxu0 %v1549
        %2850 = vmatprep.subr.mxu0 0.0
        %2851 = vmatpush1.msra.mxu0 %v1556
        %2852 = vmatprep.subr.mxu0 0.0
        %2853 = vmatpush1.msra.mxu0 %v1563
        %2854 = vmatprep.subr.mxu0 0.0
        %2855 = vmatpush1.msra.mxu0 %v1570
        %2856 = vmatprep.subr.mxu0 0.0
        %2857 = vmatpush1.msra.mxu0 %v1577
        %2858 = vmatprep.subr.mxu0 0.0
        %2859 = vmatpush1.msra.mxu0 %v1584
        %2860 = vmatprep.subr.mxu0 0.0
        %2861 = vmatpush1.msra.mxu0 %v1591
        %2862 = vmatprep.subr.mxu0 0.0
        %2863 = vmatpush1.msra.mxu0 %v1598
        %2864 = vmatprep.subr.mxu0 0.0
        %2865 = vmatpush1.msra.mxu0 %v1605
        %2866 = vmatprep.subr.mxu0 0.0
        %2867 = vmatpush1.msra.mxu0 %v1612
        %2868 = vmatprep.subr.mxu0 0.0
        %2869 = vmatpush1.msra.mxu0 %v1619
        %2870 = vmatprep.subr.mxu0 0.0
        %2871 = vmatpush1.msra.mxu0 %v1626
        %2872 = vmatprep.subr.mxu0 0.0
        %2873 = vmatpush1.msra.mxu0 %v1633
        %2874 = vmatprep.subr.mxu0 0.0
        %2875 = vmatpush1.msra.mxu0 %v1640
        %2876 = vmatprep.mubr.f32.mxu0 %v1307
        %2877 = vmatmul.mubr.f32.gmra.mrb[0].mxu0 %v1114
        %v2878 = vpop.f32.mrb[0].mxu0
        %v2879 = vadd.f32 %v1789, %v2878
        %v2880 = vpop.f32.mrb[0].mxu0
        %2881 = vmatprep.mubr.f32.mxu0 %v1312
        %2882 = vmatmul.mubr.f32.gmra.mrb[0].mxu0 %v1119
        %v2883 = vpop.f32.mrb[0].mxu0
        %v2884 = vadd.f32 %v1789, %v2883
        %v2885 = vpop.f32.mrb[0].mxu0
        %2886 = vmatprep.mubr.f32.mxu0 %v1317
        %2887 = vmatmul.mubr.f32.gmra.mrb[0].mxu0 %v1124
        %v2888 = vpop.f32.mrb[0].mxu0
        %v2889 = vadd.f32 %v1789, %v2888
        %v2890 = vpop.f32.mrb[0].mxu0
        %2891 = vmatprep.mubr.f32.mxu0 %v1322
        %2892 = vmatmul.mubr.f32.gmra.mrb[0].mxu0 %v1129
        %v2893 = vpop.f32.mrb[0].mxu0
        %v2894 = vadd.f32 %v1789, %v2893
        %v2895 = vpop.f32.mrb[0].mxu0
        %2896 = vmatprep.mubr.f32.mxu0 %v1327
        %2897 = vmatmul.mubr.f32.gmra.mrb[0].mxu0 %v1134
        %v2898 = vpop.f32.mrb[0].mxu0
        %v2899 = vadd.f32 %v1789, %v2898
        %v2900 = vpop.f32.mrb[0].mxu0
        %2901 = vmatprep.mubr.f32.mxu0 %v1332
        %2902 = vmatmul.mubr.f32.gmra.mrb[0].mxu0 %v1139
        %v2903 = vpop.f32.mrb[0].mxu0
        %v2904 = vadd.f32 %v1789, %v2903
        %v2905 = vpop.f32.mrb[0].mxu0
        %2906 = vmatprep.mubr.f32.mxu0 %v1337
        %2907 = vmatmul.mubr.f32.gmra.mrb[0].mxu0 %v1144
        %v2908 = vpop.f32.mrb[0].mxu0
        %v2909 = vadd.f32 %v1789, %v2908
        %v2910 = vpop.f32.mrb[0].mxu0
        %2911 = vmatprep.mubr.f32.mxu0 %v1342
        %2912 = vmatmul.mubr.f32.gmra.mrb[0].mxu0 %v1149
        %v2913 = vpop.f32.mrb[0].mxu0
        %v2914 = vadd.f32 %v1789, %v2913
        %v2915 = vpop.f32.mrb[0].mxu0
        %2916 = vmatprep.mubr.f32.mxu0 %v1347
        %2917 = vmatmul.mubr.f32.gmra.mrb[0].mxu0 %v1154
        %v2918 = vpop.f32.mrb[0].mxu0
        %v2919 = vadd.f32 %v1789, %v2918
        %v2920 = vpop.f32.mrb[0].mxu0
        %2921 = vmatprep.mubr.f32.mxu0 %v1352
        %2922 = vmatmul.mubr.f32.gmra.mrb[0].mxu0 %v1159
        %v2923 = vpop.f32.mrb[0].mxu0
        %v2924 = vadd.f32 %v1789, %v2923
        %v2925 = vpop.f32.mrb[0].mxu0
        %2926 = vmatprep.mubr.f32.mxu0 %v1357
        %2927 = vmatmul.mubr.f32.gmra.mrb[0].mxu0 %v1164
        %v2928 = vpop.f32.mrb[0].mxu0
        %v2929 = vadd.f32 %v1789, %v2928
        %v2930 = vpop.f32.mrb[0].mxu0
        %2931 = vmatprep.mubr.f32.mxu0 %v1362
        %2932 = vmatmul.mubr.f32.gmra.mrb[0].mxu0 %v1169
        %v2933 = vpop.f32.mrb[0].mxu0
        %v2934 = vadd.f32 %v1789, %v2933
        %v2935 = vpop.f32.mrb[0].mxu0
        %2936 = vmatprep.mubr.f32.mxu0 %v1367
        %2937 = vmatmul.mubr.f32.gmra.mrb[0].mxu0 %v1174
        %v2938 = vpop.f32.mrb[0].mxu0
        %v2939 = vadd.f32 %v1789, %v2938
        %v2940 = vpop.f32.mrb[0].mxu0
        %2941 = vmatprep.mubr.f32.mxu0 %v1372
        %2942 = vmatmul.mubr.f32.gmra.mrb[0].mxu0 %v1179
        %v2943 = vpop.f32.mrb[0].mxu0
        %v2944 = vadd.f32 %v1789, %v2943
        %v2945 = vpop.f32.mrb[0].mxu0
        %2946 = vmatprep.mubr.f32.mxu0 %v1377
        %2947 = vmatmul.mubr.f32.gmra.mrb[0].mxu0 %v1184
        %v2948 = vpop.f32.mrb[0].mxu0
        %v2949 = vadd.f32 %v1789, %v2948
        %v2950 = vpop.f32.mrb[0].mxu0
        %2951 = vmatprep.mubr.f32.mxu0 %v1382
        %2952 = vmatmul.mubr.f32.gmra.mrb[0].mxu0 %v1189
        %v2953 = vpop.f32.mrb[0].mxu0
        %v2954 = vadd.f32 %v1789, %v2953
        %v2955 = vpop.f32.mrb[0].mxu0
        %2956 = vdwg.mxu0
        %2957 = vmatprep.subr.mxu0 0.0
        %2958 = vmatpush1.msra.mxu0 %v1647
        %2959 = vmatprep.subr.mxu0 0.0
        %2960 = vmatpush1.msra.mxu0 %v1654
        %2961 = vmatprep.subr.mxu0 0.0
        %2962 = vmatpush1.msra.mxu0 %v1661
        %2963 = vmatprep.subr.mxu0 0.0
        %2964 = vmatpush1.msra.mxu0 %v1668
        %2965 = vmatprep.subr.mxu0 0.0
        %2966 = vmatpush1.msra.mxu0 %v1675
        %2967 = vmatprep.subr.mxu0 0.0
        %2968 = vmatpush1.msra.mxu0 %v1682
        %2969 = vmatprep.subr.mxu0 0.0
        %2970 = vmatpush1.msra.mxu0 %v1689
        %2971 = vmatprep.subr.mxu0 0.0
        %2972 = vmatpush1.msra.mxu0 %v1696
        %2973 = vmatprep.subr.mxu0 0.0
        %2974 = vmatpush1.msra.mxu0 %v1703
        %2975 = vmatprep.subr.mxu0 0.0
        %2976 = vmatpush1.msra.mxu0 %v1710
        %2977 = vmatprep.subr.mxu0 0.0
        %2978 = vmatpush1.msra.mxu0 %v1717
        %2979 = vmatprep.subr.mxu0 0.0
        %2980 = vmatpush1.msra.mxu0 %v1724
        %2981 = vmatprep.subr.mxu0 0.0
        %2982 = vmatpush1.msra.mxu0 %v1731
        %2983 = vmatprep.subr.mxu0 0.0
        %2984 = vmatpush1.msra.mxu0 %v1738
        %2985 = vmatprep.subr.mxu0 0.0
        %2986 = vmatpush1.msra.mxu0 %v1745
        %2987 = vmatprep.subr.mxu0 0.0
        %2988 = vmatpush1.msra.mxu0 %v1752
        %2989 = vmatprep.subr.mxu0 0.0
        %2990 = vmatpush1.msra.mxu0 %v1759
        %2991 = vmatprep.subr.mxu0 0.0
        %2992 = vmatpush1.msra.mxu0 0.0
        %2993 = vmatprep.subr.mxu0 0.0
        %2994 = vmatpush1.msra.mxu0 0.0
        %2995 = vmatprep.subr.mxu0 0.0
        %2996 = vmatpush1.msra.mxu0 0.0
        %2997 = vmatprep.subr.mxu0 0.0
        %2998 = vmatpush1.msra.mxu0 0.0
        %2999 = vmatprep.subr.mxu0 0.0
        %3000 = vmatpush1.msra.mxu0 0.0
        %3001 = vmatprep.subr.mxu0 0.0
        %3002 = vmatpush1.msra.mxu0 0.0
        %3003 = vmatprep.subr.mxu0 0.0
        %3004 = vmatpush1.msra.mxu0 0.0
        %3005 = vmatprep.subr.mxu0 0.0
        %3006 = vmatpush1.msra.mxu0 0.0
        %3007 = vmatprep.subr.mxu0 0.0
        %3008 = vmatpush1.msra.mxu0 0.0
        %3009 = vmatprep.subr.mxu0 0.0
        %3010 = vmatpush1.msra.mxu0 0.0
        %3011 = vmatprep.subr.mxu0 0.0
        %3012 = vmatpush1.msra.mxu0 0.0
        %3013 = vmatprep.subr.mxu0 0.0
        %3014 = vmatpush1.msra.mxu0 0.0
        %3015 = vmatprep.subr.mxu0 0.0
        %3016 = vmatpush1.msra.mxu0 0.0
        %3017 = vmatprep.subr.mxu0 0.0
        %3018 = vmatpush1.msra.mxu0 0.0
        %3019 = vmatprep.subr.mxu0 0.0
        %3020 = vmatpush1.msra.mxu0 0.0
        %3021 = vmatprep.mubr.f32.mxu0 %v1799
        %3022 = vmatmul.mubr.f32.gmra.mrb[0].mxu0 %v1385
        %v3023 = vpop.f32.mrb[0].mxu0
        %v3024 = vadd.f32 %v2879, %v3023
        %v3025 = vpop.f32.mrb[0].mxu0
        %3026 = vmatprep.mubr.f32.mxu0 %v1802
        %3027 = vmatmul.mubr.f32.gmra.mrb[0].mxu0 %v1387
        %v3028 = vpop.f32.mrb[0].mxu0
        %v3029 = vadd.f32 %v2884, %v3028
        %v3030 = vpop.f32.mrb[0].mxu0
        %3031 = vmatprep.mubr.f32.mxu0 %v1805
        %3032 = vmatmul.mubr.f32.gmra.mrb[0].mxu0 %v1389
        %v3033 = vpop.f32.mrb[0].mxu0
        %v3034 = vadd.f32 %v2889, %v3033
        %v3035 = vpop.f32.mrb[0].mxu0
        %3036 = vmatprep.mubr.f32.mxu0 %v1808
        %3037 = vmatmul.mubr.f32.gmra.mrb[0].mxu0 %v1391
        %v3038 = vpop.f32.mrb[0].mxu0
        %v3039 = vadd.f32 %v2894, %v3038
        %v3040 = vpop.f32.mrb[0].mxu0
        %3041 = vmatprep.mubr.f32.mxu0 %v1811
        %3042 = vmatmul.mubr.f32.gmra.mrb[0].mxu0 %v1393
        %v3043 = vpop.f32.mrb[0].mxu0
        %v3044 = vadd.f32 %v2899, %v3043
        %v3045 = vpop.f32.mrb[0].mxu0
        %3046 = vmatprep.mubr.f32.mxu0 %v1814
        %3047 = vmatmul.mubr.f32.gmra.mrb[0].mxu0 %v1395
        %v3048 = vpop.f32.mrb[0].mxu0
        %v3049 = vadd.f32 %v2904, %v3048
        %v3050 = vpop.f32.mrb[0].mxu0
        %3051 = vmatprep.mubr.f32.mxu0 %v1817
        %3052 = vmatmul.mubr.f32.gmra.mrb[0].mxu0 %v1397
        %v3053 = vpop.f32.mrb[0].mxu0
        %v3054 = vadd.f32 %v2909, %v3053
        %v3055 = vpop.f32.mrb[0].mxu0
        %3056 = vmatprep.mubr.f32.mxu0 %v1820
        %3057 = vmatmul.mubr.f32.gmra.mrb[0].mxu0 %v1399
        %v3058 = vpop.f32.mrb[0].mxu0
        %v3059 = vadd.f32 %v2914, %v3058
        %v3060 = vpop.f32.mrb[0].mxu0
        %3061 = vmatprep.mubr.f32.mxu0 %v1823
        %3062 = vmatmul.mubr.f32.gmra.mrb[0].mxu0 %v1401
        %v3063 = vpop.f32.mrb[0].mxu0
        %v3064 = vadd.f32 %v2919, %v3063
        %v3065 = vpop.f32.mrb[0].mxu0
        %3066 = vmatprep.mubr.f32.mxu0 %v1826
        %3067 = vmatmul.mubr.f32.gmra.mrb[0].mxu0 %v1403
        %v3068 = vpop.f32.mrb[0].mxu0
        %v3069 = vadd.f32 %v2924, %v3068
        %v3070 = vpop.f32.mrb[0].mxu0
        %3071 = vmatprep.mubr.f32.mxu0 %v1829
        %3072 = vmatmul.mubr.f32.gmra.mrb[0].mxu0 %v1405
        %v3073 = vpop.f32.mrb[0].mxu0
        %v3074 = vadd.f32 %v2929, %v3073
        %v3075 = vpop.f32.mrb[0].mxu0
        %3076 = vmatprep.mubr.f32.mxu0 %v1832
        %3077 = vmatmul.mubr.f32.gmra.mrb[0].mxu0 %v1407
        %v3078 = vpop.f32.mrb[0].mxu0
        %v3079 = vadd.f32 %v2934, %v3078
        %v3080 = vpop.f32.mrb[0].mxu0
        %3081 = vmatprep.mubr.f32.mxu0 %v1835
        %3082 = vmatmul.mubr.f32.gmra.mrb[0].mxu0 %v1409
        %v3083 = vpop.f32.mrb[0].mxu0
        %v3084 = vadd.f32 %v2939, %v3083
        %v3085 = vpop.f32.mrb[0].mxu0
        %3086 = vmatprep.mubr.f32.mxu0 %v1838
        %3087 = vmatmul.mubr.f32.gmra.mrb[0].mxu0 %v1411
        %v3088 = vpop.f32.mrb[0].mxu0
        %v3089 = vadd.f32 %v2944, %v3088
        %v3090 = vpop.f32.mrb[0].mxu0
        %3091 = vmatprep.mubr.f32.mxu0 %v1841
        %3092 = vmatmul.mubr.f32.gmra.mrb[0].mxu0 %v1413
        %v3093 = vpop.f32.mrb[0].mxu0
        %v3094 = vadd.f32 %v2949, %v3093
        %v3095 = vpop.f32.mrb[0].mxu0
        %3096 = vmatprep.mubr.f32.mxu0 %v1844
        %3097 = vmatmul.mubr.f32.gmra.mrb[0].mxu0 %v1415
        %v3098 = vpop.f32.mrb[0].mxu0
        %v3099 = vadd.f32 %v2954, %v3098
        %v3100 = vpop.f32.mrb[0].mxu0
        %3101 = vdwg.mxu0
        %v3102 = vmax.f32 %v2074, 0.0
        %v3103 = vmax.f32 %v2076, 0.0
        %v3104 = vmax.f32 %v2396, 0.0
        %v3105 = vmax.f32 %v2398, 0.0
        %v3106 = vmax.f32 %v2718, 0.0
        %v3107 = vmax.f32 %v2720, 0.0
        %v3108 = vmax.f32 %v3024, 0.0
        %v3109 = vmax.f32 %v2080, 0.0
        %v3110 = vmax.f32 %v2082, 0.0
        %v3111 = vmax.f32 %v2402, 0.0
        %v3112 = vmax.f32 %v2404, 0.0
        %v3113 = vmax.f32 %v2724, 0.0
        %v3114 = vmax.f32 %v2726, 0.0
        %v3115 = vmax.f32 %v3029, 0.0
        %v3116 = vmax.f32 %v2086, 0.0
        %v3117 = vmax.f32 %v2088, 0.0
        %v3118 = vmax.f32 %v2408, 0.0
        %v3119 = vmax.f32 %v2410, 0.0
        %v3120 = vmax.f32 %v2730, 0.0
        %v3121 = vmax.f32 %v2732, 0.0
        %v3122 = vmax.f32 %v3034, 0.0
        %v3123 = vmax.f32 %v2092, 0.0
        %v3124 = vmax.f32 %v2094, 0.0
        %v3125 = vmax.f32 %v2414, 0.0
        %v3126 = vmax.f32 %v2416, 0.0
        %v3127 = vmax.f32 %v2736, 0.0
        %v3128 = vmax.f32 %v2738, 0.0
        %v3129 = vmax.f32 %v3039, 0.0
        %v3130 = vmax.f32 %v2098, 0.0
        %v3131 = vmax.f32 %v2100, 0.0
        %v3132 = vmax.f32 %v2420, 0.0
        %v3133 = vmax.f32 %v2422, 0.0
        %v3134 = vmax.f32 %v2742, 0.0
        %v3135 = vmax.f32 %v2744, 0.0
        %v3136 = vmax.f32 %v3044, 0.0
        %v3137 = vmax.f32 %v2104, 0.0
        %v3138 = vmax.f32 %v2106, 0.0
        %v3139 = vmax.f32 %v2426, 0.0
        %v3140 = vmax.f32 %v2428, 0.0
        %v3141 = vmax.f32 %v2748, 0.0
        %v3142 = vmax.f32 %v2750, 0.0
        %v3143 = vmax.f32 %v3049, 0.0
        %v3144 = vmax.f32 %v2110, 0.0
        %v3145 = vmax.f32 %v2112, 0.0
        %v3146 = vmax.f32 %v2432, 0.0
        %v3147 = vmax.f32 %v2434, 0.0
        %v3148 = vmax.f32 %v2754, 0.0
        %v3149 = vmax.f32 %v2756, 0.0
        %v3150 = vmax.f32 %v3054, 0.0
        %v3151 = vmax.f32 %v2116, 0.0
        %v3152 = vmax.f32 %v2118, 0.0
        %v3153 = vmax.f32 %v2438, 0.0
        %v3154 = vmax.f32 %v2440, 0.0
        %v3155 = vmax.f32 %v2760, 0.0
        %v3156 = vmax.f32 %v2762, 0.0
        %v3157 = vmax.f32 %v3059, 0.0
        %v3158 = vmax.f32 %v2122, 0.0
        %v3159 = vmax.f32 %v2124, 0.0
        %v3160 = vmax.f32 %v2444, 0.0
        %v3161 = vmax.f32 %v2446, 0.0
        %v3162 = vmax.f32 %v2766, 0.0
        %v3163 = vmax.f32 %v2768, 0.0
        %v3164 = vmax.f32 %v3064, 0.0
        %v3165 = vmax.f32 %v2128, 0.0
        %v3166 = vmax.f32 %v2130, 0.0
        %v3167 = vmax.f32 %v2450, 0.0
        %v3168 = vmax.f32 %v2452, 0.0
        %v3169 = vmax.f32 %v2772, 0.0
        %v3170 = vmax.f32 %v2774, 0.0
        %v3171 = vmax.f32 %v3069, 0.0
        %v3172 = vmax.f32 %v2134, 0.0
        %v3173 = vmax.f32 %v2136, 0.0
        %v3174 = vmax.f32 %v2456, 0.0
        %v3175 = vmax.f32 %v2458, 0.0
        %v3176 = vmax.f32 %v2778, 0.0
        %v3177 = vmax.f32 %v2780, 0.0
        %v3178 = vmax.f32 %v3074, 0.0
        %v3179 = vmax.f32 %v2140, 0.0
        %v3180 = vmax.f32 %v2142, 0.0
        %v3181 = vmax.f32 %v2462, 0.0
        %v3182 = vmax.f32 %v2464, 0.0
        %v3183 = vmax.f32 %v2784, 0.0
        %v3184 = vmax.f32 %v2786, 0.0
        %v3185 = vmax.f32 %v3079, 0.0
        %v3186 = vmax.f32 %v2146, 0.0
        %v3187 = vmax.f32 %v2148, 0.0
        %v3188 = vmax.f32 %v2468, 0.0
        %v3189 = vmax.f32 %v2470, 0.0
        %v3190 = vmax.f32 %v2790, 0.0
        %v3191 = vmax.f32 %v2792, 0.0
        %v3192 = vmax.f32 %v3084, 0.0
        %v3193 = vmax.f32 %v2152, 0.0
        %v3194 = vmax.f32 %v2154, 0.0
        %v3195 = vmax.f32 %v2474, 0.0
        %v3196 = vmax.f32 %v2476, 0.0
        %v3197 = vmax.f32 %v2796, 0.0
        %v3198 = vmax.f32 %v2798, 0.0
        %v3199 = vmax.f32 %v3089, 0.0
        %v3200 = vmax.f32 %v2158, 0.0
        %v3201 = vmax.f32 %v2160, 0.0
        %v3202 = vmax.f32 %v2480, 0.0
        %v3203 = vmax.f32 %v2482, 0.0
        %v3204 = vmax.f32 %v2802, 0.0
        %v3205 = vmax.f32 %v2804, 0.0
        %v3206 = vmax.f32 %v3094, 0.0
        %v3207 = vmax.f32 %v2164, 0.0
        %v3208 = vmax.f32 %v2166, 0.0
        %v3209 = vmax.f32 %v2486, 0.0
        %v3210 = vmax.f32 %v2488, 0.0
        %v3211 = vmax.f32 %v2808, 0.0
        %v3212 = vmax.f32 %v2810, 0.0
        %v3213 = vmax.f32 %v3099, 0.0
        %v3214 = vld [vmem:[%s716] sm:$0xff]
        %v3215 = vld [vmem:[%s716 + $0x8] sm:$0xff]
        %v3216 = vld [vmem:[%s716 + $0x10] sm:$0xff]
        %v3217 = vld [vmem:[%s716 + $0x18] sm:$0xff]
        %v3218 = vld [vmem:[%s716 + $0x20] sm:$0xff]
        %v3219 = vld [vmem:[%s716 + $0x28] sm:$0xff]
        %v3220 = vld [vmem:[%s716 + $0x30] sm:$0xff]
        %v3221 = vld [vmem:[%s716 + $0x38] sm:$0xff]
        %v3222 = vld [vmem:[%s716 + $0x40] sm:$0xff]
        %v3223 = vld [vmem:[%s716 + $0x48] sm:$0xff]
        %v3224 = vld [vmem:[%s716 + $0x50] sm:$0xff]
        %v3225 = vld [vmem:[%s716 + $0x58] sm:$0xff]
        %v3226 = vld [vmem:[%s716 + $0x60] sm:$0xff]
        %v3227 = vld [vmem:[%s716 + $0x68] sm:$0xff]
        %v3228 = vld [vmem:[%s716 + $0x70] sm:$0xff]
        %v3229 = vld [vmem:[%s716 + $0x78] sm:$0xff]
        %v3230 = vld [vmem:[%s716 + $0x80] sm:$0xff]
        %v3231 = vld [vmem:[%s716 + $0x88] sm:$0xff]
        %v3232 = vld [vmem:[%s716 + $0x90] sm:$0xff]
        %v3233 = vld [vmem:[%s716 + $0x98] sm:$0xff]
        %v3234 = vld [vmem:[%s716 + $0xa0] sm:$0xff]
        %v3235 = vld [vmem:[%s716 + $0xa8] sm:$0xff]
        %v3236 = vld [vmem:[%s716 + $0xb0] sm:$0xff]
        %v3237 = vld [vmem:[%s716 + $0xb8] sm:$0xff]
        %v3238 = vld [vmem:[%s716 + $0xc0] sm:$0xff]
        %v3239 = vld [vmem:[%s716 + $0xc8] sm:$0xff]
        %v3240 = vld [vmem:[%s716 + $0xd0] sm:$0xff]
        %v3241 = vld [vmem:[%s716 + $0xd8] sm:$0xff]
        %v3242 = vld [vmem:[%s716 + $0xe0] sm:$0xff]
        %v3243 = vld [vmem:[%s716 + $0xe8] sm:$0xff]
        %v3244 = vld [vmem:[%s716 + $0xf0] sm:$0xff]
        %v3245 = vld [vmem:[%s716 + $0xf8] sm:$0xff]
        %v3246 = vld [vmem:[%s716 + $0x100] sm:$0xff]
        %v3247 = vld [vmem:[%s716 + $0x108] sm:$0xff]
        %v3248 = vld [vmem:[%s716 + $0x110] sm:$0xff]
        %v3249 = vld [vmem:[%s716 + $0x118] sm:$0xff]
        %v3250 = vld [vmem:[%s716 + $0x120] sm:$0xff]
        %v3251 = vld [vmem:[%s716 + $0x128] sm:$0xff]
        %v3252 = vld [vmem:[%s716 + $0x130] sm:$0xff]
        %v3253 = vld [vmem:[%s716 + $0x138] sm:$0xff]
        %v3254 = vld [vmem:[%s716 + $0x140] sm:$0xff]
        %v3255 = vld [vmem:[%s716 + $0x148] sm:$0xff]
        %v3256 = vld [vmem:[%s716 + $0x150] sm:$0xff]
        %v3257 = vld [vmem:[%s716 + $0x158] sm:$0xff]
        %v3258 = vld [vmem:[%s716 + $0x160] sm:$0xff]
        %v3259 = vld [vmem:[%s716 + $0x168] sm:$0xff]
        %v3260 = vld [vmem:[%s716 + $0x170] sm:$0xff]
        %v3261 = vld [vmem:[%s716 + $0x178] sm:$0xff]
        %v3262 = vld [vmem:[%s716 + $0x180] sm:$0xff]
        %v3263 = vld [vmem:[%s716 + $0x188] sm:$0xff]
        %v3264 = vld [vmem:[%s716 + $0x190] sm:$0xff]
        %v3265 = vld [vmem:[%s716 + $0x198] sm:$0xff]
        %v3266 = vld [vmem:[%s716 + $0x1a0] sm:$0xff]
        %v3267 = vld [vmem:[%s716 + $0x1a8] sm:$0xff]
        %v3268 = vld [vmem:[%s716 + $0x1b0] sm:$0xff]
        %v3269 = vld [vmem:[%s716 + $0x1b8] sm:$0xff]
        %v3270 = vld [vmem:[%s716 + $0x1c0] sm:$0xff]
        %v3271 = vld [vmem:[%s716 + $0x1c8] sm:$0xff]
        %v3272 = vld [vmem:[%s716 + $0x1d0] sm:$0xff]
        %v3273 = vld [vmem:[%s716 + $0x1d8] sm:$0xff]
        %v3274 = vld [vmem:[%s716 + $0x1e0] sm:$0xff]
        %v3275 = vld [vmem:[%s716 + $0x1e8] sm:$0xff]
        %v3276 = vld [vmem:[%s716 + $0x1f0] sm:$0xff]
        %v3277 = vld [vmem:[%s716 + $0x1f8] sm:$0xff]
        %v3278 = vld [vmem:[%s716 + $0x200] sm:$0xff]
        %v3279 = vld [vmem:[%s716 + $0x208] sm:$0xff]
        %v3280 = vld [vmem:[%s716 + $0x210] sm:$0xff]
        %v3281 = vld [vmem:[%s716 + $0x218] sm:$0xff]
        %v3282 = vld [vmem:[%s716 + $0x220] sm:$0xff]
        %v3283 = vld [vmem:[%s716 + $0x228] sm:$0xff]
        %v3284 = vld [vmem:[%s716 + $0x230] sm:$0xff]
        %v3285 = vld [vmem:[%s716 + $0x238] sm:$0xff]
        %v3286 = vld [vmem:[%s716 + $0x240] sm:$0xff]
        %v3287 = vld [vmem:[%s716 + $0x248] sm:$0xff]
        %v3288 = vld [vmem:[%s716 + $0x250] sm:$0xff]
        %v3289 = vld [vmem:[%s716 + $0x258] sm:$0xff]
        %v3290 = vld [vmem:[%s716 + $0x260] sm:$0xff]
        %v3291 = vld [vmem:[%s716 + $0x268] sm:$0xff]
        %v3292 = vld [vmem:[%s716 + $0x270] sm:$0xff]
        %v3293 = vld [vmem:[%s716 + $0x278] sm:$0xff]
        %v3294 = vld [vmem:[%s716 + $0x280] sm:$0xff]
        %v3295 = vld [vmem:[%s716 + $0x288] sm:$0xff]
        %v3296 = vld [vmem:[%s716 + $0x290] sm:$0xff]
        %v3297 = vld [vmem:[%s716 + $0x298] sm:$0xff]
        %v3298 = vld [vmem:[%s716 + $0x2a0] sm:$0xff]
        %v3299 = vld [vmem:[%s716 + $0x2a8] sm:$0xff]
        %v3300 = vld [vmem:[%s716 + $0x2b0] sm:$0xff]
        %v3301 = vld [vmem:[%s716 + $0x2b8] sm:$0xff]
        %v3302 = vld [vmem:[%s716 + $0x2c0] sm:$0xff]
        %v3303 = vld [vmem:[%s716 + $0x2c8] sm:$0xff]
        %v3304 = vld [vmem:[%s716 + $0x2d0] sm:$0xff]
        %v3305 = vld [vmem:[%s716 + $0x2d8] sm:$0xff]
        %v3306 = vld [vmem:[%s716 + $0x2e0] sm:$0xff]
        %v3307 = vld [vmem:[%s716 + $0x2e8] sm:$0xff]
        %v3308 = vld [vmem:[%s716 + $0x2f0] sm:$0xff]
        %v3309 = vld [vmem:[%s716 + $0x2f8] sm:$0xff]
        %v3310 = vld [vmem:[%s716 + $0x300] sm:$0xff]
        %v3311 = vld [vmem:[%s716 + $0x308] sm:$0xff]
        %v3312 = vld [vmem:[%s724] sm:$0x1]
        %v3314 = vlaneseq
        %v3315 = vshrl.u32 %v3314, 7
        %v3316 = vsub.s32 0, %v3315
        %v3317 = vrot.slane %v3312, %v3316
        %vm3319 = vcmask 130048
        %v3321 = vsel %vm3319, %v3108, 0
        %v3324 = vsel %vm3319, %v3115, 0
        %v3327 = vsel %vm3319, %v3122, 0
        %v3330 = vsel %vm3319, %v3129, 0
        %v3333 = vsel %vm3319, %v3136, 0
        %v3336 = vsel %vm3319, %v3143, 0
        %v3339 = vsel %vm3319, %v3150, 0
        %v3342 = vsel %vm3319, %v3157, 0
        %v3345 = vsel %vm3319, %v3164, 0
        %v3348 = vsel %vm3319, %v3171, 0
        %v3351 = vsel %vm3319, %v3178, 0
        %v3354 = vsel %vm3319, %v3185, 0
        %v3357 = vsel %vm3319, %v3192, 0
        %v3360 = vsel %vm3319, %v3199, 0
        %v3363 = vsel %vm3319, %v3206, 0
        %v3366 = vsel %vm3319, %v3213, 0
        %3368 = vmatprep.subr.mxu0 0.0
        %3369 = vmatpush1.msra.mxu0 %v3214
        %3370 = vmatprep.subr.mxu0 0.0
        %3371 = vmatpush1.msra.mxu0 %v3215
        %3372 = vmatprep.subr.mxu0 0.0
        %3373 = vmatpush1.msra.mxu0 %v3216
        %3374 = vmatprep.subr.mxu0 0.0
        %3375 = vmatpush1.msra.mxu0 %v3217
        %3376 = vmatprep.subr.mxu0 0.0
        %3377 = vmatpush1.msra.mxu0 %v3218
        %3378 = vmatprep.subr.mxu0 0.0
        %3379 = vmatpush1.msra.mxu0 %v3219
        %3380 = vmatprep.subr.mxu0 0.0
        %3381 = vmatpush1.msra.mxu0 %v3220
        %3382 = vmatprep.subr.mxu0 0.0
        %3383 = vmatpush1.msra.mxu0 %v3221
        %3384 = vmatprep.subr.mxu0 0.0
        %3385 = vmatpush1.msra.mxu0 %v3222
        %3386 = vmatprep.subr.mxu0 0.0
        %3387 = vmatpush1.msra.mxu0 %v3223
        %3388 = vmatprep.subr.mxu0 0.0
        %3389 = vmatpush1.msra.mxu0 %v3224
        %3390 = vmatprep.subr.mxu0 0.0
        %3391 = vmatpush1.msra.mxu0 %v3225
        %3392 = vmatprep.subr.mxu0 0.0
        %3393 = vmatpush1.msra.mxu0 %v3226
        %3394 = vmatprep.subr.mxu0 0.0
        %3395 = vmatpush1.msra.mxu0 %v3227
        %3396 = vmatprep.subr.mxu0 0.0
        %3397 = vmatpush1.msra.mxu0 %v3228
        %3398 = vmatprep.subr.mxu0 0.0
        %3399 = vmatpush1.msra.mxu0 %v3229
        %3400 = vmatprep.subr.mxu0 0.0
        %3401 = vmatpush1.msra.mxu0 %v3230
        %3402 = vmatprep.subr.mxu0 0.0
        %3403 = vmatpush1.msra.mxu0 %v3231
        %3404 = vmatprep.subr.mxu0 0.0
        %3405 = vmatpush1.msra.mxu0 %v3232
        %3406 = vmatprep.subr.mxu0 0.0
        %3407 = vmatpush1.msra.mxu0 %v3233
        %3408 = vmatprep.subr.mxu0 0.0
        %3409 = vmatpush1.msra.mxu0 %v3234
        %3410 = vmatprep.subr.mxu0 0.0
        %3411 = vmatpush1.msra.mxu0 %v3235
        %3412 = vmatprep.subr.mxu0 0.0
        %3413 = vmatpush1.msra.mxu0 %v3236
        %3414 = vmatprep.subr.mxu0 0.0
        %3415 = vmatpush1.msra.mxu0 %v3237
        %3416 = vmatprep.subr.mxu0 0.0
        %3417 = vmatpush1.msra.mxu0 %v3238
        %3418 = vmatprep.subr.mxu0 0.0
        %3419 = vmatpush1.msra.mxu0 %v3239
        %3420 = vmatprep.subr.mxu0 0.0
        %3421 = vmatpush1.msra.mxu0 %v3240
        %3422 = vmatprep.subr.mxu0 0.0
        %3423 = vmatpush1.msra.mxu0 %v3241
        %3424 = vmatprep.subr.mxu0 0.0
        %3425 = vmatpush1.msra.mxu0 %v3242
        %3426 = vmatprep.subr.mxu0 0.0
        %3427 = vmatpush1.msra.mxu0 %v3243
        %3428 = vmatprep.subr.mxu0 0.0
        %3429 = vmatpush1.msra.mxu0 %v3244
        %3430 = vmatprep.subr.mxu0 0.0
        %3431 = vmatpush1.msra.mxu0 %v3245
        %3432 = vmatprep.mubr.f32.mxu0 %v3103
        %3433 = vmatmul.mubr.f32.gmra.mrb[0].mxu0 %v3102
        %v3434 = vpop.f32.mrb[0].mxu0
        %v3435 = vadd.f32 %v3317, %v3434
        %v3436 = vpop.f32.mrb[0].mxu0
        %3437 = vmatprep.mubr.f32.mxu0 %v3110
        %3438 = vmatmul.mubr.f32.gmra.mrb[0].mxu0 %v3109
        %v3439 = vpop.f32.mrb[0].mxu0
        %v3440 = vadd.f32 %v3317, %v3439
        %v3441 = vpop.f32.mrb[0].mxu0
        %3442 = vmatprep.mubr.f32.mxu0 %v3117
        %3443 = vmatmul.mubr.f32.gmra.mrb[0].mxu0 %v3116
        %v3444 = vpop.f32.mrb[0].mxu0
        %v3445 = vadd.f32 %v3317, %v3444
        %v3446 = vpop.f32.mrb[0].mxu0
        %3447 = vmatprep.mubr.f32.mxu0 %v3124
        %3448 = vmatmul.mubr.f32.gmra.mrb[0].mxu0 %v3123
        %v3449 = vpop.f32.mrb[0].mxu0
        %v3450 = vadd.f32 %v3317, %v3449
        %v3451 = vpop.f32.mrb[0].mxu0
        %3452 = vmatprep.mubr.f32.mxu0 %v3131
        %3453 = vmatmul.mubr.f32.gmra.mrb[0].mxu0 %v3130
        %v3454 = vpop.f32.mrb[0].mxu0
        %v3455 = vadd.f32 %v3317, %v3454
        %v3456 = vpop.f32.mrb[0].mxu0
        %3457 = vmatprep.mubr.f32.mxu0 %v3138
        %3458 = vmatmul.mubr.f32.gmra.mrb[0].mxu0 %v3137
        %v3459 = vpop.f32.mrb[0].mxu0
        %v3460 = vadd.f32 %v3317, %v3459
        %v3461 = vpop.f32.mrb[0].mxu0
        %3462 = vmatprep.mubr.f32.mxu0 %v3145
        %3463 = vmatmul.mubr.f32.gmra.mrb[0].mxu0 %v3144
        %v3464 = vpop.f32.mrb[0].mxu0
        %v3465 = vadd.f32 %v3317, %v3464
        %v3466 = vpop.f32.mrb[0].mxu0
        %3467 = vmatprep.mubr.f32.mxu0 %v3152
        %3468 = vmatmul.mubr.f32.gmra.mrb[0].mxu0 %v3151
        %v3469 = vpop.f32.mrb[0].mxu0
        %v3470 = vadd.f32 %v3317, %v3469
        %v3471 = vpop.f32.mrb[0].mxu0
        %3472 = vmatprep.mubr.f32.mxu0 %v3159
        %3473 = vmatmul.mubr.f32.gmra.mrb[0].mxu0 %v3158
        %v3474 = vpop.f32.mrb[0].mxu0
        %v3475 = vadd.f32 %v3317, %v3474
        %v3476 = vpop.f32.mrb[0].mxu0
        %3477 = vmatprep.mubr.f32.mxu0 %v3166
        %3478 = vmatmul.mubr.f32.gmra.mrb[0].mxu0 %v3165
        %v3479 = vpop.f32.mrb[0].mxu0
        %v3480 = vadd.f32 %v3317, %v3479
        %v3481 = vpop.f32.mrb[0].mxu0
        %3482 = vmatprep.mubr.f32.mxu0 %v3173
        %3483 = vmatmul.mubr.f32.gmra.mrb[0].mxu0 %v3172
        %v3484 = vpop.f32.mrb[0].mxu0
        %v3485 = vadd.f32 %v3317, %v3484
        %v3486 = vpop.f32.mrb[0].mxu0
        %3487 = vmatprep.mubr.f32.mxu0 %v3180
        %3488 = vmatmul.mubr.f32.gmra.mrb[0].mxu0 %v3179
        %v3489 = vpop.f32.mrb[0].mxu0
        %v3490 = vadd.f32 %v3317, %v3489
        %v3491 = vpop.f32.mrb[0].mxu0
        %3492 = vmatprep.mubr.f32.mxu0 %v3187
        %3493 = vmatmul.mubr.f32.gmra.mrb[0].mxu0 %v3186
        %v3494 = vpop.f32.mrb[0].mxu0
        %v3495 = vadd.f32 %v3317, %v3494
        %v3496 = vpop.f32.mrb[0].mxu0
        %3497 = vmatprep.mubr.f32.mxu0 %v3194
        %3498 = vmatmul.mubr.f32.gmra.mrb[0].mxu0 %v3193
        %v3499 = vpop.f32.mrb[0].mxu0
        %v3500 = vadd.f32 %v3317, %v3499
        %v3501 = vpop.f32.mrb[0].mxu0
        %3502 = vmatprep.mubr.f32.mxu0 %v3201
        %3503 = vmatmul.mubr.f32.gmra.mrb[0].mxu0 %v3200
        %v3504 = vpop.f32.mrb[0].mxu0
        %v3505 = vadd.f32 %v3317, %v3504
        %v3506 = vpop.f32.mrb[0].mxu0
        %3507 = vmatprep.mubr.f32.mxu0 %v3208
        %3508 = vmatmul.mubr.f32.gmra.mrb[0].mxu0 %v3207
        %v3509 = vpop.f32.mrb[0].mxu0
        %v3510 = vadd.f32 %v3317, %v3509
        %v3511 = vpop.f32.mrb[0].mxu0
        %3512 = vdwg.mxu0
        %3513 = vmatprep.subr.mxu0 0.0
        %3514 = vmatpush1.msra.mxu0 %v3246
        %3515 = vmatprep.subr.mxu0 0.0
        %3516 = vmatpush1.msra.mxu0 %v3247
        %3517 = vmatprep.subr.mxu0 0.0
        %3518 = vmatpush1.msra.mxu0 %v3248
        %3519 = vmatprep.subr.mxu0 0.0
        %3520 = vmatpush1.msra.mxu0 %v3249
        %3521 = vmatprep.subr.mxu0 0.0
        %3522 = vmatpush1.msra.mxu0 %v3250
        %3523 = vmatprep.subr.mxu0 0.0
        %3524 = vmatpush1.msra.mxu0 %v3251
        %3525 = vmatprep.subr.mxu0 0.0
        %3526 = vmatpush1.msra.mxu0 %v3252
        %3527 = vmatprep.subr.mxu0 0.0
        %3528 = vmatpush1.msra.mxu0 %v3253
        %3529 = vmatprep.subr.mxu0 0.0
        %3530 = vmatpush1.msra.mxu0 %v3254
        %3531 = vmatprep.subr.mxu0 0.0
        %3532 = vmatpush1.msra.mxu0 %v3255
        %3533 = vmatprep.subr.mxu0 0.0
        %3534 = vmatpush1.msra.mxu0 %v3256
        %3535 = vmatprep.subr.mxu0 0.0
        %3536 = vmatpush1.msra.mxu0 %v3257
        %3537 = vmatprep.subr.mxu0 0.0
        %3538 = vmatpush1.msra.mxu0 %v3258
        %3539 = vmatprep.subr.mxu0 0.0
        %3540 = vmatpush1.msra.mxu0 %v3259
        %3541 = vmatprep.subr.mxu0 0.0
        %3542 = vmatpush1.msra.mxu0 %v3260
        %3543 = vmatprep.subr.mxu0 0.0
        %3544 = vmatpush1.msra.mxu0 %v3261
        %3545 = vmatprep.subr.mxu0 0.0
        %3546 = vmatpush1.msra.mxu0 %v3262
        %3547 = vmatprep.subr.mxu0 0.0
        %3548 = vmatpush1.msra.mxu0 %v3263
        %3549 = vmatprep.subr.mxu0 0.0
        %3550 = vmatpush1.msra.mxu0 %v3264
        %3551 = vmatprep.subr.mxu0 0.0
        %3552 = vmatpush1.msra.mxu0 %v3265
        %3553 = vmatprep.subr.mxu0 0.0
        %3554 = vmatpush1.msra.mxu0 %v3266
        %3555 = vmatprep.subr.mxu0 0.0
        %3556 = vmatpush1.msra.mxu0 %v3267
        %3557 = vmatprep.subr.mxu0 0.0
        %3558 = vmatpush1.msra.mxu0 %v3268
        %3559 = vmatprep.subr.mxu0 0.0
        %3560 = vmatpush1.msra.mxu0 %v3269
        %3561 = vmatprep.subr.mxu0 0.0
        %3562 = vmatpush1.msra.mxu0 %v3270
        %3563 = vmatprep.subr.mxu0 0.0
        %3564 = vmatpush1.msra.mxu0 %v3271
        %3565 = vmatprep.subr.mxu0 0.0
        %3566 = vmatpush1.msra.mxu0 %v3272
        %3567 = vmatprep.subr.mxu0 0.0
        %3568 = vmatpush1.msra.mxu0 %v3273
        %3569 = vmatprep.subr.mxu0 0.0
        %3570 = vmatpush1.msra.mxu0 %v3274
        %3571 = vmatprep.subr.mxu0 0.0
        %3572 = vmatpush1.msra.mxu0 %v3275
        %3573 = vmatprep.subr.mxu0 0.0
        %3574 = vmatpush1.msra.mxu0 %v3276
        %3575 = vmatprep.subr.mxu0 0.0
        %3576 = vmatpush1.msra.mxu0 %v3277
        %3577 = vmatprep.mubr.f32.mxu0 %v3105
        %3578 = vmatmul.mubr.f32.gmra.mrb[0].mxu0 %v3104
        %v3579 = vpop.f32.mrb[0].mxu0
        %v3580 = vadd.f32 %v3435, %v3579
        %v3581 = vpop.f32.mrb[0].mxu0
        %3582 = vmatprep.mubr.f32.mxu0 %v3112
        %3583 = vmatmul.mubr.f32.gmra.mrb[0].mxu0 %v3111
        %v3584 = vpop.f32.mrb[0].mxu0
        %v3585 = vadd.f32 %v3440, %v3584
        %v3586 = vpop.f32.mrb[0].mxu0
        %3587 = vmatprep.mubr.f32.mxu0 %v3119
        %3588 = vmatmul.mubr.f32.gmra.mrb[0].mxu0 %v3118
        %v3589 = vpop.f32.mrb[0].mxu0
        %v3590 = vadd.f32 %v3445, %v3589
        %v3591 = vpop.f32.mrb[0].mxu0
        %3592 = vmatprep.mubr.f32.mxu0 %v3126
        %3593 = vmatmul.mubr.f32.gmra.mrb[0].mxu0 %v3125
        %v3594 = vpop.f32.mrb[0].mxu0
        %v3595 = vadd.f32 %v3450, %v3594
        %v3596 = vpop.f32.mrb[0].mxu0
        %3597 = vmatprep.mubr.f32.mxu0 %v3133
        %3598 = vmatmul.mubr.f32.gmra.mrb[0].mxu0 %v3132
        %v3599 = vpop.f32.mrb[0].mxu0
        %v3600 = vadd.f32 %v3455, %v3599
        %v3601 = vpop.f32.mrb[0].mxu0
        %3602 = vmatprep.mubr.f32.mxu0 %v3140
        %3603 = vmatmul.mubr.f32.gmra.mrb[0].mxu0 %v3139
        %v3604 = vpop.f32.mrb[0].mxu0
        %v3605 = vadd.f32 %v3460, %v3604
        %v3606 = vpop.f32.mrb[0].mxu0
        %3607 = vmatprep.mubr.f32.mxu0 %v3147
        %3608 = vmatmul.mubr.f32.gmra.mrb[0].mxu0 %v3146
        %v3609 = vpop.f32.mrb[0].mxu0
        %v3610 = vadd.f32 %v3465, %v3609
        %v3611 = vpop.f32.mrb[0].mxu0
        %3612 = vmatprep.mubr.f32.mxu0 %v3154
        %3613 = vmatmul.mubr.f32.gmra.mrb[0].mxu0 %v3153
        %v3614 = vpop.f32.mrb[0].mxu0
        %v3615 = vadd.f32 %v3470, %v3614
        %v3616 = vpop.f32.mrb[0].mxu0
        %3617 = vmatprep.mubr.f32.mxu0 %v3161
        %3618 = vmatmul.mubr.f32.gmra.mrb[0].mxu0 %v3160
        %v3619 = vpop.f32.mrb[0].mxu0
        %v3620 = vadd.f32 %v3475, %v3619
        %v3621 = vpop.f32.mrb[0].mxu0
        %3622 = vmatprep.mubr.f32.mxu0 %v3168
        %3623 = vmatmul.mubr.f32.gmra.mrb[0].mxu0 %v3167
        %v3624 = vpop.f32.mrb[0].mxu0
        %v3625 = vadd.f32 %v3480, %v3624
        %v3626 = vpop.f32.mrb[0].mxu0
        %3627 = vmatprep.mubr.f32.mxu0 %v3175
        %3628 = vmatmul.mubr.f32.gmra.mrb[0].mxu0 %v3174
        %v3629 = vpop.f32.mrb[0].mxu0
        %v3630 = vadd.f32 %v3485, %v3629
        %v3631 = vpop.f32.mrb[0].mxu0
        %3632 = vmatprep.mubr.f32.mxu0 %v3182
        %3633 = vmatmul.mubr.f32.gmra.mrb[0].mxu0 %v3181
        %v3634 = vpop.f32.mrb[0].mxu0
        %v3635 = vadd.f32 %v3490, %v3634
        %v3636 = vpop.f32.mrb[0].mxu0
        %3637 = vmatprep.mubr.f32.mxu0 %v3189
        %3638 = vmatmul.mubr.f32.gmra.mrb[0].mxu0 %v3188
        %v3639 = vpop.f32.mrb[0].mxu0
        %v3640 = vadd.f32 %v3495, %v3639
        %v3641 = vpop.f32.mrb[0].mxu0
        %3642 = vmatprep.mubr.f32.mxu0 %v3196
        %3643 = vmatmul.mubr.f32.gmra.mrb[0].mxu0 %v3195
        %v3644 = vpop.f32.mrb[0].mxu0
        %v3645 = vadd.f32 %v3500, %v3644
        %v3646 = vpop.f32.mrb[0].mxu0
        %3647 = vmatprep.mubr.f32.mxu0 %v3203
        %3648 = vmatmul.mubr.f32.gmra.mrb[0].mxu0 %v3202
        %v3649 = vpop.f32.mrb[0].mxu0
        %v3650 = vadd.f32 %v3505, %v3649
        %v3651 = vpop.f32.mrb[0].mxu0
        %3652 = vmatprep.mubr.f32.mxu0 %v3210
        %3653 = vmatmul.mubr.f32.gmra.mrb[0].mxu0 %v3209
        %v3654 = vpop.f32.mrb[0].mxu0
        %v3655 = vadd.f32 %v3510, %v3654
        %v3656 = vpop.f32.mrb[0].mxu0
        %3657 = vdwg.mxu0
        %3658 = vmatprep.subr.mxu0 0.0
        %3659 = vmatpush1.msra.mxu0 %v3278
        %3660 = vmatprep.subr.mxu0 0.0
        %3661 = vmatpush1.msra.mxu0 %v3279
        %3662 = vmatprep.subr.mxu0 0.0
        %3663 = vmatpush1.msra.mxu0 %v3280
        %3664 = vmatprep.subr.mxu0 0.0
        %3665 = vmatpush1.msra.mxu0 %v3281
        %3666 = vmatprep.subr.mxu0 0.0
        %3667 = vmatpush1.msra.mxu0 %v3282
        %3668 = vmatprep.subr.mxu0 0.0
        %3669 = vmatpush1.msra.mxu0 %v3283
        %3670 = vmatprep.subr.mxu0 0.0
        %3671 = vmatpush1.msra.mxu0 %v3284
        %3672 = vmatprep.subr.mxu0 0.0
        %3673 = vmatpush1.msra.mxu0 %v3285
        %3674 = vmatprep.subr.mxu0 0.0
        %3675 = vmatpush1.msra.mxu0 %v3286
        %3676 = vmatprep.subr.mxu0 0.0
        %3677 = vmatpush1.msra.mxu0 %v3287
        %3678 = vmatprep.subr.mxu0 0.0
        %3679 = vmatpush1.msra.mxu0 %v3288
        %3680 = vmatprep.subr.mxu0 0.0
        %3681 = vmatpush1.msra.mxu0 %v3289
        %3682 = vmatprep.subr.mxu0 0.0
        %3683 = vmatpush1.msra.mxu0 %v3290
        %3684 = vmatprep.subr.mxu0 0.0
        %3685 = vmatpush1.msra.mxu0 %v3291
        %3686 = vmatprep.subr.mxu0 0.0
        %3687 = vmatpush1.msra.mxu0 %v3292
        %3688 = vmatprep.subr.mxu0 0.0
        %3689 = vmatpush1.msra.mxu0 %v3293
        %3690 = vmatprep.subr.mxu0 0.0
        %3691 = vmatpush1.msra.mxu0 %v3294
        %3692 = vmatprep.subr.mxu0 0.0
        %3693 = vmatpush1.msra.mxu0 %v3295
        %3694 = vmatprep.subr.mxu0 0.0
        %3695 = vmatpush1.msra.mxu0 %v3296
        %3696 = vmatprep.subr.mxu0 0.0
        %3697 = vmatpush1.msra.mxu0 %v3297
        %3698 = vmatprep.subr.mxu0 0.0
        %3699 = vmatpush1.msra.mxu0 %v3298
        %3700 = vmatprep.subr.mxu0 0.0
        %3701 = vmatpush1.msra.mxu0 %v3299
        %3702 = vmatprep.subr.mxu0 0.0
        %3703 = vmatpush1.msra.mxu0 %v3300
        %3704 = vmatprep.subr.mxu0 0.0
        %3705 = vmatpush1.msra.mxu0 %v3301
        %3706 = vmatprep.subr.mxu0 0.0
        %3707 = vmatpush1.msra.mxu0 %v3302
        %3708 = vmatprep.subr.mxu0 0.0
        %3709 = vmatpush1.msra.mxu0 %v3303
        %3710 = vmatprep.subr.mxu0 0.0
        %3711 = vmatpush1.msra.mxu0 %v3304
        %3712 = vmatprep.subr.mxu0 0.0
        %3713 = vmatpush1.msra.mxu0 %v3305
        %3714 = vmatprep.subr.mxu0 0.0
        %3715 = vmatpush1.msra.mxu0 %v3306
        %3716 = vmatprep.subr.mxu0 0.0
        %3717 = vmatpush1.msra.mxu0 %v3307
        %3718 = vmatprep.subr.mxu0 0.0
        %3719 = vmatpush1.msra.mxu0 %v3308
        %3720 = vmatprep.subr.mxu0 0.0
        %3721 = vmatpush1.msra.mxu0 %v3309
        %3722 = vmatprep.mubr.f32.mxu0 %v3107
        %3723 = vmatmul.mubr.f32.gmra.mrb[0].mxu0 %v3106
        %v3724 = vpop.f32.mrb[0].mxu0
        %v3725 = vadd.f32 %v3580, %v3724
        %v3726 = vpop.f32.mrb[0].mxu0
        %3727 = vmatprep.mubr.f32.mxu0 %v3114
        %3728 = vmatmul.mubr.f32.gmra.mrb[0].mxu0 %v3113
        %v3729 = vpop.f32.mrb[0].mxu0
        %v3730 = vadd.f32 %v3585, %v3729
        %v3731 = vpop.f32.mrb[0].mxu0
        %3732 = vmatprep.mubr.f32.mxu0 %v3121
        %3733 = vmatmul.mubr.f32.gmra.mrb[0].mxu0 %v3120
        %v3734 = vpop.f32.mrb[0].mxu0
        %v3735 = vadd.f32 %v3590, %v3734
        %v3736 = vpop.f32.mrb[0].mxu0
        %3737 = vmatprep.mubr.f32.mxu0 %v3128
        %3738 = vmatmul.mubr.f32.gmra.mrb[0].mxu0 %v3127
        %v3739 = vpop.f32.mrb[0].mxu0
        %v3740 = vadd.f32 %v3595, %v3739
        %v3741 = vpop.f32.mrb[0].mxu0
        %3742 = vmatprep.mubr.f32.mxu0 %v3135
        %3743 = vmatmul.mubr.f32.gmra.mrb[0].mxu0 %v3134
        %v3744 = vpop.f32.mrb[0].mxu0
        %v3745 = vadd.f32 %v3600, %v3744
        %v3746 = vpop.f32.mrb[0].mxu0
        %3747 = vmatprep.mubr.f32.mxu0 %v3142
        %3748 = vmatmul.mubr.f32.gmra.mrb[0].mxu0 %v3141
        %v3749 = vpop.f32.mrb[0].mxu0
        %v3750 = vadd.f32 %v3605, %v3749
        %v3751 = vpop.f32.mrb[0].mxu0
        %3752 = vmatprep.mubr.f32.mxu0 %v3149
        %3753 = vmatmul.mubr.f32.gmra.mrb[0].mxu0 %v3148
        %v3754 = vpop.f32.mrb[0].mxu0
        %v3755 = vadd.f32 %v3610, %v3754
        %v3756 = vpop.f32.mrb[0].mxu0
        %3757 = vmatprep.mubr.f32.mxu0 %v3156
        %3758 = vmatmul.mubr.f32.gmra.mrb[0].mxu0 %v3155
        %v3759 = vpop.f32.mrb[0].mxu0
        %v3760 = vadd.f32 %v3615, %v3759
        %v3761 = vpop.f32.mrb[0].mxu0
        %3762 = vmatprep.mubr.f32.mxu0 %v3163
        %3763 = vmatmul.mubr.f32.gmra.mrb[0].mxu0 %v3162
        %v3764 = vpop.f32.mrb[0].mxu0
        %v3765 = vadd.f32 %v3620, %v3764
        %v3766 = vpop.f32.mrb[0].mxu0
        %3767 = vmatprep.mubr.f32.mxu0 %v3170
        %3768 = vmatmul.mubr.f32.gmra.mrb[0].mxu0 %v3169
        %v3769 = vpop.f32.mrb[0].mxu0
        %v3770 = vadd.f32 %v3625, %v3769
        %v3771 = vpop.f32.mrb[0].mxu0
        %3772 = vmatprep.mubr.f32.mxu0 %v3177
        %3773 = vmatmul.mubr.f32.gmra.mrb[0].mxu0 %v3176
        %v3774 = vpop.f32.mrb[0].mxu0
        %v3775 = vadd.f32 %v3630, %v3774
        %v3776 = vpop.f32.mrb[0].mxu0
        %3777 = vmatprep.mubr.f32.mxu0 %v3184
        %3778 = vmatmul.mubr.f32.gmra.mrb[0].mxu0 %v3183
        %v3779 = vpop.f32.mrb[0].mxu0
        %v3780 = vadd.f32 %v3635, %v3779
        %v3781 = vpop.f32.mrb[0].mxu0
        %3782 = vmatprep.mubr.f32.mxu0 %v3191
        %3783 = vmatmul.mubr.f32.gmra.mrb[0].mxu0 %v3190
        %v3784 = vpop.f32.mrb[0].mxu0
        %v3785 = vadd.f32 %v3640, %v3784
        %v3786 = vpop.f32.mrb[0].mxu0
        %3787 = vmatprep.mubr.f32.mxu0 %v3198
        %3788 = vmatmul.mubr.f32.gmra.mrb[0].mxu0 %v3197
        %v3789 = vpop.f32.mrb[0].mxu0
        %v3790 = vadd.f32 %v3645, %v3789
        %v3791 = vpop.f32.mrb[0].mxu0
        %3792 = vmatprep.mubr.f32.mxu0 %v3205
        %3793 = vmatmul.mubr.f32.gmra.mrb[0].mxu0 %v3204
        %v3794 = vpop.f32.mrb[0].mxu0
        %v3795 = vadd.f32 %v3650, %v3794
        %v3796 = vpop.f32.mrb[0].mxu0
        %3797 = vmatprep.mubr.f32.mxu0 %v3212
        %3798 = vmatmul.mubr.f32.gmra.mrb[0].mxu0 %v3211
        %v3799 = vpop.f32.mrb[0].mxu0
        %v3800 = vadd.f32 %v3655, %v3799
        %v3801 = vpop.f32.mrb[0].mxu0
        %3802 = vdwg.mxu0
        %3803 = vmatprep.subr.mxu0 0.0
        %3804 = vmatpush1.msra.mxu0 %v3310
        %3805 = vmatprep.subr.mxu0 0.0
        %3806 = vmatpush1.msra.mxu0 %v3311
        %3807 = vmatprep.subr.mxu0 0.0
        %3808 = vmatpush1.msra.mxu0 0.0
        %3809 = vmatprep.subr.mxu0 0.0
        %3810 = vmatpush1.msra.mxu0 0.0
        %3811 = vmatprep.subr.mxu0 0.0
        %3812 = vmatpush1.msra.mxu0 0.0
        %3813 = vmatprep.subr.mxu0 0.0
        %3814 = vmatpush1.msra.mxu0 0.0
        %3815 = vmatprep.subr.mxu0 0.0
        %3816 = vmatpush1.msra.mxu0 0.0
        %3817 = vmatprep.subr.mxu0 0.0
        %3818 = vmatpush1.msra.mxu0 0.0
        %3819 = vmatprep.subr.mxu0 0.0
        %3820 = vmatpush1.msra.mxu0 0.0
        %3821 = vmatprep.subr.mxu0 0.0
        %3822 = vmatpush1.msra.mxu0 0.0
        %3823 = vmatprep.subr.mxu0 0.0
        %3824 = vmatpush1.msra.mxu0 0.0
        %3825 = vmatprep.subr.mxu0 0.0
        %3826 = vmatpush1.msra.mxu0 0.0
        %3827 = vmatprep.subr.mxu0 0.0
        %3828 = vmatpush1.msra.mxu0 0.0
        %3829 = vmatprep.subr.mxu0 0.0
        %3830 = vmatpush1.msra.mxu0 0.0
        %3831 = vmatprep.subr.mxu0 0.0
        %3832 = vmatpush1.msra.mxu0 0.0
        %3833 = vmatprep.subr.mxu0 0.0
        %3834 = vmatpush1.msra.mxu0 0.0
        %3835 = vmatprep.subr.mxu0 0.0
        %3836 = vmatpush1.msra.mxu0 0.0
        %3837 = vmatprep.subr.mxu0 0.0
        %3838 = vmatpush1.msra.mxu0 0.0
        %3839 = vmatprep.subr.mxu0 0.0
        %3840 = vmatpush1.msra.mxu0 0.0
        %3841 = vmatprep.subr.mxu0 0.0
        %3842 = vmatpush1.msra.mxu0 0.0
        %3843 = vmatprep.subr.mxu0 0.0
        %3844 = vmatpush1.msra.mxu0 0.0
        %3845 = vmatprep.subr.mxu0 0.0
        %3846 = vmatpush1.msra.mxu0 0.0
        %3847 = vmatprep.subr.mxu0 0.0
        %3848 = vmatpush1.msra.mxu0 0.0
        %3849 = vmatprep.subr.mxu0 0.0
        %3850 = vmatpush1.msra.mxu0 0.0
        %3851 = vmatprep.subr.mxu0 0.0
        %3852 = vmatpush1.msra.mxu0 0.0
        %3853 = vmatprep.subr.mxu0 0.0
        %3854 = vmatpush1.msra.mxu0 0.0
        %3855 = vmatprep.subr.mxu0 0.0
        %3856 = vmatpush1.msra.mxu0 0.0
        %3857 = vmatprep.subr.mxu0 0.0
        %3858 = vmatpush1.msra.mxu0 0.0
        %3859 = vmatprep.subr.mxu0 0.0
        %3860 = vmatpush1.msra.mxu0 0.0
        %3861 = vmatprep.subr.mxu0 0.0
        %3862 = vmatpush1.msra.mxu0 0.0
        %3863 = vmatprep.subr.mxu0 0.0
        %3864 = vmatpush1.msra.mxu0 0.0
        %3865 = vmatprep.subr.mxu0 0.0
        %3866 = vmatpush1.msra.mxu0 0.0
        %3867 = vmatprep.mubr.f32.mxu0 0.0
        %3868 = vmatmul.mubr.f32.gmra.mrb[0].mxu0 %v3321
        %v3869 = vpop.f32.mrb[0].mxu0
        %v3870 = vadd.f32 %v3725, %v3869
        %v3871 = vpop.f32.mrb[0].mxu0
        %3872 = vmatprep.mubr.f32.mxu0 0.0
        %3873 = vmatmul.mubr.f32.gmra.mrb[0].mxu0 %v3324
        %v3874 = vpop.f32.mrb[0].mxu0
        %v3875 = vadd.f32 %v3730, %v3874
        %v3876 = vpop.f32.mrb[0].mxu0
        %3877 = vmatprep.mubr.f32.mxu0 0.0
        %3878 = vmatmul.mubr.f32.gmra.mrb[0].mxu0 %v3327
        %v3879 = vpop.f32.mrb[0].mxu0
        %v3880 = vadd.f32 %v3735, %v3879
        %v3881 = vpop.f32.mrb[0].mxu0
        %3882 = vmatprep.mubr.f32.mxu0 0.0
        %3883 = vmatmul.mubr.f32.gmra.mrb[0].mxu0 %v3330
        %v3884 = vpop.f32.mrb[0].mxu0
        %v3885 = vadd.f32 %v3740, %v3884
        %v3886 = vpop.f32.mrb[0].mxu0
        %3887 = vmatprep.mubr.f32.mxu0 0.0
        %3888 = vmatmul.mubr.f32.gmra.mrb[0].mxu0 %v3333
        %v3889 = vpop.f32.mrb[0].mxu0
        %v3890 = vadd.f32 %v3745, %v3889
        %v3891 = vpop.f32.mrb[0].mxu0
        %3892 = vmatprep.mubr.f32.mxu0 0.0
        %3893 = vmatmul.mubr.f32.gmra.mrb[0].mxu0 %v3336
        %v3894 = vpop.f32.mrb[0].mxu0
        %v3895 = vadd.f32 %v3750, %v3894
        %v3896 = vpop.f32.mrb[0].mxu0
        %3897 = vmatprep.mubr.f32.mxu0 0.0
        %3898 = vmatmul.mubr.f32.gmra.mrb[0].mxu0 %v3339
        %v3899 = vpop.f32.mrb[0].mxu0
        %v3900 = vadd.f32 %v3755, %v3899
        %v3901 = vpop.f32.mrb[0].mxu0
        %3902 = vmatprep.mubr.f32.mxu0 0.0
        %3903 = vmatmul.mubr.f32.gmra.mrb[0].mxu0 %v3342
        %v3904 = vpop.f32.mrb[0].mxu0
        %v3905 = vadd.f32 %v3760, %v3904
        %v3906 = vpop.f32.mrb[0].mxu0
        %3907 = vmatprep.mubr.f32.mxu0 0.0
        %3908 = vmatmul.mubr.f32.gmra.mrb[0].mxu0 %v3345
        %v3909 = vpop.f32.mrb[0].mxu0
        %v3910 = vadd.f32 %v3765, %v3909
        %v3911 = vpop.f32.mrb[0].mxu0
        %3912 = vmatprep.mubr.f32.mxu0 0.0
        %3913 = vmatmul.mubr.f32.gmra.mrb[0].mxu0 %v3348
        %v3914 = vpop.f32.mrb[0].mxu0
        %v3915 = vadd.f32 %v3770, %v3914
        %v3916 = vpop.f32.mrb[0].mxu0
        %3917 = vmatprep.mubr.f32.mxu0 0.0
        %3918 = vmatmul.mubr.f32.gmra.mrb[0].mxu0 %v3351
        %v3919 = vpop.f32.mrb[0].mxu0
        %v3920 = vadd.f32 %v3775, %v3919
        %v3921 = vpop.f32.mrb[0].mxu0
        %3922 = vmatprep.mubr.f32.mxu0 0.0
        %3923 = vmatmul.mubr.f32.gmra.mrb[0].mxu0 %v3354
        %v3924 = vpop.f32.mrb[0].mxu0
        %v3925 = vadd.f32 %v3780, %v3924
        %v3926 = vpop.f32.mrb[0].mxu0
        %3927 = vmatprep.mubr.f32.mxu0 0.0
        %3928 = vmatmul.mubr.f32.gmra.mrb[0].mxu0 %v3357
        %v3929 = vpop.f32.mrb[0].mxu0
        %v3930 = vadd.f32 %v3785, %v3929
        %v3931 = vpop.f32.mrb[0].mxu0
        %3932 = vmatprep.mubr.f32.mxu0 0.0
        %3933 = vmatmul.mubr.f32.gmra.mrb[0].mxu0 %v3360
        %v3934 = vpop.f32.mrb[0].mxu0
        %v3935 = vadd.f32 %v3790, %v3934
        %v3936 = vpop.f32.mrb[0].mxu0
        %3937 = vmatprep.mubr.f32.mxu0 0.0
        %3938 = vmatmul.mubr.f32.gmra.mrb[0].mxu0 %v3363
        %v3939 = vpop.f32.mrb[0].mxu0
        %v3940 = vadd.f32 %v3795, %v3939
        %v3941 = vpop.f32.mrb[0].mxu0
        %3942 = vmatprep.mubr.f32.mxu0 0.0
        %3943 = vmatmul.mubr.f32.gmra.mrb[0].mxu0 %v3366
        %v3944 = vpop.f32.mrb[0].mxu0
        %v3945 = vadd.f32 %v3800, %v3944
        %v3946 = vpop.f32.mrb[0].mxu0
        %3947 = vdwg.mxu0
        %v3948 = vld [vmem:[#allocation2] sm:$0xff]
        %v3949 = vld [vmem:[#allocation2 + $0x8] sm:$0xff]
        %v3950 = vld [vmem:[#allocation2 + $0x10] sm:$0xff]
        %v3951 = vld [vmem:[#allocation2 + $0x18] sm:$0xff]
        %v3952 = vld [vmem:[#allocation2 + $0x20] sm:$0xff]
        %v3953 = vld [vmem:[#allocation2 + $0x28] sm:$0xff]
        %v3954 = vld [vmem:[#allocation2 + $0x30] sm:$0xff]
        %v3955 = vld [vmem:[#allocation2 + $0x38] sm:$0xff]
        %3956 = vxpose.xlu0.b32.start [1/16] %v982, 128
        %3957 = vxpose.xlu0.b32.cont [2/16] %v983, 128
        %3958 = vxpose.xlu0.b32.cont [3/16] %v984, 128
        %3959 = vxpose.xlu0.b32.cont [4/16] %v985, 128
        %3960 = vxpose.xlu0.b32.cont [5/16] %v986, 128
        %3961 = vxpose.xlu0.b32.cont [6/16] %v987, 128
        %3962 = vxpose.xlu0.b32.cont [7/16] %v988, 128
        %3963 = vxpose.xlu0.b32.cont [8/16] %v989, 128
        %3964 = vxpose.xlu0.b32.cont [9/16] %v990, 128
        %3965 = vxpose.xlu0.b32.cont [10/16] %v991, 128
        %3966 = vxpose.xlu0.b32.cont [11/16] %v992, 128
        %3967 = vxpose.xlu0.b32.cont [12/16] %v993, 128
        %3968 = vxpose.xlu0.b32.cont [13/16] %v994, 128
        %3969 = vxpose.xlu0.b32.cont [14/16] %v995, 128
        %3970 = vxpose.xlu0.b32.cont [15/16] %v996, 128
        %3971 = vxpose.xlu0.b32.end [16/16] %v997, 128
        %v3972 = vpop.trf.xlu0
        %v3973 = vpop.trf.xlu0
        %v3974 = vpop.trf.xlu0
        %v3975 = vpop.trf.xlu0
        %v3976 = vpop.trf.xlu0
        %v3977 = vpop.trf.xlu0
        %v3978 = vpop.trf.xlu0
        %v3979 = vpop.trf.xlu0
        %v3980 = vpop.trf.xlu0
        %v3981 = vpop.trf.xlu0
        %v3982 = vpop.trf.xlu0
        %v3983 = vpop.trf.xlu0
        %v3984 = vpop.trf.xlu0
        %v3985 = vpop.trf.xlu0
        %v3986 = vpop.trf.xlu0
        %v3987 = vpop.trf.xlu0
        %3988 = vmatprep.subr.mxu0 0.0
        %3989 = vmatpush1.msra.mxu0 %v3870
        %3990 = vmatprep.subr.mxu0 0.0
        %3991 = vmatpush1.msra.mxu0 %v3875
        %3992 = vmatprep.subr.mxu0 0.0
        %3993 = vmatpush1.msra.mxu0 %v3880
        %3994 = vmatprep.subr.mxu0 0.0
        %3995 = vmatpush1.msra.mxu0 %v3885
        %3996 = vmatprep.subr.mxu0 0.0
        %3997 = vmatpush1.msra.mxu0 %v3890
        %3998 = vmatprep.subr.mxu0 0.0
        %3999 = vmatpush1.msra.mxu0 %v3895
        %4000 = vmatprep.subr.mxu0 0.0
        %4001 = vmatpush1.msra.mxu0 %v3900
        %4002 = vmatprep.subr.mxu0 0.0
        %4003 = vmatpush1.msra.mxu0 %v3905
        %4004 = vmatprep.subr.mxu0 0.0
        %4005 = vmatpush1.msra.mxu0 %v3910
        %4006 = vmatprep.subr.mxu0 0.0
        %4007 = vmatpush1.msra.mxu0 %v3915
        %4008 = vmatprep.subr.mxu0 0.0
        %4009 = vmatpush1.msra.mxu0 %v3920
        %4010 = vmatprep.subr.mxu0 0.0
        %4011 = vmatpush1.msra.mxu0 %v3925
        %4012 = vmatprep.subr.mxu0 0.0
        %4013 = vmatpush1.msra.mxu0 %v3930
        %4014 = vmatprep.subr.mxu0 0.0
        %4015 = vmatpush1.msra.mxu0 %v3935
        %4016 = vmatprep.subr.mxu0 0.0
        %4017 = vmatpush1.msra.mxu0 %v3940
        %4018 = vmatprep.subr.mxu0 0.0
        %4019 = vmatpush1.msra.mxu0 %v3945
        %4020 = vmatprep.subr.mxu0 0.0
        %4021 = vmatpush1.msra.mxu0 0.0
        %4022 = vmatprep.subr.mxu0 0.0
        %4023 = vmatpush1.msra.mxu0 0.0
        %4024 = vmatprep.subr.mxu0 0.0
        %4025 = vmatpush1.msra.mxu0 0.0
        %4026 = vmatprep.subr.mxu0 0.0
        %4027 = vmatpush1.msra.mxu0 0.0
        %4028 = vmatprep.subr.mxu0 0.0
        %4029 = vmatpush1.msra.mxu0 0.0
        %4030 = vmatprep.subr.mxu0 0.0
        %4031 = vmatpush1.msra.mxu0 0.0
        %4032 = vmatprep.subr.mxu0 0.0
        %4033 = vmatpush1.msra.mxu0 0.0
        %4034 = vmatprep.subr.mxu0 0.0
        %4035 = vmatpush1.msra.mxu0 0.0
        %4036 = vmatprep.subr.mxu0 0.0
        %4037 = vmatpush1.msra.mxu0 0.0
        %4038 = vmatprep.subr.mxu0 0.0
        %4039 = vmatpush1.msra.mxu0 0.0
        %4040 = vmatprep.subr.mxu0 0.0
        %4041 = vmatpush1.msra.mxu0 0.0
        %4042 = vmatprep.subr.mxu0 0.0
        %4043 = vmatpush1.msra.mxu0 0.0
        %4044 = vmatprep.subr.mxu0 0.0
        %4045 = vmatpush1.msra.mxu0 0.0
        %4046 = vmatprep.subr.mxu0 0.0
        %4047 = vmatpush1.msra.mxu0 0.0
        %4048 = vmatprep.subr.mxu0 0.0
        %4049 = vmatpush1.msra.mxu0 0.0
        %4050 = vmatprep.subr.mxu0 0.0
        %4051 = vmatpush1.msra.mxu0 0.0
        %4052 = vmatprep.mubr.f32.mxu0 0.0
        %4053 = vmatmul.mubr.f32.gmra.mrb[0].mxu0 %v3972
        %v4054 = vpop.f32.mrb[0].mxu0
        %v4055 = vadd.f32 0.0, %v4054
        %v4056 = vpop.f32.mrb[0].mxu0
        %4057 = vmatprep.mubr.f32.mxu0 0.0
        %4058 = vmatmul.mubr.f32.gmra.mrb[0].mxu0 %v3973
        %v4059 = vpop.f32.mrb[0].mxu0
        %v4060 = vadd.f32 0.0, %v4059
        %v4061 = vpop.f32.mrb[0].mxu0
        %4062 = vmatprep.mubr.f32.mxu0 0.0
        %4063 = vmatmul.mubr.f32.gmra.mrb[0].mxu0 %v3974
        %v4064 = vpop.f32.mrb[0].mxu0
        %v4065 = vadd.f32 0.0, %v4064
        %v4066 = vpop.f32.mrb[0].mxu0
        %4067 = vmatprep.mubr.f32.mxu0 0.0
        %4068 = vmatmul.mubr.f32.gmra.mrb[0].mxu0 %v3975
        %v4069 = vpop.f32.mrb[0].mxu0
        %v4070 = vadd.f32 0.0, %v4069
        %v4071 = vpop.f32.mrb[0].mxu0
        %4072 = vmatprep.mubr.f32.mxu0 0.0
        %4073 = vmatmul.mubr.f32.gmra.mrb[0].mxu0 %v3976
        %v4074 = vpop.f32.mrb[0].mxu0
        %v4075 = vadd.f32 0.0, %v4074
        %v4076 = vpop.f32.mrb[0].mxu0
        %4077 = vmatprep.mubr.f32.mxu0 0.0
        %4078 = vmatmul.mubr.f32.gmra.mrb[0].mxu0 %v3977
        %v4079 = vpop.f32.mrb[0].mxu0
        %v4080 = vadd.f32 0.0, %v4079
        %v4081 = vpop.f32.mrb[0].mxu0
        %4082 = vmatprep.mubr.f32.mxu0 0.0
        %4083 = vmatmul.mubr.f32.gmra.mrb[0].mxu0 %v3978
        %v4084 = vpop.f32.mrb[0].mxu0
        %v4085 = vadd.f32 0.0, %v4084
        %v4086 = vpop.f32.mrb[0].mxu0
        %4087 = vmatprep.mubr.f32.mxu0 0.0
        %4088 = vmatmul.mubr.f32.gmra.mrb[0].mxu0 %v3979
        %v4089 = vpop.f32.mrb[0].mxu0
        %v4090 = vadd.f32 0.0, %v4089
        %v4091 = vpop.f32.mrb[0].mxu0
        %4092 = vdwg.mxu0
        %v4093 = vadd.f32 %v3948, %v4055
        %v4094 = vadd.f32 %v3949, %v4060
        %v4095 = vadd.f32 %v3950, %v4065
        %v4096 = vadd.f32 %v3951, %v4070
        %v4097 = vadd.f32 %v3952, %v4075
        %v4098 = vadd.f32 %v3953, %v4080
        %v4099 = vadd.f32 %v3954, %v4085
        %v4100 = vadd.f32 %v3955, %v4090
        %4101 = vst [vmem:[#allocation2] sm:$0xff] %v4093
        %4102 = vst [vmem:[#allocation2 + $0x8] sm:$0xff] %v4094
        %4103 = vst [vmem:[#allocation2 + $0x10] sm:$0xff] %v4095
        %4104 = vst [vmem:[#allocation2 + $0x18] sm:$0xff] %v4096
        %4105 = vst [vmem:[#allocation2 + $0x20] sm:$0xff] %v4097
        %4106 = vst [vmem:[#allocation2 + $0x28] sm:$0xff] %v4098
        %4107 = vst [vmem:[#allocation2 + $0x30] sm:$0xff] %v4099
        %4108 = vst [vmem:[#allocation2 + $0x38] sm:$0xff] %v4100
        %p4109 = scmp.eq.s32.totalorder %s47, 1
        // Predicated region
        $region129: #{conditional_prop_forward.1} parent=75 // pred_check
          %p4110 = pneg %p4109
        $region130: #{conditional_prop_forward.1} parent=75 // pred_check_branch
          %4112 = sbr.rel (%p4110) target = $region132
        $region131: #{conditional_prop_forward.1} parent=75 // pred_region
          %v4113 = vld [vmem:[#allocation2] sm:$0xff]
          %v4114 = vld [vmem:[#allocation2 + $0x8] sm:$0xff]
          %v4115 = vld [vmem:[#allocation2 + $0x10] sm:$0xff]
          %v4116 = vld [vmem:[#allocation2 + $0x18] sm:$0xff]
          %v4117 = vld [vmem:[#allocation2 + $0x20] sm:$0xff]
          %v4118 = vld [vmem:[#allocation2 + $0x28] sm:$0xff]
          %v4119 = vld [vmem:[#allocation2 + $0x30] sm:$0xff]
          %v4120 = vld [vmem:[#allocation2 + $0x38] sm:$0xff]
          %v4121 = vld [vmem:[%s733] sm:$0xff]
          %v4122 = vld [vmem:[%s733 + $0x8] sm:$0xff]
          %v4123 = vld [vmem:[%s733 + $0x10] sm:$0xff]
          %v4124 = vld [vmem:[%s733 + $0x18] sm:$0xff]
          %v4125 = vld [vmem:[%s733 + $0x20] sm:$0xff]
          %v4126 = vld [vmem:[%s733 + $0x28] sm:$0xff]
          %v4127 = vld [vmem:[%s733 + $0x30] sm:$0xff]
          %v4128 = vld [vmem:[%s733 + $0x38] sm:$0xff]
          %v4129 = vld [vmem:[%s733 + $0x40] sm:$0xff]
          %v4130 = vld [vmem:[%s733 + $0x48] sm:$0xff]
          %v4131 = vld [vmem:[%s733 + $0x50] sm:$0xff]
          %v4132 = vld [vmem:[%s733 + $0x58] sm:$0xff]
          %v4133 = vld [vmem:[%s733 + $0x60] sm:$0xff]
          %v4134 = vld [vmem:[%s733 + $0x68] sm:$0xff]
          %v4135 = vld [vmem:[%s733 + $0x70] sm:$0xff]
          %v4136 = vld [vmem:[%s733 + $0x78] sm:$0xff]
          %v4137 = vld [vmem:[%s733 + $0x80] sm:$0xff]
          %v4138 = vld [vmem:[%s733 + $0x88] sm:$0xff]
          %v4139 = vld [vmem:[%s733 + $0x90] sm:$0xff]
          %v4140 = vld [vmem:[%s733 + $0x98] sm:$0xff]
          %v4141 = vld [vmem:[%s733 + $0xa0] sm:$0xff]
          %v4142 = vld [vmem:[%s733 + $0xa8] sm:$0xff]
          %v4143 = vld [vmem:[%s733 + $0xb0] sm:$0xff]
          %v4144 = vld [vmem:[%s733 + $0xb8] sm:$0xff]
          %v4145 = vld [vmem:[%s733 + $0xc0] sm:$0xff]
          %v4146 = vld [vmem:[%s733 + $0xc8] sm:$0xff]
          %v4147 = vld [vmem:[%s733 + $0xd0] sm:$0xff]
          %v4148 = vld [vmem:[%s733 + $0xd8] sm:$0xff]
          %v4149 = vld [vmem:[%s733 + $0xe0] sm:$0xff]
          %v4150 = vld [vmem:[%s733 + $0xe8] sm:$0xff]
          %v4151 = vld [vmem:[%s733 + $0xf0] sm:$0xff]
          %v4152 = vld [vmem:[%s733 + $0xf8] sm:$0xff]
          %v4153 = vld [vmem:[%s733 + $0x100] sm:$0xff]
          %v4154 = vld [vmem:[%s733 + $0x108] sm:$0xff]
          %v4155 = vld [vmem:[%s733 + $0x110] sm:$0xff]
          %v4156 = vld [vmem:[%s733 + $0x118] sm:$0xff]
          %v4157 = vld [vmem:[%s733 + $0x120] sm:$0xff]
          %v4158 = vld [vmem:[%s733 + $0x128] sm:$0xff]
          %v4159 = vld [vmem:[%s733 + $0x130] sm:$0xff]
          %v4160 = vld [vmem:[%s733 + $0x138] sm:$0xff]
          %v4161 = vld [vmem:[%s733 + $0x140] sm:$0xff]
          %v4162 = vld [vmem:[%s733 + $0x148] sm:$0xff]
          %v4163 = vld [vmem:[%s733 + $0x150] sm:$0xff]
          %v4164 = vld [vmem:[%s733 + $0x158] sm:$0xff]
          %v4165 = vld [vmem:[%s733 + $0x160] sm:$0xff]
          %v4166 = vld [vmem:[%s733 + $0x168] sm:$0xff]
          %v4167 = vld [vmem:[%s733 + $0x170] sm:$0xff]
          %v4168 = vld [vmem:[%s733 + $0x178] sm:$0xff]
          %v4169 = vld [vmem:[%s733 + $0x180] sm:$0xff]
          %v4170 = vld [vmem:[%s733 + $0x188] sm:$0xff]
          %v4171 = vld [vmem:[%s733 + $0x190] sm:$0xff]
          %v4172 = vld [vmem:[%s733 + $0x198] sm:$0xff]
          %v4173 = vld [vmem:[%s733 + $0x1a0] sm:$0xff]
          %v4174 = vld [vmem:[%s733 + $0x1a8] sm:$0xff]
          %v4175 = vld [vmem:[%s733 + $0x1b0] sm:$0xff]
          %v4176 = vld [vmem:[%s733 + $0x1b8] sm:$0xff]
          %v4177 = vld [vmem:[%s733 + $0x1c0] sm:$0xff]
          %v4178 = vld [vmem:[%s733 + $0x1c8] sm:$0xff]
          %v4179 = vld [vmem:[%s733 + $0x1d0] sm:$0xff]
          %v4180 = vld [vmem:[%s733 + $0x1d8] sm:$0xff]
          %v4181 = vld [vmem:[%s733 + $0x1e0] sm:$0xff]
          %v4182 = vld [vmem:[%s733 + $0x1e8] sm:$0xff]
          %v4183 = vld [vmem:[%s733 + $0x1f0] sm:$0xff]
          %v4184 = vld [vmem:[%s733 + $0x1f8] sm:$0xff]
          %v4185 = vld [vmem:[%s742] sm:$0x3]
          %v4187 = vlaneseq
          %v4188 = vshrl.u32 %v4187, 7
          %v4189 = vsub.s32 0, %v4188
          %v4190 = vrot.slane %v4185, %v4189
          %v4191 = vlaneseq
          %v4192 = vshrl.u32 %v4191, 7
          %v4193 = vsub.s32 1, %v4192
          %v4194 = vrot.slane %v4185, %v4193
          %4197 = vmatprep.subr.mxu0 %v4122
          %4198 = vmatpush1.msra.mxu0 %v4121
          %4199 = vmatprep.subr.mxu0 %v4124
          %4200 = vmatpush1.msra.mxu0 %v4123
          %4201 = vmatprep.subr.mxu0 %v4126
          %4202 = vmatpush1.msra.mxu0 %v4125
          %4203 = vmatprep.subr.mxu0 %v4128
          %4204 = vmatpush1.msra.mxu0 %v4127
          %4205 = vmatprep.subr.mxu0 %v4130
          %4206 = vmatpush1.msra.mxu0 %v4129
          %4207 = vmatprep.subr.mxu0 %v4132
          %4208 = vmatpush1.msra.mxu0 %v4131
          %4209 = vmatprep.subr.mxu0 %v4134
          %4210 = vmatpush1.msra.mxu0 %v4133
          %4211 = vmatprep.subr.mxu0 %v4136
          %4212 = vmatpush1.msra.mxu0 %v4135
          %4213 = vmatprep.subr.mxu0 %v4138
          %4214 = vmatpush1.msra.mxu0 %v4137
          %4215 = vmatprep.subr.mxu0 %v4140
          %4216 = vmatpush1.msra.mxu0 %v4139
          %4217 = vmatprep.subr.mxu0 %v4142
          %4218 = vmatpush1.msra.mxu0 %v4141
          %4219 = vmatprep.subr.mxu0 %v4144
          %4220 = vmatpush1.msra.mxu0 %v4143
          %4221 = vmatprep.subr.mxu0 %v4146
          %4222 = vmatpush1.msra.mxu0 %v4145
          %4223 = vmatprep.subr.mxu0 %v4148
          %4224 = vmatpush1.msra.mxu0 %v4147
          %4225 = vmatprep.subr.mxu0 %v4150
          %4226 = vmatpush1.msra.mxu0 %v4149
          %4227 = vmatprep.subr.mxu0 %v4152
          %4228 = vmatpush1.msra.mxu0 %v4151
          %4229 = vmatprep.subr.mxu0 %v4154
          %4230 = vmatpush1.msra.mxu0 %v4153
          %4231 = vmatprep.subr.mxu0 %v4156
          %4232 = vmatpush1.msra.mxu0 %v4155
          %4233 = vmatprep.subr.mxu0 %v4158
          %4234 = vmatpush1.msra.mxu0 %v4157
          %4235 = vmatprep.subr.mxu0 %v4160
          %4236 = vmatpush1.msra.mxu0 %v4159
          %4237 = vmatprep.subr.mxu0 %v4162
          %4238 = vmatpush1.msra.mxu0 %v4161
          %4239 = vmatprep.subr.mxu0 %v4164
          %4240 = vmatpush1.msra.mxu0 %v4163
          %4241 = vmatprep.subr.mxu0 %v4166
          %4242 = vmatpush1.msra.mxu0 %v4165
          %4243 = vmatprep.subr.mxu0 %v4168
          %4244 = vmatpush1.msra.mxu0 %v4167
          %4245 = vmatprep.subr.mxu0 %v4170
          %4246 = vmatpush1.msra.mxu0 %v4169
          %4247 = vmatprep.subr.mxu0 %v4172
          %4248 = vmatpush1.msra.mxu0 %v4171
          %4249 = vmatprep.subr.mxu0 %v4174
          %4250 = vmatpush1.msra.mxu0 %v4173
          %4251 = vmatprep.subr.mxu0 %v4176
          %4252 = vmatpush1.msra.mxu0 %v4175
          %4253 = vmatprep.subr.mxu0 %v4178
          %4254 = vmatpush1.msra.mxu0 %v4177
          %4255 = vmatprep.subr.mxu0 %v4180
          %4256 = vmatpush1.msra.mxu0 %v4179
          %4257 = vmatprep.subr.mxu0 %v4182
          %4258 = vmatpush1.msra.mxu0 %v4181
          %4259 = vmatprep.subr.mxu0 %v4184
          %4260 = vmatpush1.msra.mxu0 %v4183
          %4261 = vmatprep.mubr.f32.mxu0 %v926
          %4262 = vmatmul.mubr.f32.gmra.mrb[0].mxu0 %v4113
          %v4263 = vpop.f32.mrb[0].mxu0
          %v4264 = vadd.f32 %v4190, %v4263
          %v4265 = vpop.f32.mrb[0].mxu0
          %v4266 = vadd.f32 %v4194, %v4265
          %4267 = vmatprep.mubr.f32.mxu0 %v927
          %4268 = vmatmul.mubr.f32.gmra.mrb[0].mxu0 %v4114
          %v4269 = vpop.f32.mrb[0].mxu0
          %v4270 = vadd.f32 %v4190, %v4269
          %v4271 = vpop.f32.mrb[0].mxu0
          %v4272 = vadd.f32 %v4194, %v4271
          %4273 = vmatprep.mubr.f32.mxu0 %v928
          %4274 = vmatmul.mubr.f32.gmra.mrb[0].mxu0 %v4115
          %v4275 = vpop.f32.mrb[0].mxu0
          %v4276 = vadd.f32 %v4190, %v4275
          %v4277 = vpop.f32.mrb[0].mxu0
          %v4278 = vadd.f32 %v4194, %v4277
          %4279 = vmatprep.mubr.f32.mxu0 %v929
          %4280 = vmatmul.mubr.f32.gmra.mrb[0].mxu0 %v4116
          %v4281 = vpop.f32.mrb[0].mxu0
          %v4282 = vadd.f32 %v4190, %v4281
          %v4283 = vpop.f32.mrb[0].mxu0
          %v4284 = vadd.f32 %v4194, %v4283
          %4285 = vmatprep.mubr.f32.mxu0 %v930
          %4286 = vmatmul.mubr.f32.gmra.mrb[0].mxu0 %v4117
          %v4287 = vpop.f32.mrb[0].mxu0
          %v4288 = vadd.f32 %v4190, %v4287
          %v4289 = vpop.f32.mrb[0].mxu0
          %v4290 = vadd.f32 %v4194, %v4289
          %4291 = vmatprep.mubr.f32.mxu0 %v931
          %4292 = vmatmul.mubr.f32.gmra.mrb[0].mxu0 %v4118
          %v4293 = vpop.f32.mrb[0].mxu0
          %v4294 = vadd.f32 %v4190, %v4293
          %v4295 = vpop.f32.mrb[0].mxu0
          %v4296 = vadd.f32 %v4194, %v4295
          %4297 = vmatprep.mubr.f32.mxu0 %v932
          %4298 = vmatmul.mubr.f32.gmra.mrb[0].mxu0 %v4119
          %v4299 = vpop.f32.mrb[0].mxu0
          %v4300 = vadd.f32 %v4190, %v4299
          %v4301 = vpop.f32.mrb[0].mxu0
          %v4302 = vadd.f32 %v4194, %v4301
          %4303 = vmatprep.mubr.f32.mxu0 %v933
          %4304 = vmatmul.mubr.f32.gmra.mrb[0].mxu0 %v4120
          %v4305 = vpop.f32.mrb[0].mxu0
          %v4306 = vadd.f32 %v4190, %v4305
          %v4307 = vpop.f32.mrb[0].mxu0
          %v4308 = vadd.f32 %v4194, %v4307
          %4309 = vdwg.mxu0
          %v4310 = vxor.u32 %v4264, 2147483648
          %v4311 = vxor.u32 %v4266, 2147483648
          %v4312 = vxor.u32 %v4270, 2147483648
          %v4313 = vxor.u32 %v4272, 2147483648
          %v4314 = vxor.u32 %v4276, 2147483648
          %v4315 = vxor.u32 %v4278, 2147483648
          %v4316 = vxor.u32 %v4282, 2147483648
          %v4317 = vxor.u32 %v4284, 2147483648
          %v4318 = vxor.u32 %v4288, 2147483648
          %v4319 = vxor.u32 %v4290, 2147483648
          %v4320 = vxor.u32 %v4294, 2147483648
          %v4321 = vxor.u32 %v4296, 2147483648
          %v4322 = vxor.u32 %v4300, 2147483648
          %v4323 = vxor.u32 %v4302, 2147483648
          %v4324 = vxor.u32 %v4306, 2147483648
          %v4325 = vxor.u32 %v4308, 2147483648
          %v4326 = vmul.f32 %v4310, 1.442695
          %v4327 = vpow.pop %v4326
          %v4328 = vmul.f32 %v4311, 1.442695
          %v4329 = vpow.pop %v4328
          %v4330 = vmul.f32 %v4312, 1.442695
          %v4331 = vpow.pop %v4330
          %v4332 = vmul.f32 %v4313, 1.442695
          %v4333 = vpow.pop %v4332
          %v4334 = vmul.f32 %v4314, 1.442695
          %v4335 = vpow.pop %v4334
          %v4336 = vmul.f32 %v4315, 1.442695
          %v4337 = vpow.pop %v4336
          %v4338 = vmul.f32 %v4316, 1.442695
          %v4339 = vpow.pop %v4338
          %v4340 = vmul.f32 %v4317, 1.442695
          %v4341 = vpow.pop %v4340
          %v4342 = vmul.f32 %v4318, 1.442695
          %v4343 = vpow.pop %v4342
          %v4344 = vmul.f32 %v4319, 1.442695
          %v4345 = vpow.pop %v4344
          %v4346 = vmul.f32 %v4320, 1.442695
          %v4347 = vpow.pop %v4346
          %v4348 = vmul.f32 %v4321, 1.442695
          %v4349 = vpow.pop %v4348
          %v4350 = vmul.f32 %v4322, 1.442695
          %v4351 = vpow.pop %v4350
          %v4352 = vmul.f32 %v4323, 1.442695
          %v4353 = vpow.pop %v4352
          %v4354 = vmul.f32 %v4324, 1.442695
          %v4355 = vpow.pop %v4354
          %v4356 = vmul.f32 %v4325, 1.442695
          %v4357 = vpow.pop %v4356
          %v4358 = vadd.f32 %v4327, 1.0
          %v4359 = vadd.f32 %v4329, 1.0
          %v4360 = vadd.f32 %v4331, 1.0
          %v4361 = vadd.f32 %v4333, 1.0
          %v4362 = vadd.f32 %v4335, 1.0
          %v4363 = vadd.f32 %v4337, 1.0
          %v4364 = vadd.f32 %v4339, 1.0
          %v4365 = vadd.f32 %v4341, 1.0
          %v4366 = vadd.f32 %v4343, 1.0
          %v4367 = vadd.f32 %v4345, 1.0
          %v4368 = vadd.f32 %v4347, 1.0
          %v4369 = vadd.f32 %v4349, 1.0
          %v4370 = vadd.f32 %v4351, 1.0
          %v4371 = vadd.f32 %v4353, 1.0
          %v4372 = vadd.f32 %v4355, 1.0
          %v4373 = vadd.f32 %v4357, 1.0
          %v4374 = vrcp.pop %v4358
          %v4375 = vmul.f32 1.0, %v4374
          %v4376 = vrcp.pop %v4359
          %v4377 = vmul.f32 1.0, %v4376
          %v4378 = vrcp.pop %v4360
          %v4379 = vmul.f32 1.0, %v4378
          %v4380 = vrcp.pop %v4361
          %v4381 = vmul.f32 1.0, %v4380
          %v4382 = vrcp.pop %v4362
          %v4383 = vmul.f32 1.0, %v4382
          %v4384 = vrcp.pop %v4363
          %v4385 = vmul.f32 1.0, %v4384
          %v4386 = vrcp.pop %v4364
          %v4387 = vmul.f32 1.0, %v4386
          %v4388 = vrcp.pop %v4365
          %v4389 = vmul.f32 1.0, %v4388
          %v4390 = vrcp.pop %v4366
          %v4391 = vmul.f32 1.0, %v4390
          %v4392 = vrcp.pop %v4367
          %v4393 = vmul.f32 1.0, %v4392
          %v4394 = vrcp.pop %v4368
          %v4395 = vmul.f32 1.0, %v4394
          %v4396 = vrcp.pop %v4369
          %v4397 = vmul.f32 1.0, %v4396
          %v4398 = vrcp.pop %v4370
          %v4399 = vmul.f32 1.0, %v4398
          %v4400 = vrcp.pop %v4371
          %v4401 = vmul.f32 1.0, %v4400
          %v4402 = vrcp.pop %v4372
          %v4403 = vmul.f32 1.0, %v4402
          %v4404 = vrcp.pop %v4373
          %v4405 = vmul.f32 1.0, %v4404
          %v4406 = vld [vmem:[%s751] sm:$0xff]
          %v4407 = vld [vmem:[%s751 + $0x8] sm:$0xff]
          %v4408 = vld [vmem:[%s751 + $0x10] sm:$0xff]
          %v4409 = vld [vmem:[%s751 + $0x18] sm:$0xff]
          %v4410 = vld [vmem:[%s751 + $0x20] sm:$0xff]
          %v4411 = vld [vmem:[%s751 + $0x28] sm:$0xff]
          %v4412 = vld [vmem:[%s751 + $0x30] sm:$0xff]
          %v4413 = vld [vmem:[%s751 + $0x38] sm:$0xff]
          %v4414 = vld [vmem:[%s751 + $0x40] sm:$0xff]
          %v4415 = vld [vmem:[%s751 + $0x48] sm:$0xff]
          %v4416 = vld [vmem:[%s751 + $0x50] sm:$0xff]
          %v4417 = vld [vmem:[%s751 + $0x58] sm:$0xff]
          %v4418 = vld [vmem:[%s751 + $0x60] sm:$0xff]
          %v4419 = vld [vmem:[%s751 + $0x68] sm:$0xff]
          %v4420 = vld [vmem:[%s751 + $0x70] sm:$0xff]
          %v4421 = vld [vmem:[%s751 + $0x78] sm:$0xff]
          %v4422 = vld [vmem:[%s759] sm:$0x1]
          %v4424 = vlaneseq
          %v4425 = vshrl.u32 %v4424, 7
          %v4426 = vsub.s32 0, %v4425
          %v4427 = vrot.slane %v4422, %v4426
          %4429 = vmatprep.subr.mxu0 0.0
          %4430 = vmatpush1.msra.mxu0 %v4406
          %4431 = vmatprep.subr.mxu0 0.0
          %4432 = vmatpush1.msra.mxu0 %v4407
          %4433 = vmatprep.subr.mxu0 0.0
          %4434 = vmatpush1.msra.mxu0 %v4408
          %4435 = vmatprep.subr.mxu0 0.0
          %4436 = vmatpush1.msra.mxu0 %v4409
          %4437 = vmatprep.subr.mxu0 0.0
          %4438 = vmatpush1.msra.mxu0 %v4410
          %4439 = vmatprep.subr.mxu0 0.0
          %4440 = vmatpush1.msra.mxu0 %v4411
          %4441 = vmatprep.subr.mxu0 0.0
          %4442 = vmatpush1.msra.mxu0 %v4412
          %4443 = vmatprep.subr.mxu0 0.0
          %4444 = vmatpush1.msra.mxu0 %v4413
          %4445 = vmatprep.subr.mxu0 0.0
          %4446 = vmatpush1.msra.mxu0 %v4414
          %4447 = vmatprep.subr.mxu0 0.0
          %4448 = vmatpush1.msra.mxu0 %v4415
          %4449 = vmatprep.subr.mxu0 0.0
          %4450 = vmatpush1.msra.mxu0 %v4416
          %4451 = vmatprep.subr.mxu0 0.0
          %4452 = vmatpush1.msra.mxu0 %v4417
          %4453 = vmatprep.subr.mxu0 0.0
          %4454 = vmatpush1.msra.mxu0 %v4418
          %4455 = vmatprep.subr.mxu0 0.0
          %4456 = vmatpush1.msra.mxu0 %v4419
          %4457 = vmatprep.subr.mxu0 0.0
          %4458 = vmatpush1.msra.mxu0 %v4420
          %4459 = vmatprep.subr.mxu0 0.0
          %4460 = vmatpush1.msra.mxu0 %v4421
          %4461 = vmatprep.subr.mxu0 0.0
          %4462 = vmatpush1.msra.mxu0 0.0
          %4463 = vmatprep.subr.mxu0 0.0
          %4464 = vmatpush1.msra.mxu0 0.0
          %4465 = vmatprep.subr.mxu0 0.0
          %4466 = vmatpush1.msra.mxu0 0.0
          %4467 = vmatprep.subr.mxu0 0.0
          %4468 = vmatpush1.msra.mxu0 0.0
          %4469 = vmatprep.subr.mxu0 0.0
          %4470 = vmatpush1.msra.mxu0 0.0
          %4471 = vmatprep.subr.mxu0 0.0
          %4472 = vmatpush1.msra.mxu0 0.0
          %4473 = vmatprep.subr.mxu0 0.0
          %4474 = vmatpush1.msra.mxu0 0.0
          %4475 = vmatprep.subr.mxu0 0.0
          %4476 = vmatpush1.msra.mxu0 0.0
          %4477 = vmatprep.subr.mxu0 0.0
          %4478 = vmatpush1.msra.mxu0 0.0
          %4479 = vmatprep.subr.mxu0 0.0
          %4480 = vmatpush1.msra.mxu0 0.0
          %4481 = vmatprep.subr.mxu0 0.0
          %4482 = vmatpush1.msra.mxu0 0.0
          %4483 = vmatprep.subr.mxu0 0.0
          %4484 = vmatpush1.msra.mxu0 0.0
          %4485 = vmatprep.subr.mxu0 0.0
          %4486 = vmatpush1.msra.mxu0 0.0
          %4487 = vmatprep.subr.mxu0 0.0
          %4488 = vmatpush1.msra.mxu0 0.0
          %4489 = vmatprep.subr.mxu0 0.0
          %4490 = vmatpush1.msra.mxu0 0.0
          %4491 = vmatprep.subr.mxu0 0.0
          %4492 = vmatpush1.msra.mxu0 0.0
          %4493 = vmatprep.mubr.f32.mxu0 0.0
          %4494 = vmatmul.mubr.f32.gmra.mrb[0].mxu0 %v4113
          %v4495 = vpop.f32.mrb[0].mxu0
          %v4496 = vadd.f32 %v4427, %v4495
          %v4497 = vpop.f32.mrb[0].mxu0
          %4498 = vmatprep.mubr.f32.mxu0 0.0
          %4499 = vmatmul.mubr.f32.gmra.mrb[0].mxu0 %v4114
          %v4500 = vpop.f32.mrb[0].mxu0
          %v4501 = vadd.f32 %v4427, %v4500
          %v4502 = vpop.f32.mrb[0].mxu0
          %4503 = vmatprep.mubr.f32.mxu0 0.0
          %4504 = vmatmul.mubr.f32.gmra.mrb[0].mxu0 %v4115
          %v4505 = vpop.f32.mrb[0].mxu0
          %v4506 = vadd.f32 %v4427, %v4505
          %v4507 = vpop.f32.mrb[0].mxu0
          %4508 = vmatprep.mubr.f32.mxu0 0.0
          %4509 = vmatmul.mubr.f32.gmra.mrb[0].mxu0 %v4116
          %v4510 = vpop.f32.mrb[0].mxu0
          %v4511 = vadd.f32 %v4427, %v4510
          %v4512 = vpop.f32.mrb[0].mxu0
          %4513 = vmatprep.mubr.f32.mxu0 0.0
          %4514 = vmatmul.mubr.f32.gmra.mrb[0].mxu0 %v4117
          %v4515 = vpop.f32.mrb[0].mxu0
          %v4516 = vadd.f32 %v4427, %v4515
          %v4517 = vpop.f32.mrb[0].mxu0
          %4518 = vmatprep.mubr.f32.mxu0 0.0
          %4519 = vmatmul.mubr.f32.gmra.mrb[0].mxu0 %v4118
          %v4520 = vpop.f32.mrb[0].mxu0
          %v4521 = vadd.f32 %v4427, %v4520
          %v4522 = vpop.f32.mrb[0].mxu0
          %4523 = vmatprep.mubr.f32.mxu0 0.0
          %4524 = vmatmul.mubr.f32.gmra.mrb[0].mxu0 %v4119
          %v4525 = vpop.f32.mrb[0].mxu0
          %v4526 = vadd.f32 %v4427, %v4525
          %v4527 = vpop.f32.mrb[0].mxu0
          %4528 = vmatprep.mubr.f32.mxu0 0.0
          %4529 = vmatmul.mubr.f32.gmra.mrb[0].mxu0 %v4120
          %v4530 = vpop.f32.mrb[0].mxu0
          %v4531 = vadd.f32 %v4427, %v4530
          %v4532 = vpop.f32.mrb[0].mxu0
          %4533 = vdwg.mxu0
          %v4534 = vld [vmem:[%s768] sm:$0xff]
          %v4535 = vld [vmem:[%s768 + $0x8] sm:$0xff]
          %v4536 = vld [vmem:[%s768 + $0x10] sm:$0xff]
          %v4537 = vld [vmem:[%s768 + $0x18] sm:$0xff]
          %v4538 = vld [vmem:[%s768 + $0x20] sm:$0xff]
          %v4539 = vld [vmem:[%s768 + $0x28] sm:$0xff]
          %v4540 = vld [vmem:[%s768 + $0x30] sm:$0xff]
          %v4541 = vld [vmem:[%s768 + $0x38] sm:$0xff]
          %v4542 = vld [vmem:[%s768 + $0x40] sm:$0xff]
          %v4543 = vld [vmem:[%s768 + $0x48] sm:$0xff]
          %v4544 = vld [vmem:[%s768 + $0x50] sm:$0xff]
          %v4545 = vld [vmem:[%s768 + $0x58] sm:$0xff]
          %v4546 = vld [vmem:[%s768 + $0x60] sm:$0xff]
          %v4547 = vld [vmem:[%s768 + $0x68] sm:$0xff]
          %v4548 = vld [vmem:[%s768 + $0x70] sm:$0xff]
          %v4549 = vld [vmem:[%s768 + $0x78] sm:$0xff]
          %v4550 = vld [vmem:[%s776] sm:$0x1]
          %v4552 = vlaneseq
          %v4553 = vshrl.u32 %v4552, 7
          %v4554 = vsub.s32 0, %v4553
          %v4555 = vrot.slane %v4550, %v4554
          %4557 = vmatprep.subr.mxu0 0.0
          %4558 = vmatpush1.msra.mxu0 %v4534
          %4559 = vmatprep.subr.mxu0 0.0
          %4560 = vmatpush1.msra.mxu0 %v4535
          %4561 = vmatprep.subr.mxu0 0.0
          %4562 = vmatpush1.msra.mxu0 %v4536
          %4563 = vmatprep.subr.mxu0 0.0
          %4564 = vmatpush1.msra.mxu0 %v4537
          %4565 = vmatprep.subr.mxu0 0.0
          %4566 = vmatpush1.msra.mxu0 %v4538
          %4567 = vmatprep.subr.mxu0 0.0
          %4568 = vmatpush1.msra.mxu0 %v4539
          %4569 = vmatprep.subr.mxu0 0.0
          %4570 = vmatpush1.msra.mxu0 %v4540
          %4571 = vmatprep.subr.mxu0 0.0
          %4572 = vmatpush1.msra.mxu0 %v4541
          %4573 = vmatprep.subr.mxu0 0.0
          %4574 = vmatpush1.msra.mxu0 %v4542
          %4575 = vmatprep.subr.mxu0 0.0
          %4576 = vmatpush1.msra.mxu0 %v4543
          %4577 = vmatprep.subr.mxu0 0.0
          %4578 = vmatpush1.msra.mxu0 %v4544
          %4579 = vmatprep.subr.mxu0 0.0
          %4580 = vmatpush1.msra.mxu0 %v4545
          %4581 = vmatprep.subr.mxu0 0.0
          %4582 = vmatpush1.msra.mxu0 %v4546
          %4583 = vmatprep.subr.mxu0 0.0
          %4584 = vmatpush1.msra.mxu0 %v4547
          %4585 = vmatprep.subr.mxu0 0.0
          %4586 = vmatpush1.msra.mxu0 %v4548
          %4587 = vmatprep.subr.mxu0 0.0
          %4588 = vmatpush1.msra.mxu0 %v4549
          %4589 = vmatprep.subr.mxu0 0.0
          %4590 = vmatpush1.msra.mxu0 0.0
          %4591 = vmatprep.subr.mxu0 0.0
          %4592 = vmatpush1.msra.mxu0 0.0
          %4593 = vmatprep.subr.mxu0 0.0
          %4594 = vmatpush1.msra.mxu0 0.0
          %4595 = vmatprep.subr.mxu0 0.0
          %4596 = vmatpush1.msra.mxu0 0.0
          %4597 = vmatprep.subr.mxu0 0.0
          %4598 = vmatpush1.msra.mxu0 0.0
          %4599 = vmatprep.subr.mxu0 0.0
          %4600 = vmatpush1.msra.mxu0 0.0
          %4601 = vmatprep.subr.mxu0 0.0
          %4602 = vmatpush1.msra.mxu0 0.0
          %4603 = vmatprep.subr.mxu0 0.0
          %4604 = vmatpush1.msra.mxu0 0.0
          %4605 = vmatprep.subr.mxu0 0.0
          %4606 = vmatpush1.msra.mxu0 0.0
          %4607 = vmatprep.subr.mxu0 0.0
          %4608 = vmatpush1.msra.mxu0 0.0
          %4609 = vmatprep.subr.mxu0 0.0
          %4610 = vmatpush1.msra.mxu0 0.0
          %4611 = vmatprep.subr.mxu0 0.0
          %4612 = vmatpush1.msra.mxu0 0.0
          %4613 = vmatprep.subr.mxu0 0.0
          %4614 = vmatpush1.msra.mxu0 0.0
          %4615 = vmatprep.subr.mxu0 0.0
          %4616 = vmatpush1.msra.mxu0 0.0
          %4617 = vmatprep.subr.mxu0 0.0
          %4618 = vmatpush1.msra.mxu0 0.0
          %4619 = vmatprep.subr.mxu0 0.0
          %4620 = vmatpush1.msra.mxu0 0.0
          %4621 = vmatprep.mubr.f32.mxu0 0.0
          %4622 = vmatmul.mubr.f32.gmra.mrb[0].mxu0 %v926
          %v4623 = vpop.f32.mrb[0].mxu0
          %v4624 = vadd.f32 %v4555, %v4623
          %v4625 = vpop.f32.mrb[0].mxu0
          %4626 = vmatprep.mubr.f32.mxu0 0.0
          %4627 = vmatmul.mubr.f32.gmra.mrb[0].mxu0 %v927
          %v4628 = vpop.f32.mrb[0].mxu0
          %v4629 = vadd.f32 %v4555, %v4628
          %v4630 = vpop.f32.mrb[0].mxu0
          %4631 = vmatprep.mubr.f32.mxu0 0.0
          %4632 = vmatmul.mubr.f32.gmra.mrb[0].mxu0 %v928
          %v4633 = vpop.f32.mrb[0].mxu0
          %v4634 = vadd.f32 %v4555, %v4633
          %v4635 = vpop.f32.mrb[0].mxu0
          %4636 = vmatprep.mubr.f32.mxu0 0.0
          %4637 = vmatmul.mubr.f32.gmra.mrb[0].mxu0 %v929
          %v4638 = vpop.f32.mrb[0].mxu0
          %v4639 = vadd.f32 %v4555, %v4638
          %v4640 = vpop.f32.mrb[0].mxu0
          %4641 = vmatprep.mubr.f32.mxu0 0.0
          %4642 = vmatmul.mubr.f32.gmra.mrb[0].mxu0 %v930
          %v4643 = vpop.f32.mrb[0].mxu0
          %v4644 = vadd.f32 %v4555, %v4643
          %v4645 = vpop.f32.mrb[0].mxu0
          %4646 = vmatprep.mubr.f32.mxu0 0.0
          %4647 = vmatmul.mubr.f32.gmra.mrb[0].mxu0 %v931
          %v4648 = vpop.f32.mrb[0].mxu0
          %v4649 = vadd.f32 %v4555, %v4648
          %v4650 = vpop.f32.mrb[0].mxu0
          %4651 = vmatprep.mubr.f32.mxu0 0.0
          %4652 = vmatmul.mubr.f32.gmra.mrb[0].mxu0 %v932
          %v4653 = vpop.f32.mrb[0].mxu0
          %v4654 = vadd.f32 %v4555, %v4653
          %v4655 = vpop.f32.mrb[0].mxu0
          %4656 = vmatprep.mubr.f32.mxu0 0.0
          %4657 = vmatmul.mubr.f32.gmra.mrb[0].mxu0 %v933
          %v4658 = vpop.f32.mrb[0].mxu0
          %v4659 = vadd.f32 %v4555, %v4658
          %v4660 = vpop.f32.mrb[0].mxu0
          %4661 = vdwg.mxu0
          %v4662 = vmul.f32 %v4375, %v4624
          %v4663 = vmul.f32 %v4379, %v4629
          %v4664 = vmul.f32 %v4383, %v4634
          %v4665 = vmul.f32 %v4387, %v4639
          %v4666 = vmul.f32 %v4391, %v4644
          %v4667 = vmul.f32 %v4395, %v4649
          %v4668 = vmul.f32 %v4399, %v4654
          %v4669 = vmul.f32 %v4403, %v4659
          %v4670 = vadd.f32 %v4496, %v4662
          %v4671 = vadd.f32 %v4501, %v4663
          %v4672 = vadd.f32 %v4506, %v4664
          %v4673 = vadd.f32 %v4511, %v4665
          %v4674 = vadd.f32 %v4516, %v4666
          %v4675 = vadd.f32 %v4521, %v4667
          %v4676 = vadd.f32 %v4526, %v4668
          %v4677 = vadd.f32 %v4531, %v4669
          %v4678 = vtanh.pop %v4670
          %v4679 = vtanh.pop %v4671
          %v4680 = vtanh.pop %v4672
          %v4681 = vtanh.pop %v4673
          %v4682 = vtanh.pop %v4674
          %v4683 = vtanh.pop %v4675
          %v4684 = vtanh.pop %v4676
          %v4685 = vtanh.pop %v4677
          %v4686 = vsub.f32 1.0, %v4377
          %v4687 = vsub.f32 1.0, %v4381
          %v4688 = vsub.f32 1.0, %v4385
          %v4689 = vsub.f32 1.0, %v4389
          %v4690 = vsub.f32 1.0, %v4393
          %v4691 = vsub.f32 1.0, %v4397
          %v4692 = vsub.f32 1.0, %v4401
          %v4693 = vsub.f32 1.0, %v4405
          %v4694 = vmul.f32 %v4686, %v4678
          %v4695 = vmul.f32 %v4687, %v4679
          %v4696 = vmul.f32 %v4688, %v4680
          %v4697 = vmul.f32 %v4689, %v4681
          %v4698 = vmul.f32 %v4690, %v4682
          %v4699 = vmul.f32 %v4691, %v4683
          %v4700 = vmul.f32 %v4692, %v4684
          %v4701 = vmul.f32 %v4693, %v4685
          %v4702 = vmul.f32 %v4377, %v926
          %v4703 = vmul.f32 %v4381, %v927
          %v4704 = vmul.f32 %v4385, %v928
          %v4705 = vmul.f32 %v4389, %v929
          %v4706 = vmul.f32 %v4393, %v930
          %v4707 = vmul.f32 %v4397, %v931
          %v4708 = vmul.f32 %v4401, %v932
          %v4709 = vmul.f32 %v4405, %v933
          %v4710 = vadd.f32 %v4694, %v4702
          %v4711 = vadd.f32 %v4695, %v4703
          %v4712 = vadd.f32 %v4696, %v4704
          %v4713 = vadd.f32 %v4697, %v4705
          %v4714 = vadd.f32 %v4698, %v4706
          %v4715 = vadd.f32 %v4699, %v4707
          %v4716 = vadd.f32 %v4700, %v4708
          %v4717 = vadd.f32 %v4701, %v4709
          %4718 = vst [vmem:[#allocation21] sm:$0xff] %v4710
          %4719 = vst [vmem:[#allocation21 + $0x8] sm:$0xff] %v4711
          %4720 = vst [vmem:[#allocation21 + $0x10] sm:$0xff] %v4712
          %4721 = vst [vmem:[#allocation21 + $0x18] sm:$0xff] %v4713
          %4722 = vst [vmem:[#allocation21 + $0x20] sm:$0xff] %v4714
          %4723 = vst [vmem:[#allocation21 + $0x28] sm:$0xff] %v4715
          %4724 = vst [vmem:[#allocation21 + $0x30] sm:$0xff] %v4716
          %4725 = vst [vmem:[#allocation21 + $0x38] sm:$0xff] %v4717
        $region132: #{conditional_prop_forward.1} parent=75 // pred_fallthru
          _
        // Predicated region
        $region133: #{conditional_prop_forward.1} parent=75 // pred_check
          %p4726 = pneg %p426
        $region134: #{conditional_prop_forward.1} parent=75 // pred_check_branch
          %4728 = sbr.rel (%p4726) target = $region136
        $region135: #{conditional_prop_forward.1} parent=75 // pred_region
          %s4730 = ssub.s32 1024, 1024
          %4731 = vsyncadd [#allocation5], %s4730
          %s4732 = sshll.u32 [#allocation21], 4
          %s4733 = int_to_ptr.vmem [resolvable:$true] %s4732
          %4738 = dma.vmem_to_hbm [thread:$0]  %s4733, 1024, %s14, [#allocation5], 128, 128, 8
        $region136: #{conditional_prop_forward.1} parent=75 // pred_fallthru
          _
        // Predicated region
        $region137: #{conditional_prop_forward.1} parent=75 // pred_check
          %p4739 = pneg %p426
        $region138: #{conditional_prop_forward.1} parent=75 // pred_check_branch
          %4741 = sbr.rel (%p4739) target = $region140
        $region139: #{conditional_prop_forward.1} parent=75 // pred_region
          %4742 = dma.done [#allocation5], 1024
        $region140: #{conditional_prop_forward.1} parent=75 // pred_fallthru
          _
      $region76: #{conditional_prop_forward.1} parent=5 // pred_fallthru
        _
      %p4743 = scmp.le.s32.totalorder 2, %s37
      // Predicated region
      $region141: #{conditional_prop_forward.1} parent=5 // pred_check
        %p4744 = pneg %p4743
      $region142: #{conditional_prop_forward.1} parent=5 // pred_check_branch
        %4746 = sbr.rel (%p4744) target = $region144
      $region143: #{conditional_prop_forward.1} parent=5 // pred_region
        %s4747 = ssub.s32 %s37, 2
      $region144: #{conditional_prop_forward.1} parent=5 // pred_fallthru
        _
    $region6: #{conditional_prop_forward.1} parent=1 // loop_footer
      %s41 = sadd.s32 1, %s37
    $region7: #{conditional_prop_forward.1} parent=1 // loop_footer_branch
      %36 = sbr.rel target = $region3
    $region8: #{conditional_prop_forward.1} parent=1 // loop_exit
      _
    %4748 = vsyncpa [#allocation4], 1
    %s4749 = scalar_lea.sflag [#allocation4], 1
    %4750 = vsyncpa %s4749, 1
    %4751 = vsyncpa [#allocation7], 1
    %s4752 = scalar_lea.sflag [#allocation7], 1
    %4753 = vsyncpa %s4752, 1
    %4754 = vsyncpa [#allocation10], 1
    %s4755 = scalar_lea.sflag [#allocation10], 1
    %4756 = vsyncpa %s4755, 1
    %4757 = vsyncpa [#allocation13], 1
    %s4758 = scalar_lea.sflag [#allocation13], 1
    %4759 = vsyncpa %s4758, 1
    %4760 = vsyncpa [#allocation16], 1
    %s4761 = scalar_lea.sflag [#allocation16], 1
    %4762 = vsyncpa %s4761, 1
    %4763 = vsyncpa [#allocation19], 1
    %s4764 = scalar_lea.sflag [#allocation19], 1
    %4765 = vsyncpa %s4764, 1
    %4766 = vsyncpa [#allocation5], 1
    %s4767 = scalar_lea.sflag [#allocation5], 1
    %4768 = vsyncpa %s4767, 1

</llo_original>
